<compile_context>
chip_gen: v7x
topology: tpu7x:2x2x1
jax: 0.10.0
libtpu: 0.0.40
codegen_flags: <defaults>
</compile_context>

<pallas_src>
import math

import jax
import jax.numpy as jnp
from jax import lax
from jax.experimental import pallas as pl
from jax.experimental.pallas import tpu as pltpu

# ----------------------------- configuration --------------------------------
B = 2            # batch
S = 8            # sequence length
D_TEXT = 32      # text hidden size   (BERT: 768  -> scaled to 32)
FF = 4 * D_TEXT  # transformer FFN size (=128, lane-dense)
VOCAB = 64       # toy vocab
C_IN = 4         # image channels
H = W = 16       # image spatial size
K = 3            # conv kernel
KKC = K * K * C_IN          # im2col contraction dim (=36, NOT padded on host)
C_IMG = 40                  # per-image feature  (EfficientNet: 1280 -> scaled to 40)
D_IMG = 2 * C_IMG           # image_hidden_size = 2 * per-image feature
HID = 512                   # fusion hidden size (matches the module)
N_CLASSES = 2
LANE = 128                  # lane-dense output width for the logits slab
HW = H * W
NIMG = 2 * B

TEXT_WEIGHT = 0.9
IMAGE_WEIGHT = 0.1

# ---------------- packed-slab row offsets (kernel & packer agree) -----------
# slab_t (f32, 128 lanes): text-path weights + fusion head weight, lane-packed.
R_WQ = 0                        # (D_TEXT,128)  Q columns at lanes [32,64)
R_WKV = R_WQ + D_TEXT           # (D_TEXT,128)  V cols at lanes [0,32), K at [32,64)
R_WO = R_WKV + D_TEXT           # (D_TEXT,128)  lanes [0,32)
R_FW1 = R_WO + D_TEXT           # (D_TEXT,128)
R_FW2 = R_FW1 + D_TEXT          # (FF,128)      lanes [0,32)
R_HEAD = R_FW2 + FF             # (HID,128)     lanes [0,2)
R_BIAS = R_HEAD + HID           # 10 rows: bq,bkv,bo,ln1g,ln1b,ffn_b1,ffn_b2,ln2g,ln2b,head_b
N_SLAB_T = R_BIAS + 10          # = 778

# slab_g (f32, C_IMG lanes): gating quadrants + conv/gate biases.
RG_PP = 0
RG_BP = RG_PP + C_IMG
RG_PB = RG_BP + C_IMG
RG_BB = RG_PB + C_IMG
RG_BIAS = RG_BB + C_IMG         # 3 rows: conv_b, gate_b_prof, gate_b_bann
N_SLAB_G = RG_BIAS + 3          # = 163

# slab_f (f32, HID lanes): fusion layer-1 weights (0.9/0.1 folded) + LN params.
RF_T = 0                        # (D_TEXT,HID)
RF_IP = RF_T + D_TEXT           # (C_IMG,HID)  profile half
RF_IB = RF_IP + C_IMG           # (C_IMG,HID)  banner half
RF_BIAS = RF_IB + C_IMG         # 3 rows: f1_b, fus_ln_g, fus_ln_b
N_SLAB_F = RF_BIAS + 3          # = 115


# ----------------------------- kernel helpers -------------------------------
def _ln(x, g, b, eps):
    mu = jnp.mean(x, axis=-1, keepdims=True)
    var = jnp.mean(jnp.square(x - mu), axis=-1, keepdims=True)
    return (x - mu) * lax.rsqrt(var + eps) * g + b


def _gelu(x):
    # TODO(synk): tanh approximation; HF BERT default is the exact erf GELU.
    c = math.sqrt(2.0 / math.pi)
    return 0.5 * x * (1.0 + jnp.tanh(c * (x + 0.044715 * x * x * x)))


# ----------------------------- fused Pallas kernel --------------------------
def _fused_kernel(xcls_ref, x2_ref, bias_ref, patches_hbm,
                  slab_t_ref, convw_ref, slab_g_ref, slab_f_ref,
                  out_ref, patches_vmem, dma_sem):
    f32 = jnp.float32

    # Kick off the largest HBM->VMEM transfer now; it overlaps the text path.
    patch_cp = pltpu.make_async_copy(patches_hbm, patches_vmem, dma_sem)
    patch_cp.start()

    # ---------------- text: CLS-rows-only transformer encoder block --------
    x_cls = xcls_ref[...]                                    # (B, D_TEXT)
    x_all = x2_ref[...]                                      # (B*S, D_TEXT)
    tb = slab_t_ref[R_BIAS:R_BIAS + 10, :]                   # packed bias/LN rows

    # K|V in one matmul (V in lanes [0,32), K in lanes [32,64))
    kv = jnp.dot(x_all, slab_t_ref[R_WKV:R_WKV + D_TEXT, :],
                 preferred_element_type=f32) + tb[1:2, :]    # (B*S, 128)
    # Q only for the B CLS rows, packed at lanes [32,64) so q . kv == q . K
    q = jnp.dot(x_cls, slab_t_ref[R_WQ:R_WQ + D_TEXT, :],
                preferred_element_type=f32) + tb[0:1, :]     # (B, 128)

    s = lax.dot_general(q, kv, (((1,), (1,)), ((), ())),
                        preferred_element_type=f32)          # (B, B*S) == q @ K^T
    s = s * (1.0 / math.sqrt(D_TEXT)) + bias_ref[...]        # batch-block + key mask
    s = s - jnp.max(s, axis=-1, keepdims=True)
    e = jnp.exp(s)
    p_attn = e / jnp.sum(e, axis=-1, keepdims=True)

    cv = jnp.dot(p_attn, kv, preferred_element_type=f32)     # ctx = p @ V in lanes [0,32)
    ctx = cv[:, :D_TEXT]
    attn = (jnp.dot(ctx, slab_t_ref[R_WO:R_WO + D_TEXT, :],
                    preferred_element_type=f32) + tb[2:3, :])[:, :D_TEXT]

    h = _ln(x_cls + attn, tb[3:4, :D_TEXT], tb[4:5, :D_TEXT], 1e-12)
    ffo = _gelu(jnp.dot(h, slab_t_ref[R_FW1:R_FW1 + D_TEXT, :],
                        preferred_element_type=f32) + tb[5:6, :])         # (B, FF)
    ffo = (jnp.dot(ffo, slab_t_ref[R_FW2:R_FW2 + FF, :],
                   preferred_element_type=f32) + tb[6:7, :])[:, :D_TEXT]
    cls = _ln(h + ffo, tb[7:8, :D_TEXT], tb[8:9, :D_TEXT], 1e-12)         # (B, D_TEXT)

    # ---------------- image: conv(im2col) + ReLU + matmul mean-pool ---------
    patch_cp.wait()
    gbias = slab_g_ref[RG_BIAS:RG_BIAS + 3, :]               # conv_b, gate bias halves
    y = jnp.dot(patches_vmem[...], convw_ref[...],
                preferred_element_type=f32)                  # bf16 x bf16 -> f32 acc
    y = jnp.maximum(y + gbias[0:1, :], 0.0)                  # (2B*HW, C_IMG)

    # per-image mean pool as one MXU matmul against a constant 1/HW block matrix
    r = lax.broadcasted_iota(jnp.int32, (NIMG, NIMG * HW), 0)
    c = lax.broadcasted_iota(jnp.int32, (NIMG, NIMG * HW), 1)
    pool = jnp.where((c >= r * HW) & (c < (r + 1) * HW), 1.0 / HW, 0.0)
    pooled = jnp.dot(pool, y, preferred_element_type=f32)    # (2B, C_IMG)
    prof = pooled[:B, :]
    bann = pooled[B:NIMG, :]

    # gating: weights pre-split into quadrants -> no 40-lane feature concat
    gate_p = jax.nn.sigmoid(
        jnp.dot(prof, slab_g_ref[RG_PP:RG_PP + C_IMG, :], preferred_element_type=f32)
        + jnp.dot(bann, slab_g_ref[RG_BP:RG_BP + C_IMG, :], preferred_element_type=f32)
        + gbias[1:2, :])
    gate_b = jax.nn.sigmoid(
        jnp.dot(prof, slab_g_ref[RG_PB:RG_PB + C_IMG, :], preferred_element_type=f32)
        + jnp.dot(bann, slab_g_ref[RG_BB:RG_BB + C_IMG, :], preferred_element_type=f32)
        + gbias[2:3, :])
    gated_p = prof * gate_p
    gated_b = bann * gate_b

    # ---------------- fusion MLP head (0.9 / 0.1 folded into weights) -------
    fbias = slab_f_ref[RF_BIAS:RF_BIAS + 3, :]               # f1_b, ln_g, ln_b
    hf = (jnp.dot(cls, slab_f_ref[RF_T:RF_T + D_TEXT, :], preferred_element_type=f32)
          + jnp.dot(gated_p, slab_f_ref[RF_IP:RF_IP + C_IMG, :], preferred_element_type=f32)
          + jnp.dot(gated_b, slab_f_ref[RF_IB:RF_IB + C_IMG, :], preferred_element_type=f32)
          + fbias[0:1, :])
    hf = jnp.maximum(hf, 0.0)
    hf = _ln(hf, fbias[1:2, :], fbias[2:3, :], 1e-5)
    # TODO(synk): nn.Dropout(0.4) is identity in eval/inference mode.
    # Head weight/bias zero-padded to 128 lanes -> unmasked lane-dense store.
    out_ref[...] = (jnp.dot(hf, slab_t_ref[R_HEAD:R_HEAD + HID, :],
                            preferred_element_type=f32) + tb[9:10, :])


# ----------------------------- wrappers --------------------------------------
def _full(shape):
    return pl.BlockSpec(shape, lambda *_: (0,) * len(shape))


def _im2col(img_nchw):
    # NCHW (PyTorch convention) -> NHWC -> zero-pad -> (N, H*W, K*K*C_IN)
    n = img_nchw.shape[0]
    x = jnp.transpose(img_nchw, (0, 2, 3, 1))
    x = jnp.pad(x, ((0, 0), (1, 1), (1, 1), (0, 0)))
    taps = [x[:, ky:ky + H, kx:kx + W, :] for ky in range(K) for kx in range(K)]
    patches = jnp.stack(taps, axis=-2)                # (N, H, W, K*K, C_IN)
    return patches.reshape(n, H * W, KKC)


def _fused_call(x_cls, x2, bias_cls, patches, packed):
    in_specs = [
        _full((B, D_TEXT)),                 # x_cls
        _full((B * S, D_TEXT)),             # x2 (all tokens, for K/V)
        _full((B, B * S)),                  # attention bias for CLS query rows
        pl.BlockSpec(memory_space=pl.ANY),  # patches stay in HBM; manual DMA
        _full((N_SLAB_T, LANE)),            # text + head slab
        _full((KKC, C_IMG)),                # conv weight (bf16)
        _full((N_SLAB_G, C_IMG)),           # gating slab
        _full((N_SLAB_F, HID)),             # fusion slab
    ]
    out = pl.pallas_call(
        _fused_kernel,
        out_shape=jax.ShapeDtypeStruct((B, LANE), jnp.float32),
        grid=(1,),
        in_specs=in_specs,
        out_specs=_full((B, LANE)),
        scratch_shapes=[
            pltpu.VMEM((NIMG * HW, KKC), jnp.bfloat16),   # patches landing buffer
            pltpu.SemaphoreType.DMA(()),
        ],
    )(x_cls, x2, bias_cls, patches,
      packed['slab_t'], packed['conv_w'], packed['slab_g'], packed['slab_f'])
    return out[:, :N_CLASSES]


@jax.jit
def forward(packed, input_ids, attention_mask, profile_img, banner_img):
    # --- text glue: embedding lookup + positional ---
    x = packed['emb'][input_ids] + packed['pos'][None, :, :]        # (B, S, D)
    x_cls = x[:, 0, :]                                              # (B, D)
    x2 = x.reshape(B * S, D_TEXT)

    # additive attention bias for the B CLS query rows only:
    # key j visible iff it belongs to the same batch sample and is unmasked.
    batch_of = jnp.arange(B * S) // S
    same = batch_of[None, :] == jnp.arange(B)[:, None]
    valid = (attention_mask.reshape(-1) > 0)[None, :]
    bias_cls = jnp.where(same & valid, 0.0, -1e9).astype(jnp.float32)  # (B, B*S)

    # --- image glue: stack profile+banner, im2col, bf16, NO 128-lane pad ---
    imgs = jnp.concatenate([profile_img, banner_img], axis=0)       # (2B, C, H, W)
    patches = _im2col(imgs).reshape(NIMG * HW, KKC).astype(jnp.bfloat16)

    return _fused_call(x_cls, x2, bias_cls, patches, packed)        # (B, 2)


# ----------------------------- parameter packing ------------------------------
def _lanepad(w, offset, width=LANE):
    w = w.astype(jnp.float32)
    return jnp.pad(w, ((0, 0), (offset, width - offset - w.shape[1])))


def pack_params(p):
    """One-time host-side packing: ~33 tiny tensors -> 4 contiguous slabs."""
    slab_t = jnp.concatenate([
        _lanepad(p['wq'], D_TEXT),                          # Q cols -> lanes [32,64)
        _lanepad(p['wv'], 0) + _lanepad(p['wk'], D_TEXT),   # V -> [0,32), K -> [32,64)
        _lanepad(p['wo'], 0),
        p['ffn_w1'],
        _lanepad(p['ffn_w2'], 0),
        _lanepad(p['fus_w2'], 0),
        _lanepad(p['bq'], D_TEXT),
        _lanepad(p['bv'], 0) + _lanepad(p['bk'], D_TEXT),
        _lanepad(p['bo'], 0),
        _lanepad(p['ln1_g'], 0),
        _lanepad(p['ln1_b'], 0),
        p['ffn_b1'],
        _lanepad(p['ffn_b2'], 0),
        _lanepad(p['ln2_g'], 0),
        _lanepad(p['ln2_b'], 0),
        _lanepad(p['fus_b2'], 0),
    ], axis=0)
    assert slab_t.shape == (N_SLAB_T, LANE)

    gw, gb = p['gate_w'], p['gate_b']
    slab_g = jnp.concatenate([
        gw[:C_IMG, :C_IMG], gw[C_IMG:, :C_IMG],
        gw[:C_IMG, C_IMG:], gw[C_IMG:, C_IMG:],
        p['conv_b'], gb[:, :C_IMG], gb[:, C_IMG:],
    ], axis=0)
    assert slab_g.shape == (N_SLAB_G, C_IMG)

    slab_f = jnp.concatenate([
        p['fus_w1t'] * TEXT_WEIGHT,
        p['fus_w1i'][:C_IMG, :] * IMAGE_WEIGHT,
        p['fus_w1i'][C_IMG:, :] * IMAGE_WEIGHT,
        p['fus_b1'], p['fus_ln_g'], p['fus_ln_b'],
    ], axis=0)
    assert slab_f.shape == (N_SLAB_F, HID)

    return {
        'emb': p['emb'], 'pos': p['pos'],
        'slab_t': slab_t,
        'conv_w': p['conv_w'].astype(jnp.bfloat16),   # bf16 MXU path for the conv
        'slab_g': slab_g,
        'slab_f': slab_f,
    }


# ----------------------------- parameter init --------------------------------
def init_params(key):
    keys = iter(jax.random.split(key, 32))

    def nrm(shape, scale=0.05):
        return (scale * jax.random.normal(next(keys), shape)).astype(jnp.float32)

    zeros = lambda s: jnp.zeros(s, jnp.float32)
    ones = lambda s: jnp.ones(s, jnp.float32)

    return {
        'emb': nrm((VOCAB, D_TEXT)), 'pos': nrm((S, D_TEXT)),
        'wq': nrm((D_TEXT, D_TEXT)), 'bq': zeros((1, D_TEXT)),
        'wk': nrm((D_TEXT, D_TEXT)), 'bk': zeros((1, D_TEXT)),
        'wv': nrm((D_TEXT, D_TEXT)), 'bv': zeros((1, D_TEXT)),
        'wo': nrm((D_TEXT, D_TEXT)), 'bo': zeros((1, D_TEXT)),
        'ln1_g': ones((1, D_TEXT)), 'ln1_b': zeros((1, D_TEXT)),
        'ffn_w1': nrm((D_TEXT, FF)), 'ffn_b1': zeros((1, FF)),
        'ffn_w2': nrm((FF, D_TEXT)), 'ffn_b2': zeros((1, D_TEXT)),
        'ln2_g': ones((1, D_TEXT)), 'ln2_b': zeros((1, D_TEXT)),
        'conv_w': nrm((KKC, C_IMG)), 'conv_b': zeros((1, C_IMG)),
        'gate_w': nrm((D_IMG, D_IMG)), 'gate_b': zeros((1, D_IMG)),
        'fus_w1t': nrm((D_TEXT, HID)), 'fus_w1i': nrm((D_IMG, HID)),
        'fus_b1': zeros((1, HID)),
        'fus_ln_g': ones((1, HID)), 'fus_ln_b': zeros((1, HID)),
        'fus_w2': nrm((HID, N_CLASSES)), 'fus_b2': zeros((1, N_CLASSES)),
    }


# ----------------------------- main -------------------------------------------
if __name__ == "__main__":
    key = jax.random.PRNGKey(0)
    k_param, k_ids, k_img1, k_img2 = jax.random.split(key, 4)

    params = init_params(k_param)
    packed = pack_params(params)          # one-time host-side slab packing

    input_ids = jax.random.randint(k_ids, (B, S), 0, VOCAB)
    attention_mask = jnp.array([[1] * S, [1] * (S - 2) + [0] * 2], dtype=jnp.int32)
    profile_img = jax.random.normal(k_img1, (B, C_IN, H, W), jnp.float32)
    banner_img = jax.random.normal(k_img2, (B, C_IN, H, W), jnp.float32)

    out = forward(packed, input_ids, attention_mask, profile_img, banner_img)
    out = jax.block_until_ready(out)

    assert out.shape == (B, N_CLASSES) and out.dtype == jnp.float32
    assert bool(jnp.all(jnp.isfinite(out)))
    print("KERNEL_OK")
</pallas_src>

<mosaic_0001>
module attributes {stable_mosaic.version = 11 : i64} {
  func.func @_fused_kernel(%arg0: i32, %arg1: memref<2x32xf32, #tpu.memory_space<vmem>>, %arg2: memref<16x32xf32, #tpu.memory_space<vmem>>, %arg3: memref<2x16xf32, #tpu.memory_space<vmem>>, %arg4: memref<1024x36xbf16, #tpu.memory_space<any>>, %arg5: memref<778x128xf32, #tpu.memory_space<vmem>>, %arg6: memref<36x40xbf16, #tpu.memory_space<vmem>>, %arg7: memref<163x40xf32, #tpu.memory_space<vmem>>, %arg8: memref<115x512xf32, #tpu.memory_space<vmem>>, %arg9: memref<2x128xf32, #tpu.memory_space<vmem>>, %arg10: memref<1024x36xbf16, #tpu.memory_space<vmem>>, %arg11: memref<!tpu.dma_semaphore, #tpu.memory_space<semaphore_mem>>) attributes {dimension_semantics = [#tpu.dimension_semantics<arbitrary>], iteration_bounds = array<i64: 1>, scalar_prefetch = 0 : i64, scratch_operands = 2 : i64, tpu.core_type = #tpu.core_type<tc>, window_params = [{pipeline_mode = #tpu.pipeline_mode<synchronous>, transform_indices = @transform_0, window_bounds = array<i64: 2, 32>}, {pipeline_mode = #tpu.pipeline_mode<synchronous>, transform_indices = @transform_1, window_bounds = array<i64: 16, 32>}, {pipeline_mode = #tpu.pipeline_mode<synchronous>, transform_indices = @transform_2, window_bounds = array<i64: 2, 16>}, {}, {pipeline_mode = #tpu.pipeline_mode<synchronous>, transform_indices = @transform_4, window_bounds = array<i64: 778, 128>}, {pipeline_mode = #tpu.pipeline_mode<synchronous>, transform_indices = @transform_5, window_bounds = array<i64: 36, 40>}, {pipeline_mode = #tpu.pipeline_mode<synchronous>, transform_indices = @transform_6, window_bounds = array<i64: 163, 40>}, {pipeline_mode = #tpu.pipeline_mode<synchronous>, transform_indices = @transform_7, window_bounds = array<i64: 115, 512>}, {pipeline_mode = #tpu.pipeline_mode<synchronous>, transform_indices = @transform_8, window_bounds = array<i64: 2, 128>}]} {
    tpu.enqueue_dma source(%arg4 : memref<1024x36xbf16, #tpu.memory_space<any>>) target(%arg10 : memref<1024x36xbf16, #tpu.memory_space<vmem>>) target_semaphore(%arg11 : memref<!tpu.dma_semaphore, #tpu.memory_space<semaphore_mem>>)
    %c0 = arith.constant 0 : index
    %c0_0 = arith.constant 0 : index
    %0 = vector.load %arg1[%c0, %c0_0] : memref<2x32xf32, #tpu.memory_space<vmem>>, vector<2x32xf32>
    %c0_1 = arith.constant 0 : index
    %c0_2 = arith.constant 0 : index
    %1 = vector.load %arg2[%c0_1, %c0_2] : memref<16x32xf32, #tpu.memory_space<vmem>>, vector<16x32xf32>
    %c768 = arith.constant 768 : index
    %c0_3 = arith.constant 0 : index
    %2 = vector.load %arg5[%c768, %c0_3] : memref<778x128xf32, #tpu.memory_space<vmem>>, vector<10x128xf32>
    %c32 = arith.constant 32 : index
    %c0_4 = arith.constant 0 : index
    %3 = vector.load %arg5[%c32, %c0_4] : memref<778x128xf32, #tpu.memory_space<vmem>>, vector<32x128xf32>
    %cst = arith.constant dense<0.000000e+00> : vector<16x128xf32>
    %4 = tpu.matmul %1, %3, %cst {dimension_numbers = #tpu.dot_dimension_numbers<[1], [0], [0], [1], [0, 0, 1, 1], [], []>} : vector<16x32xf32>, vector<32x128xf32>, vector<16x128xf32> -> vector<16x128xf32>
    %5 = vector.extract_strided_slice %2 {offsets = [1, 0], sizes = [1, 128], strides = [1, 1]} : vector<10x128xf32> to vector<1x128xf32>
    %6 = vector.broadcast %5 : vector<1x128xf32> to vector<16x128xf32>
    %7 = arith.addf %4, %6 : vector<16x128xf32>
    %c0_5 = arith.constant 0 : index
    %c0_6 = arith.constant 0 : index
    %8 = vector.load %arg5[%c0_5, %c0_6] : memref<778x128xf32, #tpu.memory_space<vmem>>, vector<32x128xf32>
    %cst_7 = arith.constant dense<0.000000e+00> : vector<2x128xf32>
    %9 = tpu.matmul %0, %8, %cst_7 {dimension_numbers = #tpu.dot_dimension_numbers<[1], [0], [0], [1], [0, 0, 1, 1], [], []>} : vector<2x32xf32>, vector<32x128xf32>, vector<2x128xf32> -> vector<2x128xf32>
    %10 = vector.extract_strided_slice %2 {offsets = [0, 0], sizes = [1, 128], strides = [1, 1]} : vector<10x128xf32> to vector<1x128xf32>
    %11 = vector.broadcast %10 : vector<1x128xf32> to vector<2x128xf32>
    %12 = arith.addf %9, %11 : vector<2x128xf32>
    %cst_8 = arith.constant dense<0.000000e+00> : vector<2x16xf32>
    %13 = tpu.matmul %12, %7, %cst_8 {dimension_numbers = #tpu.dot_dimension_numbers<[1], [1], [0], [0], [0, 0, 1, 0], [], []>} : vector<2x128xf32>, vector<16x128xf32>, vector<2x16xf32> -> vector<2x16xf32>
    %cst_9 = arith.constant 0.176776692 : f32
    %14 = vector.broadcast %cst_9 : f32 to vector<2x16xf32>
    %15 = arith.mulf %13, %14 : vector<2x16xf32>
    %c0_10 = arith.constant 0 : index
    %c0_11 = arith.constant 0 : index
    %16 = vector.load %arg3[%c0_10, %c0_11] : memref<2x16xf32, #tpu.memory_space<vmem>>, vector<2x16xf32>
    %17 = arith.addf %15, %16 : vector<2x16xf32>
    %cst_12 = arith.constant dense<0xFF800000> : vector<2xf32>
    %18 = vector.multi_reduction <maximumf>, %17, %cst_12 [1] : vector<2x16xf32> to vector<2xf32>
    %19 = vector.shape_cast %18 : vector<2xf32> to vector<2x1xf32>
    %20 = vector.broadcast %19 : vector<2x1xf32> to vector<2x16xf32>
    %21 = arith.subf %17, %20 : vector<2x16xf32>
    %22 = math.exp %21 : vector<2x16xf32>
    %cst_13 = arith.constant dense<0.000000e+00> : vector<2xf32>
    %23 = vector.multi_reduction <add>, %22, %cst_13 [1] : vector<2x16xf32> to vector<2xf32>
    %24 = vector.shape_cast %23 : vector<2xf32> to vector<2x1xf32>
    %25 = vector.broadcast %24 : vector<2x1xf32> to vector<2x16xf32>
    %26 = arith.divf %22, %25 : vector<2x16xf32>
    %cst_14 = arith.constant dense<0.000000e+00> : vector<2x128xf32>
    %27 = tpu.matmul %26, %7, %cst_14 {dimension_numbers = #tpu.dot_dimension_numbers<[1], [0], [0], [1], [0, 0, 1, 1], [], []>} : vector<2x16xf32>, vector<16x128xf32>, vector<2x128xf32> -> vector<2x128xf32>
    %28 = vector.extract_strided_slice %27 {offsets = [0, 0], sizes = [2, 32], strides = [1, 1]} : vector<2x128xf32> to vector<2x32xf32>
    %c64 = arith.constant 64 : index
    %c0_15 = arith.constant 0 : index
    %29 = vector.load %arg5[%c64, %c0_15] : memref<778x128xf32, #tpu.memory_space<vmem>>, vector<32x128xf32>
    %cst_16 = arith.constant dense<0.000000e+00> : vector<2x128xf32>
    %30 = tpu.matmul %28, %29, %cst_16 {dimension_numbers = #tpu.dot_dimension_numbers<[1], [0], [0], [1], [0, 0, 1, 1], [], []>} : vector<2x32xf32>, vector<32x128xf32>, vector<2x128xf32> -> vector<2x128xf32>
    %31 = vector.extract_strided_slice %2 {offsets = [2, 0], sizes = [1, 128], strides = [1, 1]} : vector<10x128xf32> to vector<1x128xf32>
    %32 = vector.broadcast %31 : vector<1x128xf32> to vector<2x128xf32>
    %33 = arith.addf %30, %32 : vector<2x128xf32>
    %34 = vector.extract_strided_slice %33 {offsets = [0, 0], sizes = [2, 32], strides = [1, 1]} : vector<2x128xf32> to vector<2x32xf32>
    %35 = arith.addf %0, %34 : vector<2x32xf32>
    %36 = vector.extract_strided_slice %2 {offsets = [3, 0], sizes = [1, 32], strides = [1, 1]} : vector<10x128xf32> to vector<1x32xf32>
    %37 = vector.extract_strided_slice %2 {offsets = [4, 0], sizes = [1, 32], strides = [1, 1]} : vector<10x128xf32> to vector<1x32xf32>
    %cst_17 = arith.constant dense<0.000000e+00> : vector<2xf32>
    %38 = vector.multi_reduction <add>, %35, %cst_17 [1] : vector<2x32xf32> to vector<2xf32>
    %39 = vector.shape_cast %38 : vector<2xf32> to vector<2x1xf32>
    %cst_18 = arith.constant 3.200000e+01 : f32
    %40 = vector.broadcast %cst_18 : f32 to vector<2x1xf32>
    %41 = arith.divf %39, %40 : vector<2x1xf32>
    %42 = vector.broadcast %41 : vector<2x1xf32> to vector<2x32xf32>
    %43 = arith.subf %35, %42 : vector<2x32xf32>
    %44 = arith.mulf %43, %43 : vector<2x32xf32>
    %cst_19 = arith.constant dense<0.000000e+00> : vector<2xf32>
    %45 = vector.multi_reduction <add>, %44, %cst_19 [1] : vector<2x32xf32> to vector<2xf32>
    %46 = vector.shape_cast %45 : vector<2xf32> to vector<2x1xf32>
    %cst_20 = arith.constant 3.200000e+01 : f32
    %47 = vector.broadcast %cst_20 : f32 to vector<2x1xf32>
    %48 = arith.divf %46, %47 : vector<2x1xf32>
    %49 = vector.broadcast %41 : vector<2x1xf32> to vector<2x32xf32>
    %50 = arith.subf %35, %49 : vector<2x32xf32>
    %cst_21 = arith.constant 9.99999996E-13 : f32
    %51 = vector.broadcast %cst_21 : f32 to vector<2x1xf32>
    %52 = arith.addf %48, %51 : vector<2x1xf32>
    %53 = math.rsqrt %52 : vector<2x1xf32>
    %54 = vector.broadcast %53 : vector<2x1xf32> to vector<2x32xf32>
    %55 = arith.mulf %50, %54 : vector<2x32xf32>
    %56 = vector.broadcast %36 : vector<1x32xf32> to vector<2x32xf32>
    %57 = arith.mulf %55, %56 : vector<2x32xf32>
    %58 = vector.broadcast %37 : vector<1x32xf32> to vector<2x32xf32>
    %59 = arith.addf %57, %58 : vector<2x32xf32>
    %c96 = arith.constant 96 : index
    %c0_22 = arith.constant 0 : index
    %60 = vector.load %arg5[%c96, %c0_22] : memref<778x128xf32, #tpu.memory_space<vmem>>, vector<32x128xf32>
    %cst_23 = arith.constant dense<0.000000e+00> : vector<2x128xf32>
    %61 = tpu.matmul %59, %60, %cst_23 {dimension_numbers = #tpu.dot_dimension_numbers<[1], [0], [0], [1], [0, 0, 1, 1], [], []>} : vector<2x32xf32>, vector<32x128xf32>, vector<2x128xf32> -> vector<2x128xf32>
    %62 = vector.extract_strided_slice %2 {offsets = [5, 0], sizes = [1, 128], strides = [1, 1]} : vector<10x128xf32> to vector<1x128xf32>
    %63 = vector.broadcast %62 : vector<1x128xf32> to vector<2x128xf32>
    %64 = arith.addf %61, %63 : vector<2x128xf32>
    %cst_24 = arith.constant 5.000000e-01 : f32
    %65 = vector.broadcast %cst_24 : f32 to vector<2x128xf32>
    %66 = arith.mulf %65, %64 : vector<2x128xf32>
    %cst_25 = arith.constant 4.471500e-02 : f32
    %67 = vector.broadcast %cst_25 : f32 to vector<2x128xf32>
    %68 = arith.mulf %67, %64 : vector<2x128xf32>
    %69 = arith.mulf %68, %64 : vector<2x128xf32>
    %70 = arith.mulf %69, %64 : vector<2x128xf32>
    %71 = arith.addf %64, %70 : vector<2x128xf32>
    %cst_26 = arith.constant 0.797884583 : f32
    %72 = vector.broadcast %cst_26 : f32 to vector<2x128xf32>
    %73 = arith.mulf %72, %71 : vector<2x128xf32>
    %74 = math.tanh %73 : vector<2x128xf32>
    %cst_27 = arith.constant 1.000000e+00 : f32
    %75 = vector.broadcast %cst_27 : f32 to vector<2x128xf32>
    %76 = arith.addf %75, %74 : vector<2x128xf32>
    %77 = arith.mulf %66, %76 : vector<2x128xf32>
    %c128 = arith.constant 128 : index
    %c0_28 = arith.constant 0 : index
    %78 = vector.load %arg5[%c128, %c0_28] : memref<778x128xf32, #tpu.memory_space<vmem>>, vector<128x128xf32>
    %cst_29 = arith.constant dense<0.000000e+00> : vector<2x128xf32>
    %79 = tpu.matmul %77, %78, %cst_29 {dimension_numbers = #tpu.dot_dimension_numbers<[1], [0], [0], [1], [0, 0, 1, 1], [], []>} : vector<2x128xf32>, vector<128x128xf32>, vector<2x128xf32> -> vector<2x128xf32>
    %80 = vector.extract_strided_slice %2 {offsets = [6, 0], sizes = [1, 128], strides = [1, 1]} : vector<10x128xf32> to vector<1x128xf32>
    %81 = vector.broadcast %80 : vector<1x128xf32> to vector<2x128xf32>
    %82 = arith.addf %79, %81 : vector<2x128xf32>
    %83 = vector.extract_strided_slice %82 {offsets = [0, 0], sizes = [2, 32], strides = [1, 1]} : vector<2x128xf32> to vector<2x32xf32>
    %84 = arith.addf %59, %83 : vector<2x32xf32>
    %85 = vector.extract_strided_slice %2 {offsets = [7, 0], sizes = [1, 32], strides = [1, 1]} : vector<10x128xf32> to vector<1x32xf32>
    %86 = vector.extract_strided_slice %2 {offsets = [8, 0], sizes = [1, 32], strides = [1, 1]} : vector<10x128xf32> to vector<1x32xf32>
    %cst_30 = arith.constant dense<0.000000e+00> : vector<2xf32>
    %87 = vector.multi_reduction <add>, %84, %cst_30 [1] : vector<2x32xf32> to vector<2xf32>
    %88 = vector.shape_cast %87 : vector<2xf32> to vector<2x1xf32>
    %cst_31 = arith.constant 3.200000e+01 : f32
    %89 = vector.broadcast %cst_31 : f32 to vector<2x1xf32>
    %90 = arith.divf %88, %89 : vector<2x1xf32>
    %91 = vector.broadcast %90 : vector<2x1xf32> to vector<2x32xf32>
    %92 = arith.subf %84, %91 : vector<2x32xf32>
    %93 = arith.mulf %92, %92 : vector<2x32xf32>
    %cst_32 = arith.constant dense<0.000000e+00> : vector<2xf32>
    %94 = vector.multi_reduction <add>, %93, %cst_32 [1] : vector<2x32xf32> to vector<2xf32>
    %95 = vector.shape_cast %94 : vector<2xf32> to vector<2x1xf32>
    %cst_33 = arith.constant 3.200000e+01 : f32
    %96 = vector.broadcast %cst_33 : f32 to vector<2x1xf32>
    %97 = arith.divf %95, %96 : vector<2x1xf32>
    %98 = vector.broadcast %90 : vector<2x1xf32> to vector<2x32xf32>
    %99 = arith.subf %84, %98 : vector<2x32xf32>
    %cst_34 = arith.constant 9.99999996E-13 : f32
    %100 = vector.broadcast %cst_34 : f32 to vector<2x1xf32>
    %101 = arith.addf %97, %100 : vector<2x1xf32>
    %102 = math.rsqrt %101 : vector<2x1xf32>
    %103 = vector.broadcast %102 : vector<2x1xf32> to vector<2x32xf32>
    %104 = arith.mulf %99, %103 : vector<2x32xf32>
    %105 = vector.broadcast %85 : vector<1x32xf32> to vector<2x32xf32>
    %106 = arith.mulf %104, %105 : vector<2x32xf32>
    %107 = vector.broadcast %86 : vector<1x32xf32> to vector<2x32xf32>
    %108 = arith.addf %106, %107 : vector<2x32xf32>
    tpu.wait_dma2 semaphore(%arg11 : memref<!tpu.dma_semaphore, #tpu.memory_space<semaphore_mem>>) src(%arg4 : memref<1024x36xbf16, #tpu.memory_space<any>>) dst(%arg10 : memref<1024x36xbf16, #tpu.memory_space<vmem>>)
    %c160 = arith.constant 160 : index
    %c0_35 = arith.constant 0 : index
    %109 = vector.load %arg7[%c160, %c0_35] : memref<163x40xf32, #tpu.memory_space<vmem>>, vector<3x40xf32>
    %c0_36 = arith.constant 0 : index
    %c0_37 = arith.constant 0 : index
    %110 = vector.load %arg10[%c0_36, %c0_37] : memref<1024x36xbf16, #tpu.memory_space<vmem>>, vector<1024x36xbf16>
    %c0_38 = arith.constant 0 : index
    %c0_39 = arith.constant 0 : index
    %111 = vector.load %arg6[%c0_38, %c0_39] : memref<36x40xbf16, #tpu.memory_space<vmem>>, vector<36x40xbf16>
    %cst_40 = arith.constant dense<0.000000e+00> : vector<1024x40xf32>
    %112 = tpu.matmul %110, %111, %cst_40 {dimension_numbers = #tpu.dot_dimension_numbers<[1], [0], [0], [1], [0, 0, 1, 1], [], []>} : vector<1024x36xbf16>, vector<36x40xbf16>, vector<1024x40xf32> -> vector<1024x40xf32>
    %113 = vector.extract_strided_slice %109 {offsets = [0, 0], sizes = [1, 40], strides = [1, 1]} : vector<3x40xf32> to vector<1x40xf32>
    %114 = vector.broadcast %113 : vector<1x40xf32> to vector<1024x40xf32>
    %115 = arith.addf %112, %114 : vector<1024x40xf32>
    %cst_41 = arith.constant 0.000000e+00 : f32
    %116 = vector.broadcast %cst_41 : f32 to vector<1024x40xf32>
    %117 = arith.maximumf %115, %116 : vector<1024x40xf32>
    %118 = tpu.iota {dimensions = array<i32: 0>} : vector<4x1024xi32>
    %119 = tpu.iota {dimensions = array<i32: 1>} : vector<4x1024xi32>
    %c256_i32 = arith.constant 256 : i32
    %120 = vector.broadcast %c256_i32 : i32 to vector<4x1024xi32>
    %121 = arith.muli %118, %120 : vector<4x1024xi32>
    %122 = arith.cmpi sge, %119, %121 : vector<4x1024xi32>
    %c1_i32 = arith.constant 1 : i32
    %123 = vector.broadcast %c1_i32 : i32 to vector<4x1024xi32>
    %124 = arith.addi %118, %123 : vector<4x1024xi32>
    %c256_i32_42 = arith.constant 256 : i32
    %125 = vector.broadcast %c256_i32_42 : i32 to vector<4x1024xi32>
    %126 = arith.muli %124, %125 : vector<4x1024xi32>
    %127 = arith.cmpi slt, %119, %126 : vector<4x1024xi32>
    %128 = arith.andi %122, %127 : vector<4x1024xi1>
    %cst_43 = arith.constant 3.906250e-03 : f32
    %cst_44 = arith.constant 0.000000e+00 : f32
    %129 = vector.broadcast %cst_43 : f32 to vector<4x1024xf32>
    %130 = vector.broadcast %cst_44 : f32 to vector<4x1024xf32>
    %131 = arith.select %128, %129, %130 : vector<4x1024xi1>, vector<4x1024xf32>
    %cst_45 = arith.constant dense<0.000000e+00> : vector<4x40xf32>
    %132 = tpu.matmul %131, %117, %cst_45 {dimension_numbers = #tpu.dot_dimension_numbers<[1], [0], [0], [1], [0, 0, 1, 1], [], []>} : vector<4x1024xf32>, vector<1024x40xf32>, vector<4x40xf32> -> vector<4x40xf32>
    %133 = vector.extract_strided_slice %132 {offsets = [0, 0], sizes = [2, 40], strides = [1, 1]} : vector<4x40xf32> to vector<2x40xf32>
    %134 = vector.extract_strided_slice %132 {offsets = [2, 0], sizes = [2, 40], strides = [1, 1]} : vector<4x40xf32> to vector<2x40xf32>
    %c0_46 = arith.constant 0 : index
    %c0_47 = arith.constant 0 : index
    %135 = vector.load %arg7[%c0_46, %c0_47] : memref<163x40xf32, #tpu.memory_space<vmem>>, vector<40x40xf32>
    %cst_48 = arith.constant dense<0.000000e+00> : vector<2x40xf32>
    %136 = tpu.matmul %133, %135, %cst_48 {dimension_numbers = #tpu.dot_dimension_numbers<[1], [0], [0], [1], [0, 0, 1, 1], [], []>} : vector<2x40xf32>, vector<40x40xf32>, vector<2x40xf32> -> vector<2x40xf32>
    %c40 = arith.constant 40 : index
    %c0_49 = arith.constant 0 : index
    %137 = vector.load %arg7[%c40, %c0_49] : memref<163x40xf32, #tpu.memory_space<vmem>>, vector<40x40xf32>
    %cst_50 = arith.constant dense<0.000000e+00> : vector<2x40xf32>
    %138 = tpu.matmul %134, %137, %cst_50 {dimension_numbers = #tpu.dot_dimension_numbers<[1], [0], [0], [1], [0, 0, 1, 1], [], []>} : vector<2x40xf32>, vector<40x40xf32>, vector<2x40xf32> -> vector<2x40xf32>
    %139 = arith.addf %136, %138 : vector<2x40xf32>
    %140 = vector.extract_strided_slice %109 {offsets = [1, 0], sizes = [1, 40], strides = [1, 1]} : vector<3x40xf32> to vector<1x40xf32>
    %141 = vector.broadcast %140 : vector<1x40xf32> to vector<2x40xf32>
    %142 = arith.addf %139, %141 : vector<2x40xf32>
    %143 = arith.negf %142 : vector<2x40xf32>
    %144 = math.exp %143 : vector<2x40xf32>
    %cst_51 = arith.constant 1.000000e+00 : f32
    %145 = vector.broadcast %cst_51 : f32 to vector<2x40xf32>
    %146 = arith.addf %145, %144 : vector<2x40xf32>
    %147 = arith.divf %145, %146 : vector<2x40xf32>
    %c80 = arith.constant 80 : index
    %c0_52 = arith.constant 0 : index
    %148 = vector.load %arg7[%c80, %c0_52] : memref<163x40xf32, #tpu.memory_space<vmem>>, vector<40x40xf32>
    %cst_53 = arith.constant dense<0.000000e+00> : vector<2x40xf32>
    %149 = tpu.matmul %133, %148, %cst_53 {dimension_numbers = #tpu.dot_dimension_numbers<[1], [0], [0], [1], [0, 0, 1, 1], [], []>} : vector<2x40xf32>, vector<40x40xf32>, vector<2x40xf32> -> vector<2x40xf32>
    %c120 = arith.constant 120 : index
    %c0_54 = arith.constant 0 : index
    %150 = vector.load %arg7[%c120, %c0_54] : memref<163x40xf32, #tpu.memory_space<vmem>>, vector<40x40xf32>
    %cst_55 = arith.constant dense<0.000000e+00> : vector<2x40xf32>
    %151 = tpu.matmul %134, %150, %cst_55 {dimension_numbers = #tpu.dot_dimension_numbers<[1], [0], [0], [1], [0, 0, 1, 1], [], []>} : vector<2x40xf32>, vector<40x40xf32>, vector<2x40xf32> -> vector<2x40xf32>
    %152 = arith.addf %149, %151 : vector<2x40xf32>
    %153 = vector.extract_strided_slice %109 {offsets = [2, 0], sizes = [1, 40], strides = [1, 1]} : vector<3x40xf32> to vector<1x40xf32>
    %154 = vector.broadcast %153 : vector<1x40xf32> to vector<2x40xf32>
    %155 = arith.addf %152, %154 : vector<2x40xf32>
    %156 = arith.negf %155 : vector<2x40xf32>
    %157 = math.exp %156 : vector<2x40xf32>
    %cst_56 = arith.constant 1.000000e+00 : f32
    %158 = vector.broadcast %cst_56 : f32 to vector<2x40xf32>
    %159 = arith.addf %158, %157 : vector<2x40xf32>
    %160 = arith.divf %158, %159 : vector<2x40xf32>
    %161 = arith.mulf %133, %147 : vector<2x40xf32>
    %162 = arith.mulf %134, %160 : vector<2x40xf32>
    %c112 = arith.constant 112 : index
    %c0_57 = arith.constant 0 : index
    %163 = vector.load %arg8[%c112, %c0_57] : memref<115x512xf32, #tpu.memory_space<vmem>>, vector<3x512xf32>
    %c0_58 = arith.constant 0 : index
    %c0_59 = arith.constant 0 : index
    %164 = vector.load %arg8[%c0_58, %c0_59] : memref<115x512xf32, #tpu.memory_space<vmem>>, vector<32x512xf32>
    %cst_60 = arith.constant dense<0.000000e+00> : vector<2x512xf32>
    %165 = tpu.matmul %108, %164, %cst_60 {dimension_numbers = #tpu.dot_dimension_numbers<[1], [0], [0], [1], [0, 0, 1, 1], [], []>} : vector<2x32xf32>, vector<32x512xf32>, vector<2x512xf32> -> vector<2x512xf32>
    %c32_61 = arith.constant 32 : index
    %c0_62 = arith.constant 0 : index
    %166 = vector.load %arg8[%c32_61, %c0_62] : memref<115x512xf32, #tpu.memory_space<vmem>>, vector<40x512xf32>
    %cst_63 = arith.constant dense<0.000000e+00> : vector<2x512xf32>
    %167 = tpu.matmul %161, %166, %cst_63 {dimension_numbers = #tpu.dot_dimension_numbers<[1], [0], [0], [1], [0, 0, 1, 1], [], []>} : vector<2x40xf32>, vector<40x512xf32>, vector<2x512xf32> -> vector<2x512xf32>
    %168 = arith.addf %165, %167 : vector<2x512xf32>
    %c72 = arith.constant 72 : index
    %c0_64 = arith.constant 0 : index
    %169 = vector.load %arg8[%c72, %c0_64] : memref<115x512xf32, #tpu.memory_space<vmem>>, vector<40x512xf32>
    %cst_65 = arith.constant dense<0.000000e+00> : vector<2x512xf32>
    %170 = tpu.matmul %162, %169, %cst_65 {dimension_numbers = #tpu.dot_dimension_numbers<[1], [0], [0], [1], [0, 0, 1, 1], [], []>} : vector<2x40xf32>, vector<40x512xf32>, vector<2x512xf32> -> vector<2x512xf32>
    %171 = arith.addf %168, %170 : vector<2x512xf32>
    %172 = vector.extract_strided_slice %163 {offsets = [0, 0], sizes = [1, 512], strides = [1, 1]} : vector<3x512xf32> to vector<1x512xf32>
    %173 = vector.broadcast %172 : vector<1x512xf32> to vector<2x512xf32>
    %174 = arith.addf %171, %173 : vector<2x512xf32>
    %cst_66 = arith.constant 0.000000e+00 : f32
    %175 = vector.broadcast %cst_66 : f32 to vector<2x512xf32>
    %176 = arith.maximumf %174, %175 : vector<2x512xf32>
    %177 = vector.extract_strided_slice %163 {offsets = [1, 0], sizes = [1, 512], strides = [1, 1]} : vector<3x512xf32> to vector<1x512xf32>
    %178 = vector.extract_strided_slice %163 {offsets = [2, 0], sizes = [1, 512], strides = [1, 1]} : vector<3x512xf32> to vector<1x512xf32>
    %cst_67 = arith.constant dense<0.000000e+00> : vector<2xf32>
    %179 = vector.multi_reduction <add>, %176, %cst_67 [1] : vector<2x512xf32> to vector<2xf32>
    %180 = vector.shape_cast %179 : vector<2xf32> to vector<2x1xf32>
    %cst_68 = arith.constant 5.120000e+02 : f32
    %181 = vector.broadcast %cst_68 : f32 to vector<2x1xf32>
    %182 = arith.divf %180, %181 : vector<2x1xf32>
    %183 = vector.broadcast %182 : vector<2x1xf32> to vector<2x512xf32>
    %184 = arith.subf %176, %183 : vector<2x512xf32>
    %185 = arith.mulf %184, %184 : vector<2x512xf32>
    %cst_69 = arith.constant dense<0.000000e+00> : vector<2xf32>
    %186 = vector.multi_reduction <add>, %185, %cst_69 [1] : vector<2x512xf32> to vector<2xf32>
    %187 = vector.shape_cast %186 : vector<2xf32> to vector<2x1xf32>
    %cst_70 = arith.constant 5.120000e+02 : f32
    %188 = vector.broadcast %cst_70 : f32 to vector<2x1xf32>
    %189 = arith.divf %187, %188 : vector<2x1xf32>
    %190 = vector.broadcast %182 : vector<2x1xf32> to vector<2x512xf32>
    %191 = arith.subf %176, %190 : vector<2x512xf32>
    %cst_71 = arith.constant 9.99999974E-6 : f32
    %192 = vector.broadcast %cst_71 : f32 to vector<2x1xf32>
    %193 = arith.addf %189, %192 : vector<2x1xf32>
    %194 = math.rsqrt %193 : vector<2x1xf32>
    %195 = vector.broadcast %194 : vector<2x1xf32> to vector<2x512xf32>
    %196 = arith.mulf %191, %195 : vector<2x512xf32>
    %197 = vector.broadcast %177 : vector<1x512xf32> to vector<2x512xf32>
    %198 = arith.mulf %196, %197 : vector<2x512xf32>
    %199 = vector.broadcast %178 : vector<1x512xf32> to vector<2x512xf32>
    %200 = arith.addf %198, %199 : vector<2x512xf32>
    %c256 = arith.constant 256 : index
    %c0_72 = arith.constant 0 : index
    %201 = vector.load %arg5[%c256, %c0_72] : memref<778x128xf32, #tpu.memory_space<vmem>>, vector<512x128xf32>
    %cst_73 = arith.constant dense<0.000000e+00> : vector<2x128xf32>
    %202 = tpu.matmul %200, %201, %cst_73 {dimension_numbers = #tpu.dot_dimension_numbers<[1], [0], [0], [1], [0, 0, 1, 1], [], []>} : vector<2x512xf32>, vector<512x128xf32>, vector<2x128xf32> -> vector<2x128xf32>
    %203 = vector.extract_strided_slice %2 {offsets = [9, 0], sizes = [1, 128], strides = [1, 1]} : vector<10x128xf32> to vector<1x128xf32>
    %204 = vector.broadcast %203 : vector<1x128xf32> to vector<2x128xf32>
    %205 = arith.addf %202, %204 : vector<2x128xf32>
    %c0_74 = arith.constant 0 : index
    %c0_75 = arith.constant 0 : index
    %206 = vector.load %arg9[%c0_74, %c0_75] : memref<2x128xf32, #tpu.memory_space<vmem>>, vector<2x128xf32>
    tpu.vector_store %arg9[%c0_74, %c0_75], %205 {strides = array<i32>} : memref<2x128xf32, #tpu.memory_space<vmem>>, vector<2x128xf32>,
    return
  }
  func.func @transform_0(%arg0: i32) -> (i32, i32) {
    %c0_i32 = arith.constant 0 : i32
    %c0_i32_0 = arith.constant 0 : i32
    %c0_i32_1 = arith.constant 0 : i32
    return %c0_i32, %c0_i32_0 : i32, i32
  }
  func.func @transform_1(%arg0: i32) -> (i32, i32) {
    %c0_i32 = arith.constant 0 : i32
    %c0_i32_0 = arith.constant 0 : i32
    %c0_i32_1 = arith.constant 0 : i32
    return %c0_i32, %c0_i32_0 : i32, i32
  }
  func.func @transform_2(%arg0: i32) -> (i32, i32) {
    %c0_i32 = arith.constant 0 : i32
    %c0_i32_0 = arith.constant 0 : i32
    %c0_i32_1 = arith.constant 0 : i32
    return %c0_i32, %c0_i32_0 : i32, i32
  }
  func.func @transform_4(%arg0: i32) -> (i32, i32) {
    %c0_i32 = arith.constant 0 : i32
    %c0_i32_0 = arith.constant 0 : i32
    %c0_i32_1 = arith.constant 0 : i32
    return %c0_i32, %c0_i32_0 : i32, i32
  }
  func.func @transform_5(%arg0: i32) -> (i32, i32) {
    %c0_i32 = arith.constant 0 : i32
    %c0_i32_0 = arith.constant 0 : i32
    %c0_i32_1 = arith.constant 0 : i32
    return %c0_i32, %c0_i32_0 : i32, i32
  }
  func.func @transform_6(%arg0: i32) -> (i32, i32) {
    %c0_i32 = arith.constant 0 : i32
    %c0_i32_0 = arith.constant 0 : i32
    %c0_i32_1 = arith.constant 0 : i32
    return %c0_i32, %c0_i32_0 : i32, i32
  }
  func.func @transform_7(%arg0: i32) -> (i32, i32) {
    %c0_i32 = arith.constant 0 : i32
    %c0_i32_0 = arith.constant 0 : i32
    %c0_i32_1 = arith.constant 0 : i32
    return %c0_i32, %c0_i32_0 : i32, i32
  }
  func.func @transform_8(%arg0: i32) -> (i32, i32) {
    %c0_i32 = arith.constant 0 : i32
    %c0_i32_0 = arith.constant 0 : i32
    %c0_i32_1 = arith.constant 0 : i32
    return %c0_i32, %c0_i32_0 : i32, i32
  }
}

</mosaic_0001>

<llo_original>
// kernel: forward.1
$region0: #{forward.1}
  #allocation0 [shape = 'u32[]', space=smem, size = 0x4, offset = 0x4, fixed_abs, tag = 'smem constant byte address 0x4 - core index']
  #allocation1 [shape = 'u32[144,128]{1,0:T(1,128)}', space=vmem, size = 0x12000, scoped, tag = 'internal scratch']
  #allocation2 [shape = 'bf16[1024,36]{1,0:T(16,128)(2,1)}', space=vmem, size = 0x40000, scoped, tag = 'scratch operand']
  #allocation3 [shape = 's32[1]{0}', space=sflag, size = 0x4, scoped, tag = 'scratch operand']
  #allocation6 [shape = 's32[]', space=sflag, size = 0x4, offset = 0, fixed_abs, tag = 'sflag constant byte address 0x0 - dummy sync flag']
  %s0 = inlined_call_operand.vmem [shape: f32[2,32], index: 0, kind: input, shape index: {}]
  %s1 = inlined_call_operand.vmem [shape: f32[16,32], index: 1, kind: input, shape index: {}]
  %s2 = inlined_call_operand.vmem [shape: f32[2,16], index: 2, kind: input, shape index: {}]
  %s3 = inlined_call_operand.vmem [shape: bf16[1024,36], index: 3, kind: input, shape index: {}]
  %s4 = inlined_call_operand.vmem [shape: f32[778,128], index: 4, kind: input, shape index: {}]
  %s5 = inlined_call_operand.vmem [shape: bf16[36,40], index: 5, kind: input, shape index: {}]
  %s6 = inlined_call_operand.vmem [shape: f32[163,40], index: 6, kind: input, shape index: {}]
  %s7 = inlined_call_operand.vmem [shape: f32[115,512], index: 7, kind: input, shape index: {}]
  %s8 = inlined_call_operand.hbm [shape: f32[2,128], index: 8, kind: output, shape index: {}]
  %s9 = sld [smem:[#allocation0]]
  $region72: #{forward.1} parent=0
    _
  %s11 = ssub.s32 1, %s9
  %s12 = scalar_select 0, %s11, %s9
  $region1: #{forward.1} parent=0
    #allocation4 [shape = 'u8[1024]{0}', space=vmem, size = 0x400, scoped, tag = 'output window, operand 0, single buffered']
    #allocation5 [shape = 's32[1]{0}', space=sflag, size = 0x4, scoped, tag = 'scoped memory for forward.1']
    %13 = vsyncpa [#allocation5], 0
    // Predicated region
    $region2: #{forward.1} parent=1 // pred_check
      _
    $region3: #{forward.1} parent=1 // pred_check_branch
      %15 = sbr.rel (0) target = $region5
    $region4: #{forward.1} parent=1 // pred_region
      _
    $region5: #{forward.1} parent=1 // pred_fallthru
      _
    // Predicated region
    $region6: #{forward.1} parent=1 // pred_check
      _
    $region7: #{forward.1} parent=1 // pred_check_branch
      %17 = sbr.rel (0) target = $region9
    $region8: #{forward.1} parent=1 // pred_region
      _
    $region9: #{forward.1} parent=1 // pred_fallthru
      _
    // Predicated region
    $region10: #{forward.1} parent=1 // pred_check
      _
    $region11: #{forward.1} parent=1 // pred_check_branch
      %19 = sbr.rel (0) target = $region13
    $region12: #{forward.1} parent=1 // pred_region
      _
    $region13: #{forward.1} parent=1 // pred_fallthru
      _
    // Predicated region
    $region14: #{forward.1} parent=1 // pred_check
      _
    $region15: #{forward.1} parent=1 // pred_check_branch
      %21 = sbr.rel (0) target = $region17
    $region16: #{forward.1} parent=1 // pred_region
      _
    $region17: #{forward.1} parent=1 // pred_fallthru
      _
    // Predicated region
    $region18: #{forward.1} parent=1 // pred_check
      _
    $region19: #{forward.1} parent=1 // pred_check_branch
      %23 = sbr.rel (0) target = $region21
    $region20: #{forward.1} parent=1 // pred_region
      _
    $region21: #{forward.1} parent=1 // pred_fallthru
      _
    // Predicated region
    $region22: #{forward.1} parent=1 // pred_check
      _
    $region23: #{forward.1} parent=1 // pred_check_branch
      %25 = sbr.rel (0) target = $region25
    $region24: #{forward.1} parent=1 // pred_region
      _
    $region25: #{forward.1} parent=1 // pred_fallthru
      _
    // Predicated region
    $region26: #{forward.1} parent=1 // pred_check
      _
    $region27: #{forward.1} parent=1 // pred_check_branch
      %27 = sbr.rel (0) target = $region29
    $region28: #{forward.1} parent=1 // pred_region
      _
    $region29: #{forward.1} parent=1 // pred_fallthru
      _
    %p30 = scmp.lt.u32.totalorder 512, 8
    %p31 = pneg %p30
    // Predicated region
    $region30: #{forward.1} parent=1 // pred_check
      _
    $region31: #{forward.1} parent=1 // pred_check_branch
      %33 = sbr.rel (%p30) target = $region33
    $region32: #{forward.1} parent=1 // pred_region
      %s48 = sand.u32 512, 7
      %p49 = scmp.eq.s32.totalorder %s48, 0
      // Predicated region
      $region45: #{forward.1} parent=32 // pred_check
        %p50 = pneg %p49
      $region46: #{forward.1} parent=32 // pred_check_branch
        %52 = sbr.rel (%p50) target = $region48
      $region47: #{forward.1} parent=32 // pred_region
        loop: start=0, step=1, limit=1
        $region49: #{forward.1} parent=47 // loop_pre_header
          _
        $region50: #{forward.1} parent=47 // loop_header
          %s54 = sphi 0, %s58
          %p55 = scmp.ge.s32.totalorder %s54, 1
          %s59 = sphi %s3, %s3
          %s60 = sphi [#allocation2], [#allocation2]
        $region51: #{forward.1} parent=47 // loop_header_branch
          %57 = sbr.rel (%p55) target = $region55
        $region52: #{forward.1} parent=47 // loop_body
          %v61 = vld [vmem:[%s59] sm:$0xff]
          %62 = vst [vmem:[%s60] sm:$0xff] %v61
          %v63 = vld [vmem:[%s59 + $0x8] sm:$0xff]
          %64 = vst [vmem:[%s60 + $0x8] sm:$0xff] %v63
          %v65 = vld [vmem:[%s59 + $0x10] sm:$0xff]
          %66 = vst [vmem:[%s60 + $0x10] sm:$0xff] %v65
          %v67 = vld [vmem:[%s59 + $0x18] sm:$0xff]
          %68 = vst [vmem:[%s60 + $0x18] sm:$0xff] %v67
          %v69 = vld [vmem:[%s59 + $0x20] sm:$0xff]
          %70 = vst [vmem:[%s60 + $0x20] sm:$0xff] %v69
          %v71 = vld [vmem:[%s59 + $0x28] sm:$0xff]
          %72 = vst [vmem:[%s60 + $0x28] sm:$0xff] %v71
          %v73 = vld [vmem:[%s59 + $0x30] sm:$0xff]
          %74 = vst [vmem:[%s60 + $0x30] sm:$0xff] %v73
          %v75 = vld [vmem:[%s59 + $0x38] sm:$0xff]
          %76 = vst [vmem:[%s60 + $0x38] sm:$0xff] %v75
          %v77 = vld [vmem:[%s59 + $0x40] sm:$0xff]
          %78 = vst [vmem:[%s60 + $0x40] sm:$0xff] %v77
          %v79 = vld [vmem:[%s59 + $0x48] sm:$0xff]
          %80 = vst [vmem:[%s60 + $0x48] sm:$0xff] %v79
          %v81 = vld [vmem:[%s59 + $0x50] sm:$0xff]
          %82 = vst [vmem:[%s60 + $0x50] sm:$0xff] %v81
          %v83 = vld [vmem:[%s59 + $0x58] sm:$0xff]
          %84 = vst [vmem:[%s60 + $0x58] sm:$0xff] %v83
          %v85 = vld [vmem:[%s59 + $0x60] sm:$0xff]
          %86 = vst [vmem:[%s60 + $0x60] sm:$0xff] %v85
          %v87 = vld [vmem:[%s59 + $0x68] sm:$0xff]
          %88 = vst [vmem:[%s60 + $0x68] sm:$0xff] %v87
          %v89 = vld [vmem:[%s59 + $0x70] sm:$0xff]
          %90 = vst [vmem:[%s60 + $0x70] sm:$0xff] %v89
          %v91 = vld [vmem:[%s59 + $0x78] sm:$0xff]
          %92 = vst [vmem:[%s60 + $0x78] sm:$0xff] %v91
          %v93 = vld [vmem:[%s59 + $0x80] sm:$0xff]
          %94 = vst [vmem:[%s60 + $0x80] sm:$0xff] %v93
          %v95 = vld [vmem:[%s59 + $0x88] sm:$0xff]
          %96 = vst [vmem:[%s60 + $0x88] sm:$0xff] %v95
          %v97 = vld [vmem:[%s59 + $0x90] sm:$0xff]
          %98 = vst [vmem:[%s60 + $0x90] sm:$0xff] %v97
          %v99 = vld [vmem:[%s59 + $0x98] sm:$0xff]
          %100 = vst [vmem:[%s60 + $0x98] sm:$0xff] %v99
          %v101 = vld [vmem:[%s59 + $0xa0] sm:$0xff]
          %102 = vst [vmem:[%s60 + $0xa0] sm:$0xff] %v101
          %v103 = vld [vmem:[%s59 + $0xa8] sm:$0xff]
          %104 = vst [vmem:[%s60 + $0xa8] sm:$0xff] %v103
          %v105 = vld [vmem:[%s59 + $0xb0] sm:$0xff]
          %106 = vst [vmem:[%s60 + $0xb0] sm:$0xff] %v105
          %v107 = vld [vmem:[%s59 + $0xb8] sm:$0xff]
          %108 = vst [vmem:[%s60 + $0xb8] sm:$0xff] %v107
          %v109 = vld [vmem:[%s59 + $0xc0] sm:$0xff]
          %110 = vst [vmem:[%s60 + $0xc0] sm:$0xff] %v109
          %v111 = vld [vmem:[%s59 + $0xc8] sm:$0xff]
          %112 = vst [vmem:[%s60 + $0xc8] sm:$0xff] %v111
          %v113 = vld [vmem:[%s59 + $0xd0] sm:$0xff]
          %114 = vst [vmem:[%s60 + $0xd0] sm:$0xff] %v113
          %v115 = vld [vmem:[%s59 + $0xd8] sm:$0xff]
          %116 = vst [vmem:[%s60 + $0xd8] sm:$0xff] %v115
          %v117 = vld [vmem:[%s59 + $0xe0] sm:$0xff]
          %118 = vst [vmem:[%s60 + $0xe0] sm:$0xff] %v117
          %v119 = vld [vmem:[%s59 + $0xe8] sm:$0xff]
          %120 = vst [vmem:[%s60 + $0xe8] sm:$0xff] %v119
          %v121 = vld [vmem:[%s59 + $0xf0] sm:$0xff]
          %122 = vst [vmem:[%s60 + $0xf0] sm:$0xff] %v121
          %v123 = vld [vmem:[%s59 + $0xf8] sm:$0xff]
          %124 = vst [vmem:[%s60 + $0xf8] sm:$0xff] %v123
          %v125 = vld [vmem:[%s59 + $0x100] sm:$0xff]
          %126 = vst [vmem:[%s60 + $0x100] sm:$0xff] %v125
          %v127 = vld [vmem:[%s59 + $0x108] sm:$0xff]
          %128 = vst [vmem:[%s60 + $0x108] sm:$0xff] %v127
          %v129 = vld [vmem:[%s59 + $0x110] sm:$0xff]
          %130 = vst [vmem:[%s60 + $0x110] sm:$0xff] %v129
          %v131 = vld [vmem:[%s59 + $0x118] sm:$0xff]
          %132 = vst [vmem:[%s60 + $0x118] sm:$0xff] %v131
          %v133 = vld [vmem:[%s59 + $0x120] sm:$0xff]
          %134 = vst [vmem:[%s60 + $0x120] sm:$0xff] %v133
          %v135 = vld [vmem:[%s59 + $0x128] sm:$0xff]
          %136 = vst [vmem:[%s60 + $0x128] sm:$0xff] %v135
          %v137 = vld [vmem:[%s59 + $0x130] sm:$0xff]
          %138 = vst [vmem:[%s60 + $0x130] sm:$0xff] %v137
          %v139 = vld [vmem:[%s59 + $0x138] sm:$0xff]
          %140 = vst [vmem:[%s60 + $0x138] sm:$0xff] %v139
          %v141 = vld [vmem:[%s59 + $0x140] sm:$0xff]
          %142 = vst [vmem:[%s60 + $0x140] sm:$0xff] %v141
          %v143 = vld [vmem:[%s59 + $0x148] sm:$0xff]
          %144 = vst [vmem:[%s60 + $0x148] sm:$0xff] %v143
          %v145 = vld [vmem:[%s59 + $0x150] sm:$0xff]
          %146 = vst [vmem:[%s60 + $0x150] sm:$0xff] %v145
          %v147 = vld [vmem:[%s59 + $0x158] sm:$0xff]
          %148 = vst [vmem:[%s60 + $0x158] sm:$0xff] %v147
          %v149 = vld [vmem:[%s59 + $0x160] sm:$0xff]
          %150 = vst [vmem:[%s60 + $0x160] sm:$0xff] %v149
          %v151 = vld [vmem:[%s59 + $0x168] sm:$0xff]
          %152 = vst [vmem:[%s60 + $0x168] sm:$0xff] %v151
          %v153 = vld [vmem:[%s59 + $0x170] sm:$0xff]
          %154 = vst [vmem:[%s60 + $0x170] sm:$0xff] %v153
          %v155 = vld [vmem:[%s59 + $0x178] sm:$0xff]
          %156 = vst [vmem:[%s60 + $0x178] sm:$0xff] %v155
          %v157 = vld [vmem:[%s59 + $0x180] sm:$0xff]
          %158 = vst [vmem:[%s60 + $0x180] sm:$0xff] %v157
          %v159 = vld [vmem:[%s59 + $0x188] sm:$0xff]
          %160 = vst [vmem:[%s60 + $0x188] sm:$0xff] %v159
          %v161 = vld [vmem:[%s59 + $0x190] sm:$0xff]
          %162 = vst [vmem:[%s60 + $0x190] sm:$0xff] %v161
          %v163 = vld [vmem:[%s59 + $0x198] sm:$0xff]
          %164 = vst [vmem:[%s60 + $0x198] sm:$0xff] %v163
          %v165 = vld [vmem:[%s59 + $0x1a0] sm:$0xff]
          %166 = vst [vmem:[%s60 + $0x1a0] sm:$0xff] %v165
          %v167 = vld [vmem:[%s59 + $0x1a8] sm:$0xff]
          %168 = vst [vmem:[%s60 + $0x1a8] sm:$0xff] %v167
          %v169 = vld [vmem:[%s59 + $0x1b0] sm:$0xff]
          %170 = vst [vmem:[%s60 + $0x1b0] sm:$0xff] %v169
          %v171 = vld [vmem:[%s59 + $0x1b8] sm:$0xff]
          %172 = vst [vmem:[%s60 + $0x1b8] sm:$0xff] %v171
          %v173 = vld [vmem:[%s59 + $0x1c0] sm:$0xff]
          %174 = vst [vmem:[%s60 + $0x1c0] sm:$0xff] %v173
          %v175 = vld [vmem:[%s59 + $0x1c8] sm:$0xff]
          %176 = vst [vmem:[%s60 + $0x1c8] sm:$0xff] %v175
          %v177 = vld [vmem:[%s59 + $0x1d0] sm:$0xff]
          %178 = vst [vmem:[%s60 + $0x1d0] sm:$0xff] %v177
          %v179 = vld [vmem:[%s59 + $0x1d8] sm:$0xff]
          %180 = vst [vmem:[%s60 + $0x1d8] sm:$0xff] %v179
          %v181 = vld [vmem:[%s59 + $0x1e0] sm:$0xff]
          %182 = vst [vmem:[%s60 + $0x1e0] sm:$0xff] %v181
          %v183 = vld [vmem:[%s59 + $0x1e8] sm:$0xff]
          %184 = vst [vmem:[%s60 + $0x1e8] sm:$0xff] %v183
          %v185 = vld [vmem:[%s59 + $0x1f0] sm:$0xff]
          %186 = vst [vmem:[%s60 + $0x1f0] sm:$0xff] %v185
          %v187 = vld [vmem:[%s59 + $0x1f8] sm:$0xff]
          %188 = vst [vmem:[%s60 + $0x1f8] sm:$0xff] %v187
        $region53: #{forward.1} parent=47 // loop_footer
          %s58 = sadd.s32 1, %s54
        $region54: #{forward.1} parent=47 // loop_footer_branch
          %53 = sbr.rel target = $region50
        $region55: #{forward.1} parent=47 // loop_exit
          _
      $region48: #{forward.1} parent=32 // pred_fallthru
        _
      %p189 = pneg %p49
      // Predicated region
      $region56: #{forward.1} parent=32 // pred_check
        _
      $region57: #{forward.1} parent=32 // pred_check_branch
        %191 = sbr.rel (%p49) target = $region59
      $region58: #{forward.1} parent=32 // pred_region
        %s192 = sand.u32 512, 7
      $region59: #{forward.1} parent=32 // pred_fallthru
        _
    $region33: #{forward.1} parent=1 // pred_fallthru
      _
    // Predicated region
    $region34: #{forward.1} parent=1 // pred_check
      %p34 = pneg %p30
    $region35: #{forward.1} parent=1 // pred_check_branch
      %36 = sbr.rel (%p34) target = $region37
    $region36: #{forward.1} parent=1 // pred_region
      %s37 = sshllo.u32 0, 512
      loop: start=0, step=1, limit=1
      $region38: #{forward.1} parent=36 // loop_pre_header
        _
      $region39: #{forward.1} parent=36 // loop_header
        %s39 = sphi 0, %s43
        %p40 = scmp.ge.s32.totalorder %s39, 1
        %s44 = sphi %s3, %s3
        %s45 = sphi [#allocation2], [#allocation2]
      $region40: #{forward.1} parent=36 // loop_header_branch
        %42 = sbr.rel (%p40) target = $region44
      $region41: #{forward.1} parent=36 // loop_body
        %v46 = vld [vmem:[%s44] sm:%s37]
        %47 = vst [vmem:[%s45] sm:%s37] %v46
      $region42: #{forward.1} parent=36 // loop_footer
        %s43 = sadd.s32 1, %s39
      $region43: #{forward.1} parent=36 // loop_footer_branch
        %38 = sbr.rel target = $region39
      $region44: #{forward.1} parent=36 // loop_exit
        _
    $region37: #{forward.1} parent=1 // pred_fallthru
      _
    // Predicated region
    $region60: #{forward.1} parent=1 // pred_check
      _
    $region61: #{forward.1} parent=1 // pred_check_branch
      %195 = sbr.rel (0) target = $region63
    $region62: #{forward.1} parent=1 // pred_region
      %196 = vsyncadd [#allocation3], 8192
    $region63: #{forward.1} parent=1 // pred_fallthru
      _
    %v197 = vld [vmem:[%s0] sm:$0x3]
    %v198 = vld [vmem:[%s1] sm:$0xff]
    %v199 = vld [vmem:[%s1 + $0x8] sm:$0xff]
    %v200 = vld [vmem:[%s4 + $0x300] sm:$0xff]
    %v201 = vld [vmem:[%s4 + $0x308] sm:$0x3]
    %v202 = vld [vmem:[%s4 + $0x20] sm:$0xff]
    %v203 = vld [vmem:[%s4 + $0x28] sm:$0xff]
    %v204 = vld [vmem:[%s4 + $0x30] sm:$0xff]
    %v205 = vld [vmem:[%s4 + $0x38] sm:$0xff]
    %v206 = vlaneseq
    %v207 = vshrl.u32 %v206, 7
    %v208 = vsub.s32 1, %v207
    %v209 = vrot.slane %v200, %v208
    %vm210 = vcmask 261120
    %v212 = vsel %vm210, %v198, 0
    %v215 = vsel %vm210, %v199, 0
    %217 = vmatprep.subr.mxu0 0.0
    %218 = vmatpush1.msra.mxu0 %v202
    %219 = vmatprep.subr.mxu0 0.0
    %220 = vmatpush1.msra.mxu0 %v203
    %221 = vmatprep.subr.mxu0 0.0
    %222 = vmatpush1.msra.mxu0 %v204
    %223 = vmatprep.subr.mxu0 0.0
    %224 = vmatpush1.msra.mxu0 %v205
    %225 = vmatprep.subr.mxu0 0.0
    %226 = vmatpush1.msra.mxu0 0.0
    %227 = vmatprep.subr.mxu0 0.0
    %228 = vmatpush1.msra.mxu0 0.0
    %229 = vmatprep.subr.mxu0 0.0
    %230 = vmatpush1.msra.mxu0 0.0
    %231 = vmatprep.subr.mxu0 0.0
    %232 = vmatpush1.msra.mxu0 0.0
    %233 = vmatprep.subr.mxu0 0.0
    %234 = vmatpush1.msra.mxu0 0.0
    %235 = vmatprep.subr.mxu0 0.0
    %236 = vmatpush1.msra.mxu0 0.0
    %237 = vmatprep.subr.mxu0 0.0
    %238 = vmatpush1.msra.mxu0 0.0
    %239 = vmatprep.subr.mxu0 0.0
    %240 = vmatpush1.msra.mxu0 0.0
    %241 = vmatprep.subr.mxu0 0.0
    %242 = vmatpush1.msra.mxu0 0.0
    %243 = vmatprep.subr.mxu0 0.0
    %244 = vmatpush1.msra.mxu0 0.0
    %245 = vmatprep.subr.mxu0 0.0
    %246 = vmatpush1.msra.mxu0 0.0
    %247 = vmatprep.subr.mxu0 0.0
    %248 = vmatpush1.msra.mxu0 0.0
    %249 = vmatprep.subr.mxu0 0.0
    %250 = vmatpush1.msra.mxu0 0.0
    %251 = vmatprep.subr.mxu0 0.0
    %252 = vmatpush1.msra.mxu0 0.0
    %253 = vmatprep.subr.mxu0 0.0
    %254 = vmatpush1.msra.mxu0 0.0
    %255 = vmatprep.subr.mxu0 0.0
    %256 = vmatpush1.msra.mxu0 0.0
    %257 = vmatprep.subr.mxu0 0.0
    %258 = vmatpush1.msra.mxu0 0.0
    %259 = vmatprep.subr.mxu0 0.0
    %260 = vmatpush1.msra.mxu0 0.0
    %261 = vmatprep.subr.mxu0 0.0
    %262 = vmatpush1.msra.mxu0 0.0
    %263 = vmatprep.subr.mxu0 0.0
    %264 = vmatpush1.msra.mxu0 0.0
    %265 = vmatprep.subr.mxu0 0.0
    %266 = vmatpush1.msra.mxu0 0.0
    %267 = vmatprep.subr.mxu0 0.0
    %268 = vmatpush1.msra.mxu0 0.0
    %269 = vmatprep.subr.mxu0 0.0
    %270 = vmatpush1.msra.mxu0 0.0
    %271 = vmatprep.subr.mxu0 0.0
    %272 = vmatpush1.msra.mxu0 0.0
    %273 = vmatprep.subr.mxu0 0.0
    %274 = vmatpush1.msra.mxu0 0.0
    %275 = vmatprep.subr.mxu0 0.0
    %276 = vmatpush1.msra.mxu0 0.0
    %277 = vmatprep.subr.mxu0 0.0
    %278 = vmatpush1.msra.mxu0 0.0
    %279 = vmatprep.subr.mxu0 0.0
    %280 = vmatpush1.msra.mxu0 0.0
    %281 = vmatprep.mubr.f32.mxu0 0.0
    %282 = vmatmul.mubr.f32.gmra.mrb[0].mxu0 %v212
    %v283 = vpop.f32.mrb[0].mxu0
    %v284 = vadd.f32 %v209, %v283
    %v285 = vpop.f32.mrb[0].mxu0
    %286 = vmatprep.mubr.f32.mxu0 0.0
    %287 = vmatmul.mubr.f32.gmra.mrb[0].mxu0 %v215
    %v288 = vpop.f32.mrb[0].mxu0
    %v289 = vadd.f32 %v209, %v288
    %v290 = vpop.f32.mrb[0].mxu0
    %291 = vdwg.mxu0
    %v292 = vld [vmem:[%s4] sm:$0xff]
    %v293 = vld [vmem:[%s4 + $0x8] sm:$0xff]
    %v294 = vld [vmem:[%s4 + $0x10] sm:$0xff]
    %v295 = vld [vmem:[%s4 + $0x18] sm:$0xff]
    %v296 = vlaneseq
    %v297 = vshrl.u32 %v296, 7
    %v298 = vsub.s32 0, %v297
    %v299 = vrot.slane %v200, %v298
    %v301 = vsel %vm210, %v197, 0
    %303 = vmatprep.subr.mxu0 0.0
    %304 = vmatpush1.msra.mxu0 %v292
    %305 = vmatprep.subr.mxu0 0.0
    %306 = vmatpush1.msra.mxu0 %v293
    %307 = vmatprep.subr.mxu0 0.0
    %308 = vmatpush1.msra.mxu0 %v294
    %309 = vmatprep.subr.mxu0 0.0
    %310 = vmatpush1.msra.mxu0 %v295
    %311 = vmatprep.subr.mxu0 0.0
    %312 = vmatpush1.msra.mxu0 0.0
    %313 = vmatprep.subr.mxu0 0.0
    %314 = vmatpush1.msra.mxu0 0.0
    %315 = vmatprep.subr.mxu0 0.0
    %316 = vmatpush1.msra.mxu0 0.0
    %317 = vmatprep.subr.mxu0 0.0
    %318 = vmatpush1.msra.mxu0 0.0
    %319 = vmatprep.subr.mxu0 0.0
    %320 = vmatpush1.msra.mxu0 0.0
    %321 = vmatprep.subr.mxu0 0.0
    %322 = vmatpush1.msra.mxu0 0.0
    %323 = vmatprep.subr.mxu0 0.0
    %324 = vmatpush1.msra.mxu0 0.0
    %325 = vmatprep.subr.mxu0 0.0
    %326 = vmatpush1.msra.mxu0 0.0
    %327 = vmatprep.subr.mxu0 0.0
    %328 = vmatpush1.msra.mxu0 0.0
    %329 = vmatprep.subr.mxu0 0.0
    %330 = vmatpush1.msra.mxu0 0.0
    %331 = vmatprep.subr.mxu0 0.0
    %332 = vmatpush1.msra.mxu0 0.0
    %333 = vmatprep.subr.mxu0 0.0
    %334 = vmatpush1.msra.mxu0 0.0
    %335 = vmatprep.subr.mxu0 0.0
    %336 = vmatpush1.msra.mxu0 0.0
    %337 = vmatprep.subr.mxu0 0.0
    %338 = vmatpush1.msra.mxu0 0.0
    %339 = vmatprep.subr.mxu0 0.0
    %340 = vmatpush1.msra.mxu0 0.0
    %341 = vmatprep.subr.mxu0 0.0
    %342 = vmatpush1.msra.mxu0 0.0
    %343 = vmatprep.subr.mxu0 0.0
    %344 = vmatpush1.msra.mxu0 0.0
    %345 = vmatprep.subr.mxu0 0.0
    %346 = vmatpush1.msra.mxu0 0.0
    %347 = vmatprep.subr.mxu0 0.0
    %348 = vmatpush1.msra.mxu0 0.0
    %349 = vmatprep.subr.mxu0 0.0
    %350 = vmatpush1.msra.mxu0 0.0
    %351 = vmatprep.subr.mxu0 0.0
    %352 = vmatpush1.msra.mxu0 0.0
    %353 = vmatprep.subr.mxu0 0.0
    %354 = vmatpush1.msra.mxu0 0.0
    %355 = vmatprep.subr.mxu0 0.0
    %356 = vmatpush1.msra.mxu0 0.0
    %357 = vmatprep.subr.mxu0 0.0
    %358 = vmatpush1.msra.mxu0 0.0
    %359 = vmatprep.subr.mxu0 0.0
    %360 = vmatpush1.msra.mxu0 0.0
    %361 = vmatprep.subr.mxu0 0.0
    %362 = vmatpush1.msra.mxu0 0.0
    %363 = vmatprep.subr.mxu0 0.0
    %364 = vmatpush1.msra.mxu0 0.0
    %365 = vmatprep.subr.mxu0 0.0
    %366 = vmatpush1.msra.mxu0 0.0
    %367 = vmatprep.mubr.f32.mxu0 0.0
    %368 = vmatmul.mubr.f32.gmra.mrb[0].mxu0 %v301
    %v369 = vpop.f32.mrb[0].mxu0
    %v370 = vadd.f32 %v299, %v369
    %v371 = vpop.f32.mrb[0].mxu0
    %372 = vdwg.mxu0
    %373 = vmatprep.subr.mxu0 0.0
    %374 = vmatpush1.xpose.msra.mxu0 %v284
    %375 = vmatprep.subr.mxu0 0.0
    %376 = vmatpush1.xpose.msra.mxu0 %v289
    %377 = vmatprep.subr.mxu0 0.0
    %378 = vmatpush1.xpose.msra.mxu0 0.0
    %379 = vmatprep.subr.mxu0 0.0
    %380 = vmatpush1.xpose.msra.mxu0 0.0
    %381 = vmatprep.subr.mxu0 0.0
    %382 = vmatpush1.xpose.msra.mxu0 0.0
    %383 = vmatprep.subr.mxu0 0.0
    %384 = vmatpush1.xpose.msra.mxu0 0.0
    %385 = vmatprep.subr.mxu0 0.0
    %386 = vmatpush1.xpose.msra.mxu0 0.0
    %387 = vmatprep.subr.mxu0 0.0
    %388 = vmatpush1.xpose.msra.mxu0 0.0
    %389 = vmatprep.subr.mxu0 0.0
    %390 = vmatpush1.xpose.msra.mxu0 0.0
    %391 = vmatprep.subr.mxu0 0.0
    %392 = vmatpush1.xpose.msra.mxu0 0.0
    %393 = vmatprep.subr.mxu0 0.0
    %394 = vmatpush1.xpose.msra.mxu0 0.0
    %395 = vmatprep.subr.mxu0 0.0
    %396 = vmatpush1.xpose.msra.mxu0 0.0
    %397 = vmatprep.subr.mxu0 0.0
    %398 = vmatpush1.xpose.msra.mxu0 0.0
    %399 = vmatprep.subr.mxu0 0.0
    %400 = vmatpush1.xpose.msra.mxu0 0.0
    %401 = vmatprep.subr.mxu0 0.0
    %402 = vmatpush1.xpose.msra.mxu0 0.0
    %403 = vmatprep.subr.mxu0 0.0
    %404 = vmatpush1.xpose.msra.mxu0 0.0
    %405 = vmatprep.subr.mxu0 0.0
    %406 = vmatpush1.xpose.msra.mxu0 0.0
    %407 = vmatprep.subr.mxu0 0.0
    %408 = vmatpush1.xpose.msra.mxu0 0.0
    %409 = vmatprep.subr.mxu0 0.0
    %410 = vmatpush1.xpose.msra.mxu0 0.0
    %411 = vmatprep.subr.mxu0 0.0
    %412 = vmatpush1.xpose.msra.mxu0 0.0
    %413 = vmatprep.subr.mxu0 0.0
    %414 = vmatpush1.xpose.msra.mxu0 0.0
    %415 = vmatprep.subr.mxu0 0.0
    %416 = vmatpush1.xpose.msra.mxu0 0.0
    %417 = vmatprep.subr.mxu0 0.0
    %418 = vmatpush1.xpose.msra.mxu0 0.0
    %419 = vmatprep.subr.mxu0 0.0
    %420 = vmatpush1.xpose.msra.mxu0 0.0
    %421 = vmatprep.subr.mxu0 0.0
    %422 = vmatpush1.xpose.msra.mxu0 0.0
    %423 = vmatprep.subr.mxu0 0.0
    %424 = vmatpush1.xpose.msra.mxu0 0.0
    %425 = vmatprep.subr.mxu0 0.0
    %426 = vmatpush1.xpose.msra.mxu0 0.0
    %427 = vmatprep.subr.mxu0 0.0
    %428 = vmatpush1.xpose.msra.mxu0 0.0
    %429 = vmatprep.subr.mxu0 0.0
    %430 = vmatpush1.xpose.msra.mxu0 0.0
    %431 = vmatprep.subr.mxu0 0.0
    %432 = vmatpush1.xpose.msra.mxu0 0.0
    %433 = vmatprep.subr.mxu0 0.0
    %434 = vmatpush1.xpose.msra.mxu0 0.0
    %435 = vmatprep.subr.mxu0 0.0
    %436 = vmatpush1.xpose.msra.mxu0 0.0
    %437 = vmatprep.mubr.f32.mxu0 0.0
    %438 = vmatmul.mubr.f32.gmra.mrb[0].mxu0 %v370
    %v439 = vpop.f32.mrb[0].mxu0
    %v440 = vadd.f32 0.0, %v439
    %v441 = vpop.f32.mrb[0].mxu0
    %442 = vdwg.mxu0
    %v443 = vmul.f32 %v440, 0.17677669
    %v444 = vld [vmem:[%s2] sm:$0x3]
    %v445 = vadd.f32 %v443, %v444
    %vm446 = vcmask 123904
    %v447 = vsel %vm446, %v445, -inf
    %448 = vmax.xlane.f32.xlu0 %v447
    %v449 = vpop.xlane.xlu0 %448
    %v450 = vsub.f32 %v445, %v449
    %v451 = vmul.f32 %v450, 1.442695
    %v452 = vpow.pop %v451
    %v453 = vsel %vm446, %v452, 0.0
    %454 = vadd.xlane.f32.xlu0 %v453
    %v455 = vpop.xlane.xlu0 %454
    %v456 = vrcp.pop %v455
    %v457 = vmul.f32 %v452, %v456
    %vm458 = vcmask 130048
    %v460 = vsel %vm458, %v457, 0
    %462 = vmatprep.subr.mxu0 0.0
    %463 = vmatpush1.msra.mxu0 %v284
    %464 = vmatprep.subr.mxu0 0.0
    %465 = vmatpush1.msra.mxu0 %v289
    %466 = vmatprep.subr.mxu0 0.0
    %467 = vmatpush1.msra.mxu0 0.0
    %468 = vmatprep.subr.mxu0 0.0
    %469 = vmatpush1.msra.mxu0 0.0
    %470 = vmatprep.subr.mxu0 0.0
    %471 = vmatpush1.msra.mxu0 0.0
    %472 = vmatprep.subr.mxu0 0.0
    %473 = vmatpush1.msra.mxu0 0.0
    %474 = vmatprep.subr.mxu0 0.0
    %475 = vmatpush1.msra.mxu0 0.0
    %476 = vmatprep.subr.mxu0 0.0
    %477 = vmatpush1.msra.mxu0 0.0
    %478 = vmatprep.subr.mxu0 0.0
    %479 = vmatpush1.msra.mxu0 0.0
    %480 = vmatprep.subr.mxu0 0.0
    %481 = vmatpush1.msra.mxu0 0.0
    %482 = vmatprep.subr.mxu0 0.0
    %483 = vmatpush1.msra.mxu0 0.0
    %484 = vmatprep.subr.mxu0 0.0
    %485 = vmatpush1.msra.mxu0 0.0
    %486 = vmatprep.subr.mxu0 0.0
    %487 = vmatpush1.msra.mxu0 0.0
    %488 = vmatprep.subr.mxu0 0.0
    %489 = vmatpush1.msra.mxu0 0.0
    %490 = vmatprep.subr.mxu0 0.0
    %491 = vmatpush1.msra.mxu0 0.0
    %492 = vmatprep.subr.mxu0 0.0
    %493 = vmatpush1.msra.mxu0 0.0
    %494 = vmatprep.subr.mxu0 0.0
    %495 = vmatpush1.msra.mxu0 0.0
    %496 = vmatprep.subr.mxu0 0.0
    %497 = vmatpush1.msra.mxu0 0.0
    %498 = vmatprep.subr.mxu0 0.0
    %499 = vmatpush1.msra.mxu0 0.0
    %500 = vmatprep.subr.mxu0 0.0
    %501 = vmatpush1.msra.mxu0 0.0
    %502 = vmatprep.subr.mxu0 0.0
    %503 = vmatpush1.msra.mxu0 0.0
    %504 = vmatprep.subr.mxu0 0.0
    %505 = vmatpush1.msra.mxu0 0.0
    %506 = vmatprep.subr.mxu0 0.0
    %507 = vmatpush1.msra.mxu0 0.0
    %508 = vmatprep.subr.mxu0 0.0
    %509 = vmatpush1.msra.mxu0 0.0
    %510 = vmatprep.subr.mxu0 0.0
    %511 = vmatpush1.msra.mxu0 0.0
    %512 = vmatprep.subr.mxu0 0.0
    %513 = vmatpush1.msra.mxu0 0.0
    %514 = vmatprep.subr.mxu0 0.0
    %515 = vmatpush1.msra.mxu0 0.0
    %516 = vmatprep.subr.mxu0 0.0
    %517 = vmatpush1.msra.mxu0 0.0
    %518 = vmatprep.subr.mxu0 0.0
    %519 = vmatpush1.msra.mxu0 0.0
    %520 = vmatprep.subr.mxu0 0.0
    %521 = vmatpush1.msra.mxu0 0.0
    %522 = vmatprep.subr.mxu0 0.0
    %523 = vmatpush1.msra.mxu0 0.0
    %524 = vmatprep.subr.mxu0 0.0
    %525 = vmatpush1.msra.mxu0 0.0
    %526 = vmatprep.mubr.f32.mxu0 0.0
    %527 = vmatmul.mubr.f32.gmra.mrb[0].mxu0 %v460
    %v528 = vpop.f32.mrb[0].mxu0
    %v529 = vadd.f32 0.0, %v528
    %v530 = vpop.f32.mrb[0].mxu0
    %531 = vdwg.mxu0
    %v532 = vld [vmem:[%s4 + $0x40] sm:$0xff]
    %v533 = vld [vmem:[%s4 + $0x48] sm:$0xff]
    %v534 = vld [vmem:[%s4 + $0x50] sm:$0xff]
    %v535 = vld [vmem:[%s4 + $0x58] sm:$0xff]
    %v536 = vlaneseq
    %v537 = vshrl.u32 %v536, 7
    %v538 = vsub.s32 2, %v537
    %v539 = vrot.slane %v200, %v538
    %v541 = vsel %vm210, %v529, 0
    %543 = vmatprep.subr.mxu0 0.0
    %544 = vmatpush1.msra.mxu0 %v532
    %545 = vmatprep.subr.mxu0 0.0
    %546 = vmatpush1.msra.mxu0 %v533
    %547 = vmatprep.subr.mxu0 0.0
    %548 = vmatpush1.msra.mxu0 %v534
    %549 = vmatprep.subr.mxu0 0.0
    %550 = vmatpush1.msra.mxu0 %v535
    %551 = vmatprep.subr.mxu0 0.0
    %552 = vmatpush1.msra.mxu0 0.0
    %553 = vmatprep.subr.mxu0 0.0
    %554 = vmatpush1.msra.mxu0 0.0
    %555 = vmatprep.subr.mxu0 0.0
    %556 = vmatpush1.msra.mxu0 0.0
    %557 = vmatprep.subr.mxu0 0.0
    %558 = vmatpush1.msra.mxu0 0.0
    %559 = vmatprep.subr.mxu0 0.0
    %560 = vmatpush1.msra.mxu0 0.0
    %561 = vmatprep.subr.mxu0 0.0
    %562 = vmatpush1.msra.mxu0 0.0
    %563 = vmatprep.subr.mxu0 0.0
    %564 = vmatpush1.msra.mxu0 0.0
    %565 = vmatprep.subr.mxu0 0.0
    %566 = vmatpush1.msra.mxu0 0.0
    %567 = vmatprep.subr.mxu0 0.0
    %568 = vmatpush1.msra.mxu0 0.0
    %569 = vmatprep.subr.mxu0 0.0
    %570 = vmatpush1.msra.mxu0 0.0
    %571 = vmatprep.subr.mxu0 0.0
    %572 = vmatpush1.msra.mxu0 0.0
    %573 = vmatprep.subr.mxu0 0.0
    %574 = vmatpush1.msra.mxu0 0.0
    %575 = vmatprep.subr.mxu0 0.0
    %576 = vmatpush1.msra.mxu0 0.0
    %577 = vmatprep.subr.mxu0 0.0
    %578 = vmatpush1.msra.mxu0 0.0
    %579 = vmatprep.subr.mxu0 0.0
    %580 = vmatpush1.msra.mxu0 0.0
    %581 = vmatprep.subr.mxu0 0.0
    %582 = vmatpush1.msra.mxu0 0.0
    %583 = vmatprep.subr.mxu0 0.0
    %584 = vmatpush1.msra.mxu0 0.0
    %585 = vmatprep.subr.mxu0 0.0
    %586 = vmatpush1.msra.mxu0 0.0
    %587 = vmatprep.subr.mxu0 0.0
    %588 = vmatpush1.msra.mxu0 0.0
    %589 = vmatprep.subr.mxu0 0.0
    %590 = vmatpush1.msra.mxu0 0.0
    %591 = vmatprep.subr.mxu0 0.0
    %592 = vmatpush1.msra.mxu0 0.0
    %593 = vmatprep.subr.mxu0 0.0
    %594 = vmatpush1.msra.mxu0 0.0
    %595 = vmatprep.subr.mxu0 0.0
    %596 = vmatpush1.msra.mxu0 0.0
    %597 = vmatprep.subr.mxu0 0.0
    %598 = vmatpush1.msra.mxu0 0.0
    %599 = vmatprep.subr.mxu0 0.0
    %600 = vmatpush1.msra.mxu0 0.0
    %601 = vmatprep.subr.mxu0 0.0
    %602 = vmatpush1.msra.mxu0 0.0
    %603 = vmatprep.subr.mxu0 0.0
    %604 = vmatpush1.msra.mxu0 0.0
    %605 = vmatprep.subr.mxu0 0.0
    %606 = vmatpush1.msra.mxu0 0.0
    %607 = vmatprep.mubr.f32.mxu0 0.0
    %608 = vmatmul.mubr.f32.gmra.mrb[0].mxu0 %v541
    %v609 = vpop.f32.mrb[0].mxu0
    %v610 = vadd.f32 %v539, %v609
    %v611 = vpop.f32.mrb[0].mxu0
    %612 = vdwg.mxu0
    %v613 = vadd.f32 %v197, %v610
    %vm614 = vcmask 254976
    %v615 = vsel %vm614, %v613, 0.0
    %616 = vadd.xlane.f32.xlu0 %v615
    %v617 = vpop.xlane.xlu0 %616
    %v618 = vrcp.pop 32.0
    %v619 = vmul.f32 %v617, %v618
    %v620 = vsub.f32 %v613, %v619
    %v621 = vmul.f32 %v620, %v620
    %v622 = vsel %vm614, %v621, 0.0
    %623 = vadd.xlane.f32.xlu0 %v622
    %v624 = vpop.xlane.xlu0 %623
    %v625 = vmul.f32 %v624, %v618
    %v626 = vadd.f32 %v625, 1e-12
    %v627 = vrsqrt.pop %v626
    %v628 = vmul.f32 %v620, %v627
    %v629 = vlaneseq
    %v630 = vshrl.u32 %v629, 7
    %v631 = vsub.s32 3, %v630
    %v632 = vrot.slane %v200, %v631
    %v633 = vmul.f32 %v628, %v632
    %v634 = vlaneseq
    %v635 = vshrl.u32 %v634, 7
    %v636 = vsub.s32 4, %v635
    %v637 = vrot.slane %v200, %v636
    %v638 = vadd.f32 %v633, %v637
    %v639 = vld [vmem:[%s4 + $0x60] sm:$0xff]
    %v640 = vld [vmem:[%s4 + $0x68] sm:$0xff]
    %v641 = vld [vmem:[%s4 + $0x70] sm:$0xff]
    %v642 = vld [vmem:[%s4 + $0x78] sm:$0xff]
    %v643 = vlaneseq
    %v644 = vshrl.u32 %v643, 7
    %v645 = vsub.s32 5, %v644
    %v646 = vrot.slane %v200, %v645
    %v648 = vsel %vm210, %v638, 0
    %650 = vmatprep.subr.mxu0 0.0
    %651 = vmatpush1.msra.mxu0 %v639
    %652 = vmatprep.subr.mxu0 0.0
    %653 = vmatpush1.msra.mxu0 %v640
    %654 = vmatprep.subr.mxu0 0.0
    %655 = vmatpush1.msra.mxu0 %v641
    %656 = vmatprep.subr.mxu0 0.0
    %657 = vmatpush1.msra.mxu0 %v642
    %658 = vmatprep.subr.mxu0 0.0
    %659 = vmatpush1.msra.mxu0 0.0
    %660 = vmatprep.subr.mxu0 0.0
    %661 = vmatpush1.msra.mxu0 0.0
    %662 = vmatprep.subr.mxu0 0.0
    %663 = vmatpush1.msra.mxu0 0.0
    %664 = vmatprep.subr.mxu0 0.0
    %665 = vmatpush1.msra.mxu0 0.0
    %666 = vmatprep.subr.mxu0 0.0
    %667 = vmatpush1.msra.mxu0 0.0
    %668 = vmatprep.subr.mxu0 0.0
    %669 = vmatpush1.msra.mxu0 0.0
    %670 = vmatprep.subr.mxu0 0.0
    %671 = vmatpush1.msra.mxu0 0.0
    %672 = vmatprep.subr.mxu0 0.0
    %673 = vmatpush1.msra.mxu0 0.0
    %674 = vmatprep.subr.mxu0 0.0
    %675 = vmatpush1.msra.mxu0 0.0
    %676 = vmatprep.subr.mxu0 0.0
    %677 = vmatpush1.msra.mxu0 0.0
    %678 = vmatprep.subr.mxu0 0.0
    %679 = vmatpush1.msra.mxu0 0.0
    %680 = vmatprep.subr.mxu0 0.0
    %681 = vmatpush1.msra.mxu0 0.0
    %682 = vmatprep.subr.mxu0 0.0
    %683 = vmatpush1.msra.mxu0 0.0
    %684 = vmatprep.subr.mxu0 0.0
    %685 = vmatpush1.msra.mxu0 0.0
    %686 = vmatprep.subr.mxu0 0.0
    %687 = vmatpush1.msra.mxu0 0.0
    %688 = vmatprep.subr.mxu0 0.0
    %689 = vmatpush1.msra.mxu0 0.0
    %690 = vmatprep.subr.mxu0 0.0
    %691 = vmatpush1.msra.mxu0 0.0
    %692 = vmatprep.subr.mxu0 0.0
    %693 = vmatpush1.msra.mxu0 0.0
    %694 = vmatprep.subr.mxu0 0.0
    %695 = vmatpush1.msra.mxu0 0.0
    %696 = vmatprep.subr.mxu0 0.0
    %697 = vmatpush1.msra.mxu0 0.0
    %698 = vmatprep.subr.mxu0 0.0
    %699 = vmatpush1.msra.mxu0 0.0
    %700 = vmatprep.subr.mxu0 0.0
    %701 = vmatpush1.msra.mxu0 0.0
    %702 = vmatprep.subr.mxu0 0.0
    %703 = vmatpush1.msra.mxu0 0.0
    %704 = vmatprep.subr.mxu0 0.0
    %705 = vmatpush1.msra.mxu0 0.0
    %706 = vmatprep.subr.mxu0 0.0
    %707 = vmatpush1.msra.mxu0 0.0
    %708 = vmatprep.subr.mxu0 0.0
    %709 = vmatpush1.msra.mxu0 0.0
    %710 = vmatprep.subr.mxu0 0.0
    %711 = vmatpush1.msra.mxu0 0.0
    %712 = vmatprep.subr.mxu0 0.0
    %713 = vmatpush1.msra.mxu0 0.0
    %714 = vmatprep.mubr.f32.mxu0 0.0
    %715 = vmatmul.mubr.f32.gmra.mrb[0].mxu0 %v648
    %v716 = vpop.f32.mrb[0].mxu0
    %v717 = vadd.f32 %v646, %v716
    %v718 = vpop.f32.mrb[0].mxu0
    %719 = vdwg.mxu0
    %v720 = vmul.f32 %v717, 0.5
    %v721 = vmul.f32 %v717, 0.044715
    %v722 = vmul.f32 %v721, %v717
    %v723 = vmul.f32 %v722, %v717
    %v724 = vadd.f32 %v717, %v723
    %v725 = vmul.f32 %v724, 0.7978846
    %v726 = vtanh.pop %v725
    %v727 = vadd.f32 %v726, 1.0
    %v728 = vmul.f32 %v720, %v727
    %v729 = vld [vmem:[%s4 + $0x80] sm:$0xff]
    %v730 = vld [vmem:[%s4 + $0x88] sm:$0xff]
    %v731 = vld [vmem:[%s4 + $0x90] sm:$0xff]
    %v732 = vld [vmem:[%s4 + $0x98] sm:$0xff]
    %v733 = vld [vmem:[%s4 + $0xa0] sm:$0xff]
    %v734 = vld [vmem:[%s4 + $0xa8] sm:$0xff]
    %v735 = vld [vmem:[%s4 + $0xb0] sm:$0xff]
    %v736 = vld [vmem:[%s4 + $0xb8] sm:$0xff]
    %v737 = vld [vmem:[%s4 + $0xc0] sm:$0xff]
    %v738 = vld [vmem:[%s4 + $0xc8] sm:$0xff]
    %v739 = vld [vmem:[%s4 + $0xd0] sm:$0xff]
    %v740 = vld [vmem:[%s4 + $0xd8] sm:$0xff]
    %v741 = vld [vmem:[%s4 + $0xe0] sm:$0xff]
    %v742 = vld [vmem:[%s4 + $0xe8] sm:$0xff]
    %v743 = vld [vmem:[%s4 + $0xf0] sm:$0xff]
    %v744 = vld [vmem:[%s4 + $0xf8] sm:$0xff]
    %v745 = vlaneseq
    %v746 = vshrl.u32 %v745, 7
    %v747 = vsub.s32 6, %v746
    %v748 = vrot.slane %v200, %v747
    %749 = vmatprep.subr.mxu0 0.0
    %750 = vmatpush1.msra.mxu0 %v729
    %751 = vmatprep.subr.mxu0 0.0
    %752 = vmatpush1.msra.mxu0 %v730
    %753 = vmatprep.subr.mxu0 0.0
    %754 = vmatpush1.msra.mxu0 %v731
    %755 = vmatprep.subr.mxu0 0.0
    %756 = vmatpush1.msra.mxu0 %v732
    %757 = vmatprep.subr.mxu0 0.0
    %758 = vmatpush1.msra.mxu0 %v733
    %759 = vmatprep.subr.mxu0 0.0
    %760 = vmatpush1.msra.mxu0 %v734
    %761 = vmatprep.subr.mxu0 0.0
    %762 = vmatpush1.msra.mxu0 %v735
    %763 = vmatprep.subr.mxu0 0.0
    %764 = vmatpush1.msra.mxu0 %v736
    %765 = vmatprep.subr.mxu0 0.0
    %766 = vmatpush1.msra.mxu0 %v737
    %767 = vmatprep.subr.mxu0 0.0
    %768 = vmatpush1.msra.mxu0 %v738
    %769 = vmatprep.subr.mxu0 0.0
    %770 = vmatpush1.msra.mxu0 %v739
    %771 = vmatprep.subr.mxu0 0.0
    %772 = vmatpush1.msra.mxu0 %v740
    %773 = vmatprep.subr.mxu0 0.0
    %774 = vmatpush1.msra.mxu0 %v741
    %775 = vmatprep.subr.mxu0 0.0
    %776 = vmatpush1.msra.mxu0 %v742
    %777 = vmatprep.subr.mxu0 0.0
    %778 = vmatpush1.msra.mxu0 %v743
    %779 = vmatprep.subr.mxu0 0.0
    %780 = vmatpush1.msra.mxu0 %v744
    %781 = vmatprep.subr.mxu0 0.0
    %782 = vmatpush1.msra.mxu0 0.0
    %783 = vmatprep.subr.mxu0 0.0
    %784 = vmatpush1.msra.mxu0 0.0
    %785 = vmatprep.subr.mxu0 0.0
    %786 = vmatpush1.msra.mxu0 0.0
    %787 = vmatprep.subr.mxu0 0.0
    %788 = vmatpush1.msra.mxu0 0.0
    %789 = vmatprep.subr.mxu0 0.0
    %790 = vmatpush1.msra.mxu0 0.0
    %791 = vmatprep.subr.mxu0 0.0
    %792 = vmatpush1.msra.mxu0 0.0
    %793 = vmatprep.subr.mxu0 0.0
    %794 = vmatpush1.msra.mxu0 0.0
    %795 = vmatprep.subr.mxu0 0.0
    %796 = vmatpush1.msra.mxu0 0.0
    %797 = vmatprep.subr.mxu0 0.0
    %798 = vmatpush1.msra.mxu0 0.0
    %799 = vmatprep.subr.mxu0 0.0
    %800 = vmatpush1.msra.mxu0 0.0
    %801 = vmatprep.subr.mxu0 0.0
    %802 = vmatpush1.msra.mxu0 0.0
    %803 = vmatprep.subr.mxu0 0.0
    %804 = vmatpush1.msra.mxu0 0.0
    %805 = vmatprep.subr.mxu0 0.0
    %806 = vmatpush1.msra.mxu0 0.0
    %807 = vmatprep.subr.mxu0 0.0
    %808 = vmatpush1.msra.mxu0 0.0
    %809 = vmatprep.subr.mxu0 0.0
    %810 = vmatpush1.msra.mxu0 0.0
    %811 = vmatprep.subr.mxu0 0.0
    %812 = vmatpush1.msra.mxu0 0.0
    %813 = vmatprep.mubr.f32.mxu0 0.0
    %814 = vmatmul.mubr.f32.gmra.mrb[0].mxu0 %v728
    %v815 = vpop.f32.mrb[0].mxu0
    %v816 = vadd.f32 %v748, %v815
    %v817 = vpop.f32.mrb[0].mxu0
    %818 = vdwg.mxu0
    %v819 = vadd.f32 %v638, %v816
    %v820 = vsel %vm614, %v819, 0.0
    %821 = vadd.xlane.f32.xlu0 %v820
    %v822 = vpop.xlane.xlu0 %821
    %v823 = vmul.f32 %v822, %v618
    %v824 = vsub.f32 %v819, %v823
    %v825 = vmul.f32 %v824, %v824
    %v826 = vsel %vm614, %v825, 0.0
    %827 = vadd.xlane.f32.xlu0 %v826
    %v828 = vpop.xlane.xlu0 %827
    %v829 = vmul.f32 %v828, %v618
    %v830 = vadd.f32 %v829, 1e-12
    %v831 = vrsqrt.pop %v830
    %v832 = vmul.f32 %v824, %v831
    %v833 = vlaneseq
    %v834 = vshrl.u32 %v833, 7
    %v835 = vsub.s32 7, %v834
    %v836 = vrot.slane %v200, %v835
    %v837 = vmul.f32 %v832, %v836
    %v838 = vlaneseq
    %v839 = vshrl.u32 %v838, 7
    %v840 = vsub.s32 0, %v839
    %v841 = vrot.slane %v201, %v840
    %v842 = vadd.f32 %v837, %v841
    %s843 = smul.u32 4, 128
    %s844 = smul.u32 %s843, 1
    %s845 = sshll.u32 %s844, 4
    %846 = dma.done [#allocation3], %s845
    %v847 = vld [vmem:[%s6 + $0xa0] sm:$0x7]
    %v848 = vld [vmem:[#allocation2] sm:$0xff]
    %v849 = vld [vmem:[#allocation2 + $0x8] sm:$0xff]
    %v850 = vld [vmem:[#allocation2 + $0x10] sm:$0xff]
    %v851 = vld [vmem:[#allocation2 + $0x18] sm:$0xff]
    %v852 = vld [vmem:[#allocation2 + $0x20] sm:$0xff]
    %v853 = vld [vmem:[#allocation2 + $0x28] sm:$0xff]
    %v854 = vld [vmem:[#allocation2 + $0x30] sm:$0xff]
    %v855 = vld [vmem:[#allocation2 + $0x38] sm:$0xff]
    %v856 = vld [vmem:[#allocation2 + $0x40] sm:$0xff]
    %v857 = vld [vmem:[#allocation2 + $0x48] sm:$0xff]
    %v858 = vld [vmem:[#allocation2 + $0x50] sm:$0xff]
    %v859 = vld [vmem:[#allocation2 + $0x58] sm:$0xff]
    %v860 = vld [vmem:[#allocation2 + $0x60] sm:$0xff]
    %v861 = vld [vmem:[#allocation2 + $0x68] sm:$0xff]
    %v862 = vld [vmem:[#allocation2 + $0x70] sm:$0xff]
    %v863 = vld [vmem:[#allocation2 + $0x78] sm:$0xff]
    %v864 = vld [vmem:[#allocation2 + $0x80] sm:$0xff]
    %v865 = vld [vmem:[#allocation2 + $0x88] sm:$0xff]
    %v866 = vld [vmem:[#allocation2 + $0x90] sm:$0xff]
    %v867 = vld [vmem:[#allocation2 + $0x98] sm:$0xff]
    %v868 = vld [vmem:[#allocation2 + $0xa0] sm:$0xff]
    %v869 = vld [vmem:[#allocation2 + $0xa8] sm:$0xff]
    %v870 = vld [vmem:[#allocation2 + $0xb0] sm:$0xff]
    %v871 = vld [vmem:[#allocation2 + $0xb8] sm:$0xff]
    %v872 = vld [vmem:[#allocation2 + $0xc0] sm:$0xff]
    %v873 = vld [vmem:[#allocation2 + $0xc8] sm:$0xff]
    %v874 = vld [vmem:[#allocation2 + $0xd0] sm:$0xff]
    %v875 = vld [vmem:[#allocation2 + $0xd8] sm:$0xff]
    %v876 = vld [vmem:[#allocation2 + $0xe0] sm:$0xff]
    %v877 = vld [vmem:[#allocation2 + $0xe8] sm:$0xff]
    %v878 = vld [vmem:[#allocation2 + $0xf0] sm:$0xff]
    %v879 = vld [vmem:[#allocation2 + $0xf8] sm:$0xff]
    %v880 = vld [vmem:[#allocation2 + $0x100] sm:$0xff]
    %v881 = vld [vmem:[#allocation2 + $0x108] sm:$0xff]
    %v882 = vld [vmem:[#allocation2 + $0x110] sm:$0xff]
    %v883 = vld [vmem:[#allocation2 + $0x118] sm:$0xff]
    %v884 = vld [vmem:[#allocation2 + $0x120] sm:$0xff]
    %v885 = vld [vmem:[#allocation2 + $0x128] sm:$0xff]
    %v886 = vld [vmem:[#allocation2 + $0x130] sm:$0xff]
    %v887 = vld [vmem:[#allocation2 + $0x138] sm:$0xff]
    %v888 = vld [vmem:[#allocation2 + $0x140] sm:$0xff]
    %v889 = vld [vmem:[#allocation2 + $0x148] sm:$0xff]
    %v890 = vld [vmem:[#allocation2 + $0x150] sm:$0xff]
    %v891 = vld [vmem:[#allocation2 + $0x158] sm:$0xff]
    %v892 = vld [vmem:[#allocation2 + $0x160] sm:$0xff]
    %v893 = vld [vmem:[#allocation2 + $0x168] sm:$0xff]
    %v894 = vld [vmem:[#allocation2 + $0x170] sm:$0xff]
    %v895 = vld [vmem:[#allocation2 + $0x178] sm:$0xff]
    %v896 = vld [vmem:[#allocation2 + $0x180] sm:$0xff]
    %v897 = vld [vmem:[#allocation2 + $0x188] sm:$0xff]
    %v898 = vld [vmem:[#allocation2 + $0x190] sm:$0xff]
    %v899 = vld [vmem:[#allocation2 + $0x198] sm:$0xff]
    %v900 = vld [vmem:[#allocation2 + $0x1a0] sm:$0xff]
    %v901 = vld [vmem:[#allocation2 + $0x1a8] sm:$0xff]
    %v902 = vld [vmem:[#allocation2 + $0x1b0] sm:$0xff]
    %v903 = vld [vmem:[#allocation2 + $0x1b8] sm:$0xff]
    %v904 = vld [vmem:[#allocation2 + $0x1c0] sm:$0xff]
    %v905 = vld [vmem:[#allocation2 + $0x1c8] sm:$0xff]
    %v906 = vld [vmem:[#allocation2 + $0x1d0] sm:$0xff]
    %v907 = vld [vmem:[#allocation2 + $0x1d8] sm:$0xff]
    %v908 = vld [vmem:[#allocation2 + $0x1e0] sm:$0xff]
    %v909 = vld [vmem:[#allocation2 + $0x1e8] sm:$0xff]
    %v910 = vld [vmem:[#allocation2 + $0x1f0] sm:$0xff]
    %v911 = vld [vmem:[#allocation2 + $0x1f8] sm:$0xff]
    %v912 = vld [vmem:[%s5] sm:$0xf]
    %v913 = vld [vmem:[%s5 + $0x4] sm:$0xf]
    %v914 = vld [vmem:[%s5 + $0x8] sm:$0xf]
    %v915 = vld [vmem:[%s5 + $0xc] sm:$0xf]
    %v916 = vld [vmem:[%s5 + $0x10] sm:$0x3]
    %v917 = vlaneseq
    %v918 = vshrl.u32 %v917, 7
    %v919 = vsub.s32 0, %v918
    %v920 = vrot.slane %v847, %v919
    %v926 = vunpack.c.l.b16 %v912
    %v927 = vunpack.c.l.b16 %v913
    %v928 = vunpack.c.l.b16 %v914
    %v929 = vunpack.c.l.b16 %v915
    %v930 = vunpack.c.l.b16 %v916
    %v931 = vpack.c.b16 %v927, %v926
    %v932 = vpack.c.b16 %v929, %v928
    %v933 = vpack.c.b16 %v930, %v930
    %vm936 = vcmask 293888
    %v938 = vsel %vm936, %v848, 0
    %v941 = vsel %vm936, %v849, 0
    %v944 = vsel %vm936, %v850, 0
    %v947 = vsel %vm936, %v851, 0
    %v950 = vsel %vm936, %v852, 0
    %v953 = vsel %vm936, %v853, 0
    %v956 = vsel %vm936, %v854, 0
    %v959 = vsel %vm936, %v855, 0
    %v962 = vsel %vm936, %v856, 0
    %v965 = vsel %vm936, %v857, 0
    %v968 = vsel %vm936, %v858, 0
    %v971 = vsel %vm936, %v859, 0
    %v974 = vsel %vm936, %v860, 0
    %v977 = vsel %vm936, %v861, 0
    %v980 = vsel %vm936, %v862, 0
    %v983 = vsel %vm936, %v863, 0
    %v986 = vsel %vm936, %v864, 0
    %v989 = vsel %vm936, %v865, 0
    %v992 = vsel %vm936, %v866, 0
    %v995 = vsel %vm936, %v867, 0
    %v998 = vsel %vm936, %v868, 0
    %v1001 = vsel %vm936, %v869, 0
    %v1004 = vsel %vm936, %v870, 0
    %v1007 = vsel %vm936, %v871, 0
    %v1010 = vsel %vm936, %v872, 0
    %v1013 = vsel %vm936, %v873, 0
    %v1016 = vsel %vm936, %v874, 0
    %v1019 = vsel %vm936, %v875, 0
    %v1022 = vsel %vm936, %v876, 0
    %v1025 = vsel %vm936, %v877, 0
    %v1028 = vsel %vm936, %v878, 0
    %v1031 = vsel %vm936, %v879, 0
    %v1034 = vsel %vm936, %v880, 0
    %v1037 = vsel %vm936, %v881, 0
    %v1040 = vsel %vm936, %v882, 0
    %v1043 = vsel %vm936, %v883, 0
    %v1046 = vsel %vm936, %v884, 0
    %v1049 = vsel %vm936, %v885, 0
    %v1052 = vsel %vm936, %v886, 0
    %v1055 = vsel %vm936, %v887, 0
    %v1058 = vsel %vm936, %v888, 0
    %v1061 = vsel %vm936, %v889, 0
    %v1064 = vsel %vm936, %v890, 0
    %v1067 = vsel %vm936, %v891, 0
    %v1070 = vsel %vm936, %v892, 0
    %v1073 = vsel %vm936, %v893, 0
    %v1076 = vsel %vm936, %v894, 0
    %v1079 = vsel %vm936, %v895, 0
    %v1082 = vsel %vm936, %v896, 0
    %v1085 = vsel %vm936, %v897, 0
    %v1088 = vsel %vm936, %v898, 0
    %v1091 = vsel %vm936, %v899, 0
    %v1094 = vsel %vm936, %v900, 0
    %v1097 = vsel %vm936, %v901, 0
    %v1100 = vsel %vm936, %v902, 0
    %v1103 = vsel %vm936, %v903, 0
    %v1106 = vsel %vm936, %v904, 0
    %v1109 = vsel %vm936, %v905, 0
    %v1112 = vsel %vm936, %v906, 0
    %v1115 = vsel %vm936, %v907, 0
    %v1118 = vsel %vm936, %v908, 0
    %v1121 = vsel %vm936, %v909, 0
    %v1124 = vsel %vm936, %v910, 0
    %v1127 = vsel %vm936, %v911, 0
    %vm1129 = vcmask 1041408
    %v1131 = vsel %vm1129, %v933, 0
    %1133 = vmatprep.subr.bf16.mxu0 0
    %1134 = vmatpush1.bf16.msra.mxu0 %v931
    %1135 = vmatprep.subr.bf16.mxu0 0
    %1136 = vmatpush1.bf16.msra.mxu0 %v932
    %1137 = vmatprep.subr.bf16.mxu0 0
    %1138 = vmatpush1.bf16.msra.mxu0 %v1131
    %1139 = vmatprep.subr.bf16.mxu0 0
    %1140 = vmatpush1.bf16.msra.mxu0 0
    %1141 = vmatprep.subr.bf16.mxu0 0
    %1142 = vmatpush1.bf16.msra.mxu0 0
    %1143 = vmatprep.subr.bf16.mxu0 0
    %1144 = vmatpush1.bf16.msra.mxu0 0
    %1145 = vmatprep.subr.bf16.mxu0 0
    %1146 = vmatpush1.bf16.msra.mxu0 0
    %1147 = vmatprep.subr.bf16.mxu0 0
    %1148 = vmatpush1.bf16.msra.mxu0 0
    %1149 = vmatprep.subr.bf16.mxu0 0
    %1150 = vmatpush1.bf16.msra.mxu0 0
    %1151 = vmatprep.subr.bf16.mxu0 0
    %1152 = vmatpush1.bf16.msra.mxu0 0
    %1153 = vmatprep.subr.bf16.mxu0 0
    %1154 = vmatpush1.bf16.msra.mxu0 0
    %1155 = vmatprep.subr.bf16.mxu0 0
    %1156 = vmatpush1.bf16.msra.mxu0 0
    %1157 = vmatprep.subr.bf16.mxu0 0
    %1158 = vmatpush1.bf16.msra.mxu0 0
    %1159 = vmatprep.subr.bf16.mxu0 0
    %1160 = vmatpush1.bf16.msra.mxu0 0
    %1161 = vmatprep.subr.bf16.mxu0 0
    %1162 = vmatpush1.bf16.msra.mxu0 0
    %1163 = vmatprep.subr.bf16.mxu0 0
    %1164 = vmatpush1.bf16.msra.mxu0 0
    %1165 = vmatprep.mubr.bf16.mxu0 0
    %1166 = vmatmul.mubr.bf16.gmra.mrb[0].mxu0 %v938
    %v1167 = vpop.f32.mrb[0].mxu0
    %v1168 = vadd.f32 %v920, %v1167
    %v1169 = vpop.f32.mrb[0].mxu0
    %v1170 = vpop.f32.mrb[0].mxu0
    %v1171 = vadd.f32 %v920, %v1170
    %v1172 = vpop.f32.mrb[0].mxu0
    %1173 = vmatprep.mubr.bf16.mxu0 0
    %1174 = vmatmul.mubr.bf16.gmra.mrb[0].mxu0 %v941
    %v1175 = vpop.f32.mrb[0].mxu0
    %v1176 = vadd.f32 %v920, %v1175
    %v1177 = vpop.f32.mrb[0].mxu0
    %v1178 = vpop.f32.mrb[0].mxu0
    %v1179 = vadd.f32 %v920, %v1178
    %v1180 = vpop.f32.mrb[0].mxu0
    %1181 = vmatprep.mubr.bf16.mxu0 0
    %1182 = vmatmul.mubr.bf16.gmra.mrb[0].mxu0 %v944
    %v1183 = vpop.f32.mrb[0].mxu0
    %v1184 = vadd.f32 %v920, %v1183
    %v1185 = vpop.f32.mrb[0].mxu0
    %v1186 = vpop.f32.mrb[0].mxu0
    %v1187 = vadd.f32 %v920, %v1186
    %v1188 = vpop.f32.mrb[0].mxu0
    %1189 = vmatprep.mubr.bf16.mxu0 0
    %1190 = vmatmul.mubr.bf16.gmra.mrb[0].mxu0 %v947
    %v1191 = vpop.f32.mrb[0].mxu0
    %v1192 = vadd.f32 %v920, %v1191
    %v1193 = vpop.f32.mrb[0].mxu0
    %v1194 = vpop.f32.mrb[0].mxu0
    %v1195 = vadd.f32 %v920, %v1194
    %v1196 = vpop.f32.mrb[0].mxu0
    %1197 = vmatprep.mubr.bf16.mxu0 0
    %1198 = vmatmul.mubr.bf16.gmra.mrb[0].mxu0 %v950
    %v1199 = vpop.f32.mrb[0].mxu0
    %v1200 = vadd.f32 %v920, %v1199
    %v1201 = vpop.f32.mrb[0].mxu0
    %v1202 = vpop.f32.mrb[0].mxu0
    %v1203 = vadd.f32 %v920, %v1202
    %v1204 = vpop.f32.mrb[0].mxu0
    %1205 = vmatprep.mubr.bf16.mxu0 0
    %1206 = vmatmul.mubr.bf16.gmra.mrb[0].mxu0 %v953
    %v1207 = vpop.f32.mrb[0].mxu0
    %v1208 = vadd.f32 %v920, %v1207
    %v1209 = vpop.f32.mrb[0].mxu0
    %v1210 = vpop.f32.mrb[0].mxu0
    %v1211 = vadd.f32 %v920, %v1210
    %v1212 = vpop.f32.mrb[0].mxu0
    %1213 = vmatprep.mubr.bf16.mxu0 0
    %1214 = vmatmul.mubr.bf16.gmra.mrb[0].mxu0 %v956
    %v1215 = vpop.f32.mrb[0].mxu0
    %v1216 = vadd.f32 %v920, %v1215
    %v1217 = vpop.f32.mrb[0].mxu0
    %v1218 = vpop.f32.mrb[0].mxu0
    %v1219 = vadd.f32 %v920, %v1218
    %v1220 = vpop.f32.mrb[0].mxu0
    %1221 = vmatprep.mubr.bf16.mxu0 0
    %1222 = vmatmul.mubr.bf16.gmra.mrb[0].mxu0 %v959
    %v1223 = vpop.f32.mrb[0].mxu0
    %v1224 = vadd.f32 %v920, %v1223
    %v1225 = vpop.f32.mrb[0].mxu0
    %v1226 = vpop.f32.mrb[0].mxu0
    %v1227 = vadd.f32 %v920, %v1226
    %v1228 = vpop.f32.mrb[0].mxu0
    %1229 = vmatprep.mubr.bf16.mxu0 0
    %1230 = vmatmul.mubr.bf16.gmra.mrb[0].mxu0 %v962
    %v1231 = vpop.f32.mrb[0].mxu0
    %v1232 = vadd.f32 %v920, %v1231
    %v1233 = vpop.f32.mrb[0].mxu0
    %v1234 = vpop.f32.mrb[0].mxu0
    %v1235 = vadd.f32 %v920, %v1234
    %v1236 = vpop.f32.mrb[0].mxu0
    %1237 = vmatprep.mubr.bf16.mxu0 0
    %1238 = vmatmul.mubr.bf16.gmra.mrb[0].mxu0 %v965
    %v1239 = vpop.f32.mrb[0].mxu0
    %v1240 = vadd.f32 %v920, %v1239
    %v1241 = vpop.f32.mrb[0].mxu0
    %v1242 = vpop.f32.mrb[0].mxu0
    %v1243 = vadd.f32 %v920, %v1242
    %v1244 = vpop.f32.mrb[0].mxu0
    %1245 = vmatprep.mubr.bf16.mxu0 0
    %1246 = vmatmul.mubr.bf16.gmra.mrb[0].mxu0 %v968
    %v1247 = vpop.f32.mrb[0].mxu0
    %v1248 = vadd.f32 %v920, %v1247
    %v1249 = vpop.f32.mrb[0].mxu0
    %v1250 = vpop.f32.mrb[0].mxu0
    %v1251 = vadd.f32 %v920, %v1250
    %v1252 = vpop.f32.mrb[0].mxu0
    %1253 = vmatprep.mubr.bf16.mxu0 0
    %1254 = vmatmul.mubr.bf16.gmra.mrb[0].mxu0 %v971
    %v1255 = vpop.f32.mrb[0].mxu0
    %v1256 = vadd.f32 %v920, %v1255
    %v1257 = vpop.f32.mrb[0].mxu0
    %v1258 = vpop.f32.mrb[0].mxu0
    %v1259 = vadd.f32 %v920, %v1258
    %v1260 = vpop.f32.mrb[0].mxu0
    %1261 = vmatprep.mubr.bf16.mxu0 0
    %1262 = vmatmul.mubr.bf16.gmra.mrb[0].mxu0 %v974
    %v1263 = vpop.f32.mrb[0].mxu0
    %v1264 = vadd.f32 %v920, %v1263
    %v1265 = vpop.f32.mrb[0].mxu0
    %v1266 = vpop.f32.mrb[0].mxu0
    %v1267 = vadd.f32 %v920, %v1266
    %v1268 = vpop.f32.mrb[0].mxu0
    %1269 = vmatprep.mubr.bf16.mxu0 0
    %1270 = vmatmul.mubr.bf16.gmra.mrb[0].mxu0 %v977
    %v1271 = vpop.f32.mrb[0].mxu0
    %v1272 = vadd.f32 %v920, %v1271
    %v1273 = vpop.f32.mrb[0].mxu0
    %v1274 = vpop.f32.mrb[0].mxu0
    %v1275 = vadd.f32 %v920, %v1274
    %v1276 = vpop.f32.mrb[0].mxu0
    %1277 = vmatprep.mubr.bf16.mxu0 0
    %1278 = vmatmul.mubr.bf16.gmra.mrb[0].mxu0 %v980
    %v1279 = vpop.f32.mrb[0].mxu0
    %v1280 = vadd.f32 %v920, %v1279
    %v1281 = vpop.f32.mrb[0].mxu0
    %v1282 = vpop.f32.mrb[0].mxu0
    %v1283 = vadd.f32 %v920, %v1282
    %v1284 = vpop.f32.mrb[0].mxu0
    %1285 = vmatprep.mubr.bf16.mxu0 0
    %1286 = vmatmul.mubr.bf16.gmra.mrb[0].mxu0 %v983
    %v1287 = vpop.f32.mrb[0].mxu0
    %v1288 = vadd.f32 %v920, %v1287
    %v1289 = vpop.f32.mrb[0].mxu0
    %v1290 = vpop.f32.mrb[0].mxu0
    %v1291 = vadd.f32 %v920, %v1290
    %v1292 = vpop.f32.mrb[0].mxu0
    %1293 = vmatprep.mubr.bf16.mxu0 0
    %1294 = vmatmul.mubr.bf16.gmra.mrb[0].mxu0 %v986
    %v1295 = vpop.f32.mrb[0].mxu0
    %v1296 = vadd.f32 %v920, %v1295
    %v1297 = vpop.f32.mrb[0].mxu0
    %v1298 = vpop.f32.mrb[0].mxu0
    %v1299 = vadd.f32 %v920, %v1298
    %v1300 = vpop.f32.mrb[0].mxu0
    %1301 = vmatprep.mubr.bf16.mxu0 0
    %1302 = vmatmul.mubr.bf16.gmra.mrb[0].mxu0 %v989
    %v1303 = vpop.f32.mrb[0].mxu0
    %v1304 = vadd.f32 %v920, %v1303
    %v1305 = vpop.f32.mrb[0].mxu0
    %v1306 = vpop.f32.mrb[0].mxu0
    %v1307 = vadd.f32 %v920, %v1306
    %v1308 = vpop.f32.mrb[0].mxu0
    %1309 = vmatprep.mubr.bf16.mxu0 0
    %1310 = vmatmul.mubr.bf16.gmra.mrb[0].mxu0 %v992
    %v1311 = vpop.f32.mrb[0].mxu0
    %v1312 = vadd.f32 %v920, %v1311
    %v1313 = vpop.f32.mrb[0].mxu0
    %v1314 = vpop.f32.mrb[0].mxu0
    %v1315 = vadd.f32 %v920, %v1314
    %v1316 = vpop.f32.mrb[0].mxu0
    %1317 = vmatprep.mubr.bf16.mxu0 0
    %1318 = vmatmul.mubr.bf16.gmra.mrb[0].mxu0 %v995
    %v1319 = vpop.f32.mrb[0].mxu0
    %v1320 = vadd.f32 %v920, %v1319
    %v1321 = vpop.f32.mrb[0].mxu0
    %v1322 = vpop.f32.mrb[0].mxu0
    %v1323 = vadd.f32 %v920, %v1322
    %v1324 = vpop.f32.mrb[0].mxu0
    %1325 = vmatprep.mubr.bf16.mxu0 0
    %1326 = vmatmul.mubr.bf16.gmra.mrb[0].mxu0 %v998
    %v1327 = vpop.f32.mrb[0].mxu0
    %v1328 = vadd.f32 %v920, %v1327
    %v1329 = vpop.f32.mrb[0].mxu0
    %v1330 = vpop.f32.mrb[0].mxu0
    %v1331 = vadd.f32 %v920, %v1330
    %v1332 = vpop.f32.mrb[0].mxu0
    %1333 = vmatprep.mubr.bf16.mxu0 0
    %1334 = vmatmul.mubr.bf16.gmra.mrb[0].mxu0 %v1001
    %v1335 = vpop.f32.mrb[0].mxu0
    %v1336 = vadd.f32 %v920, %v1335
    %v1337 = vpop.f32.mrb[0].mxu0
    %v1338 = vpop.f32.mrb[0].mxu0
    %v1339 = vadd.f32 %v920, %v1338
    %v1340 = vpop.f32.mrb[0].mxu0
    %1341 = vmatprep.mubr.bf16.mxu0 0
    %1342 = vmatmul.mubr.bf16.gmra.mrb[0].mxu0 %v1004
    %v1343 = vpop.f32.mrb[0].mxu0
    %v1344 = vadd.f32 %v920, %v1343
    %v1345 = vpop.f32.mrb[0].mxu0
    %v1346 = vpop.f32.mrb[0].mxu0
    %v1347 = vadd.f32 %v920, %v1346
    %v1348 = vpop.f32.mrb[0].mxu0
    %1349 = vmatprep.mubr.bf16.mxu0 0
    %1350 = vmatmul.mubr.bf16.gmra.mrb[0].mxu0 %v1007
    %v1351 = vpop.f32.mrb[0].mxu0
    %v1352 = vadd.f32 %v920, %v1351
    %v1353 = vpop.f32.mrb[0].mxu0
    %v1354 = vpop.f32.mrb[0].mxu0
    %v1355 = vadd.f32 %v920, %v1354
    %v1356 = vpop.f32.mrb[0].mxu0
    %1357 = vmatprep.mubr.bf16.mxu0 0
    %1358 = vmatmul.mubr.bf16.gmra.mrb[0].mxu0 %v1010
    %v1359 = vpop.f32.mrb[0].mxu0
    %v1360 = vadd.f32 %v920, %v1359
    %v1361 = vpop.f32.mrb[0].mxu0
    %v1362 = vpop.f32.mrb[0].mxu0
    %v1363 = vadd.f32 %v920, %v1362
    %v1364 = vpop.f32.mrb[0].mxu0
    %1365 = vmatprep.mubr.bf16.mxu0 0
    %1366 = vmatmul.mubr.bf16.gmra.mrb[0].mxu0 %v1013
    %v1367 = vpop.f32.mrb[0].mxu0
    %v1368 = vadd.f32 %v920, %v1367
    %v1369 = vpop.f32.mrb[0].mxu0
    %v1370 = vpop.f32.mrb[0].mxu0
    %v1371 = vadd.f32 %v920, %v1370
    %v1372 = vpop.f32.mrb[0].mxu0
    %1373 = vmatprep.mubr.bf16.mxu0 0
    %1374 = vmatmul.mubr.bf16.gmra.mrb[0].mxu0 %v1016
    %v1375 = vpop.f32.mrb[0].mxu0
    %v1376 = vadd.f32 %v920, %v1375
    %v1377 = vpop.f32.mrb[0].mxu0
    %v1378 = vpop.f32.mrb[0].mxu0
    %v1379 = vadd.f32 %v920, %v1378
    %v1380 = vpop.f32.mrb[0].mxu0
    %1381 = vmatprep.mubr.bf16.mxu0 0
    %1382 = vmatmul.mubr.bf16.gmra.mrb[0].mxu0 %v1019
    %v1383 = vpop.f32.mrb[0].mxu0
    %v1384 = vadd.f32 %v920, %v1383
    %v1385 = vpop.f32.mrb[0].mxu0
    %v1386 = vpop.f32.mrb[0].mxu0
    %v1387 = vadd.f32 %v920, %v1386
    %v1388 = vpop.f32.mrb[0].mxu0
    %1389 = vmatprep.mubr.bf16.mxu0 0
    %1390 = vmatmul.mubr.bf16.gmra.mrb[0].mxu0 %v1022
    %v1391 = vpop.f32.mrb[0].mxu0
    %v1392 = vadd.f32 %v920, %v1391
    %v1393 = vpop.f32.mrb[0].mxu0
    %v1394 = vpop.f32.mrb[0].mxu0
    %v1395 = vadd.f32 %v920, %v1394
    %v1396 = vpop.f32.mrb[0].mxu0
    %1397 = vmatprep.mubr.bf16.mxu0 0
    %1398 = vmatmul.mubr.bf16.gmra.mrb[0].mxu0 %v1025
    %v1399 = vpop.f32.mrb[0].mxu0
    %v1400 = vadd.f32 %v920, %v1399
    %v1401 = vpop.f32.mrb[0].mxu0
    %v1402 = vpop.f32.mrb[0].mxu0
    %v1403 = vadd.f32 %v920, %v1402
    %v1404 = vpop.f32.mrb[0].mxu0
    %1405 = vmatprep.mubr.bf16.mxu0 0
    %1406 = vmatmul.mubr.bf16.gmra.mrb[0].mxu0 %v1028
    %v1407 = vpop.f32.mrb[0].mxu0
    %v1408 = vadd.f32 %v920, %v1407
    %v1409 = vpop.f32.mrb[0].mxu0
    %v1410 = vpop.f32.mrb[0].mxu0
    %v1411 = vadd.f32 %v920, %v1410
    %v1412 = vpop.f32.mrb[0].mxu0
    %1413 = vmatprep.mubr.bf16.mxu0 0
    %1414 = vmatmul.mubr.bf16.gmra.mrb[0].mxu0 %v1031
    %v1415 = vpop.f32.mrb[0].mxu0
    %v1416 = vadd.f32 %v920, %v1415
    %v1417 = vpop.f32.mrb[0].mxu0
    %v1418 = vpop.f32.mrb[0].mxu0
    %v1419 = vadd.f32 %v920, %v1418
    %v1420 = vpop.f32.mrb[0].mxu0
    %1421 = vmatprep.mubr.bf16.mxu0 0
    %1422 = vmatmul.mubr.bf16.gmra.mrb[0].mxu0 %v1034
    %v1423 = vpop.f32.mrb[0].mxu0
    %v1424 = vadd.f32 %v920, %v1423
    %v1425 = vpop.f32.mrb[0].mxu0
    %v1426 = vpop.f32.mrb[0].mxu0
    %v1427 = vadd.f32 %v920, %v1426
    %v1428 = vpop.f32.mrb[0].mxu0
    %1429 = vmatprep.mubr.bf16.mxu0 0
    %1430 = vmatmul.mubr.bf16.gmra.mrb[0].mxu0 %v1037
    %v1431 = vpop.f32.mrb[0].mxu0
    %v1432 = vadd.f32 %v920, %v1431
    %v1433 = vpop.f32.mrb[0].mxu0
    %v1434 = vpop.f32.mrb[0].mxu0
    %v1435 = vadd.f32 %v920, %v1434
    %v1436 = vpop.f32.mrb[0].mxu0
    %1437 = vmatprep.mubr.bf16.mxu0 0
    %1438 = vmatmul.mubr.bf16.gmra.mrb[0].mxu0 %v1040
    %v1439 = vpop.f32.mrb[0].mxu0
    %v1440 = vadd.f32 %v920, %v1439
    %v1441 = vpop.f32.mrb[0].mxu0
    %v1442 = vpop.f32.mrb[0].mxu0
    %v1443 = vadd.f32 %v920, %v1442
    %v1444 = vpop.f32.mrb[0].mxu0
    %1445 = vmatprep.mubr.bf16.mxu0 0
    %1446 = vmatmul.mubr.bf16.gmra.mrb[0].mxu0 %v1043
    %v1447 = vpop.f32.mrb[0].mxu0
    %v1448 = vadd.f32 %v920, %v1447
    %v1449 = vpop.f32.mrb[0].mxu0
    %v1450 = vpop.f32.mrb[0].mxu0
    %v1451 = vadd.f32 %v920, %v1450
    %v1452 = vpop.f32.mrb[0].mxu0
    %1453 = vmatprep.mubr.bf16.mxu0 0
    %1454 = vmatmul.mubr.bf16.gmra.mrb[0].mxu0 %v1046
    %v1455 = vpop.f32.mrb[0].mxu0
    %v1456 = vadd.f32 %v920, %v1455
    %v1457 = vpop.f32.mrb[0].mxu0
    %v1458 = vpop.f32.mrb[0].mxu0
    %v1459 = vadd.f32 %v920, %v1458
    %v1460 = vpop.f32.mrb[0].mxu0
    %1461 = vmatprep.mubr.bf16.mxu0 0
    %1462 = vmatmul.mubr.bf16.gmra.mrb[0].mxu0 %v1049
    %v1463 = vpop.f32.mrb[0].mxu0
    %v1464 = vadd.f32 %v920, %v1463
    %v1465 = vpop.f32.mrb[0].mxu0
    %v1466 = vpop.f32.mrb[0].mxu0
    %v1467 = vadd.f32 %v920, %v1466
    %v1468 = vpop.f32.mrb[0].mxu0
    %1469 = vmatprep.mubr.bf16.mxu0 0
    %1470 = vmatmul.mubr.bf16.gmra.mrb[0].mxu0 %v1052
    %v1471 = vpop.f32.mrb[0].mxu0
    %v1472 = vadd.f32 %v920, %v1471
    %v1473 = vpop.f32.mrb[0].mxu0
    %v1474 = vpop.f32.mrb[0].mxu0
    %v1475 = vadd.f32 %v920, %v1474
    %v1476 = vpop.f32.mrb[0].mxu0
    %1477 = vmatprep.mubr.bf16.mxu0 0
    %1478 = vmatmul.mubr.bf16.gmra.mrb[0].mxu0 %v1055
    %v1479 = vpop.f32.mrb[0].mxu0
    %v1480 = vadd.f32 %v920, %v1479
    %v1481 = vpop.f32.mrb[0].mxu0
    %v1482 = vpop.f32.mrb[0].mxu0
    %v1483 = vadd.f32 %v920, %v1482
    %v1484 = vpop.f32.mrb[0].mxu0
    %1485 = vmatprep.mubr.bf16.mxu0 0
    %1486 = vmatmul.mubr.bf16.gmra.mrb[0].mxu0 %v1058
    %v1487 = vpop.f32.mrb[0].mxu0
    %v1488 = vadd.f32 %v920, %v1487
    %v1489 = vpop.f32.mrb[0].mxu0
    %v1490 = vpop.f32.mrb[0].mxu0
    %v1491 = vadd.f32 %v920, %v1490
    %v1492 = vpop.f32.mrb[0].mxu0
    %1493 = vmatprep.mubr.bf16.mxu0 0
    %1494 = vmatmul.mubr.bf16.gmra.mrb[0].mxu0 %v1061
    %v1495 = vpop.f32.mrb[0].mxu0
    %v1496 = vadd.f32 %v920, %v1495
    %v1497 = vpop.f32.mrb[0].mxu0
    %v1498 = vpop.f32.mrb[0].mxu0
    %v1499 = vadd.f32 %v920, %v1498
    %v1500 = vpop.f32.mrb[0].mxu0
    %1501 = vmatprep.mubr.bf16.mxu0 0
    %1502 = vmatmul.mubr.bf16.gmra.mrb[0].mxu0 %v1064
    %v1503 = vpop.f32.mrb[0].mxu0
    %v1504 = vadd.f32 %v920, %v1503
    %v1505 = vpop.f32.mrb[0].mxu0
    %v1506 = vpop.f32.mrb[0].mxu0
    %v1507 = vadd.f32 %v920, %v1506
    %v1508 = vpop.f32.mrb[0].mxu0
    %1509 = vmatprep.mubr.bf16.mxu0 0
    %1510 = vmatmul.mubr.bf16.gmra.mrb[0].mxu0 %v1067
    %v1511 = vpop.f32.mrb[0].mxu0
    %v1512 = vadd.f32 %v920, %v1511
    %v1513 = vpop.f32.mrb[0].mxu0
    %v1514 = vpop.f32.mrb[0].mxu0
    %v1515 = vadd.f32 %v920, %v1514
    %v1516 = vpop.f32.mrb[0].mxu0
    %1517 = vmatprep.mubr.bf16.mxu0 0
    %1518 = vmatmul.mubr.bf16.gmra.mrb[0].mxu0 %v1070
    %v1519 = vpop.f32.mrb[0].mxu0
    %v1520 = vadd.f32 %v920, %v1519
    %v1521 = vpop.f32.mrb[0].mxu0
    %v1522 = vpop.f32.mrb[0].mxu0
    %v1523 = vadd.f32 %v920, %v1522
    %v1524 = vpop.f32.mrb[0].mxu0
    %1525 = vmatprep.mubr.bf16.mxu0 0
    %1526 = vmatmul.mubr.bf16.gmra.mrb[0].mxu0 %v1073
    %v1527 = vpop.f32.mrb[0].mxu0
    %v1528 = vadd.f32 %v920, %v1527
    %v1529 = vpop.f32.mrb[0].mxu0
    %v1530 = vpop.f32.mrb[0].mxu0
    %v1531 = vadd.f32 %v920, %v1530
    %v1532 = vpop.f32.mrb[0].mxu0
    %1533 = vmatprep.mubr.bf16.mxu0 0
    %1534 = vmatmul.mubr.bf16.gmra.mrb[0].mxu0 %v1076
    %v1535 = vpop.f32.mrb[0].mxu0
    %v1536 = vadd.f32 %v920, %v1535
    %v1537 = vpop.f32.mrb[0].mxu0
    %v1538 = vpop.f32.mrb[0].mxu0
    %v1539 = vadd.f32 %v920, %v1538
    %v1540 = vpop.f32.mrb[0].mxu0
    %1541 = vmatprep.mubr.bf16.mxu0 0
    %1542 = vmatmul.mubr.bf16.gmra.mrb[0].mxu0 %v1079
    %v1543 = vpop.f32.mrb[0].mxu0
    %v1544 = vadd.f32 %v920, %v1543
    %v1545 = vpop.f32.mrb[0].mxu0
    %v1546 = vpop.f32.mrb[0].mxu0
    %v1547 = vadd.f32 %v920, %v1546
    %v1548 = vpop.f32.mrb[0].mxu0
    %1549 = vmatprep.mubr.bf16.mxu0 0
    %1550 = vmatmul.mubr.bf16.gmra.mrb[0].mxu0 %v1082
    %v1551 = vpop.f32.mrb[0].mxu0
    %v1552 = vadd.f32 %v920, %v1551
    %v1553 = vpop.f32.mrb[0].mxu0
    %v1554 = vpop.f32.mrb[0].mxu0
    %v1555 = vadd.f32 %v920, %v1554
    %v1556 = vpop.f32.mrb[0].mxu0
    %1557 = vmatprep.mubr.bf16.mxu0 0
    %1558 = vmatmul.mubr.bf16.gmra.mrb[0].mxu0 %v1085
    %v1559 = vpop.f32.mrb[0].mxu0
    %v1560 = vadd.f32 %v920, %v1559
    %v1561 = vpop.f32.mrb[0].mxu0
    %v1562 = vpop.f32.mrb[0].mxu0
    %v1563 = vadd.f32 %v920, %v1562
    %v1564 = vpop.f32.mrb[0].mxu0
    %1565 = vmatprep.mubr.bf16.mxu0 0
    %1566 = vmatmul.mubr.bf16.gmra.mrb[0].mxu0 %v1088
    %v1567 = vpop.f32.mrb[0].mxu0
    %v1568 = vadd.f32 %v920, %v1567
    %v1569 = vpop.f32.mrb[0].mxu0
    %v1570 = vpop.f32.mrb[0].mxu0
    %v1571 = vadd.f32 %v920, %v1570
    %v1572 = vpop.f32.mrb[0].mxu0
    %1573 = vmatprep.mubr.bf16.mxu0 0
    %1574 = vmatmul.mubr.bf16.gmra.mrb[0].mxu0 %v1091
    %v1575 = vpop.f32.mrb[0].mxu0
    %v1576 = vadd.f32 %v920, %v1575
    %v1577 = vpop.f32.mrb[0].mxu0
    %v1578 = vpop.f32.mrb[0].mxu0
    %v1579 = vadd.f32 %v920, %v1578
    %v1580 = vpop.f32.mrb[0].mxu0
    %1581 = vmatprep.mubr.bf16.mxu0 0
    %1582 = vmatmul.mubr.bf16.gmra.mrb[0].mxu0 %v1094
    %v1583 = vpop.f32.mrb[0].mxu0
    %v1584 = vadd.f32 %v920, %v1583
    %v1585 = vpop.f32.mrb[0].mxu0
    %v1586 = vpop.f32.mrb[0].mxu0
    %v1587 = vadd.f32 %v920, %v1586
    %v1588 = vpop.f32.mrb[0].mxu0
    %1589 = vmatprep.mubr.bf16.mxu0 0
    %1590 = vmatmul.mubr.bf16.gmra.mrb[0].mxu0 %v1097
    %v1591 = vpop.f32.mrb[0].mxu0
    %v1592 = vadd.f32 %v920, %v1591
    %v1593 = vpop.f32.mrb[0].mxu0
    %v1594 = vpop.f32.mrb[0].mxu0
    %v1595 = vadd.f32 %v920, %v1594
    %v1596 = vpop.f32.mrb[0].mxu0
    %1597 = vmatprep.mubr.bf16.mxu0 0
    %1598 = vmatmul.mubr.bf16.gmra.mrb[0].mxu0 %v1100
    %v1599 = vpop.f32.mrb[0].mxu0
    %v1600 = vadd.f32 %v920, %v1599
    %v1601 = vpop.f32.mrb[0].mxu0
    %v1602 = vpop.f32.mrb[0].mxu0
    %v1603 = vadd.f32 %v920, %v1602
    %v1604 = vpop.f32.mrb[0].mxu0
    %1605 = vmatprep.mubr.bf16.mxu0 0
    %1606 = vmatmul.mubr.bf16.gmra.mrb[0].mxu0 %v1103
    %v1607 = vpop.f32.mrb[0].mxu0
    %v1608 = vadd.f32 %v920, %v1607
    %v1609 = vpop.f32.mrb[0].mxu0
    %v1610 = vpop.f32.mrb[0].mxu0
    %v1611 = vadd.f32 %v920, %v1610
    %v1612 = vpop.f32.mrb[0].mxu0
    %1613 = vmatprep.mubr.bf16.mxu0 0
    %1614 = vmatmul.mubr.bf16.gmra.mrb[0].mxu0 %v1106
    %v1615 = vpop.f32.mrb[0].mxu0
    %v1616 = vadd.f32 %v920, %v1615
    %v1617 = vpop.f32.mrb[0].mxu0
    %v1618 = vpop.f32.mrb[0].mxu0
    %v1619 = vadd.f32 %v920, %v1618
    %v1620 = vpop.f32.mrb[0].mxu0
    %1621 = vmatprep.mubr.bf16.mxu0 0
    %1622 = vmatmul.mubr.bf16.gmra.mrb[0].mxu0 %v1109
    %v1623 = vpop.f32.mrb[0].mxu0
    %v1624 = vadd.f32 %v920, %v1623
    %v1625 = vpop.f32.mrb[0].mxu0
    %v1626 = vpop.f32.mrb[0].mxu0
    %v1627 = vadd.f32 %v920, %v1626
    %v1628 = vpop.f32.mrb[0].mxu0
    %1629 = vmatprep.mubr.bf16.mxu0 0
    %1630 = vmatmul.mubr.bf16.gmra.mrb[0].mxu0 %v1112
    %v1631 = vpop.f32.mrb[0].mxu0
    %v1632 = vadd.f32 %v920, %v1631
    %v1633 = vpop.f32.mrb[0].mxu0
    %v1634 = vpop.f32.mrb[0].mxu0
    %v1635 = vadd.f32 %v920, %v1634
    %v1636 = vpop.f32.mrb[0].mxu0
    %1637 = vmatprep.mubr.bf16.mxu0 0
    %1638 = vmatmul.mubr.bf16.gmra.mrb[0].mxu0 %v1115
    %v1639 = vpop.f32.mrb[0].mxu0
    %v1640 = vadd.f32 %v920, %v1639
    %v1641 = vpop.f32.mrb[0].mxu0
    %v1642 = vpop.f32.mrb[0].mxu0
    %v1643 = vadd.f32 %v920, %v1642
    %v1644 = vpop.f32.mrb[0].mxu0
    %1645 = vmatprep.mubr.bf16.mxu0 0
    %1646 = vmatmul.mubr.bf16.gmra.mrb[0].mxu0 %v1118
    %v1647 = vpop.f32.mrb[0].mxu0
    %v1648 = vadd.f32 %v920, %v1647
    %v1649 = vpop.f32.mrb[0].mxu0
    %v1650 = vpop.f32.mrb[0].mxu0
    %v1651 = vadd.f32 %v920, %v1650
    %v1652 = vpop.f32.mrb[0].mxu0
    %1653 = vmatprep.mubr.bf16.mxu0 0
    %1654 = vmatmul.mubr.bf16.gmra.mrb[0].mxu0 %v1121
    %v1655 = vpop.f32.mrb[0].mxu0
    %v1656 = vadd.f32 %v920, %v1655
    %v1657 = vpop.f32.mrb[0].mxu0
    %v1658 = vpop.f32.mrb[0].mxu0
    %v1659 = vadd.f32 %v920, %v1658
    %v1660 = vpop.f32.mrb[0].mxu0
    %1661 = vmatprep.mubr.bf16.mxu0 0
    %1662 = vmatmul.mubr.bf16.gmra.mrb[0].mxu0 %v1124
    %v1663 = vpop.f32.mrb[0].mxu0
    %v1664 = vadd.f32 %v920, %v1663
    %v1665 = vpop.f32.mrb[0].mxu0
    %v1666 = vpop.f32.mrb[0].mxu0
    %v1667 = vadd.f32 %v920, %v1666
    %v1668 = vpop.f32.mrb[0].mxu0
    %1669 = vmatprep.mubr.bf16.mxu0 0
    %1670 = vmatmul.mubr.bf16.gmra.mrb[0].mxu0 %v1127
    %v1671 = vpop.f32.mrb[0].mxu0
    %v1672 = vadd.f32 %v920, %v1671
    %v1673 = vpop.f32.mrb[0].mxu0
    %v1674 = vpop.f32.mrb[0].mxu0
    %v1675 = vadd.f32 %v920, %v1674
    %v1676 = vpop.f32.mrb[0].mxu0
    %1677 = vdwg.mxu0
    %v1678 = vmax.f32 %v1168, 0.0
    %v1679 = vmax.f32 %v1171, 0.0
    %v1680 = vmax.f32 %v1176, 0.0
    %v1681 = vmax.f32 %v1179, 0.0
    %v1682 = vmax.f32 %v1184, 0.0
    %v1683 = vmax.f32 %v1187, 0.0
    %v1684 = vmax.f32 %v1192, 0.0
    %v1685 = vmax.f32 %v1195, 0.0
    %v1686 = vmax.f32 %v1200, 0.0
    %v1687 = vmax.f32 %v1203, 0.0
    %v1688 = vmax.f32 %v1208, 0.0
    %v1689 = vmax.f32 %v1211, 0.0
    %v1690 = vmax.f32 %v1216, 0.0
    %v1691 = vmax.f32 %v1219, 0.0
    %v1692 = vmax.f32 %v1224, 0.0
    %v1693 = vmax.f32 %v1227, 0.0
    %v1694 = vmax.f32 %v1232, 0.0
    %v1695 = vmax.f32 %v1235, 0.0
    %v1696 = vmax.f32 %v1240, 0.0
    %v1697 = vmax.f32 %v1243, 0.0
    %v1698 = vmax.f32 %v1248, 0.0
    %v1699 = vmax.f32 %v1251, 0.0
    %v1700 = vmax.f32 %v1256, 0.0
    %v1701 = vmax.f32 %v1259, 0.0
    %v1702 = vmax.f32 %v1264, 0.0
    %v1703 = vmax.f32 %v1267, 0.0
    %v1704 = vmax.f32 %v1272, 0.0
    %v1705 = vmax.f32 %v1275, 0.0
    %v1706 = vmax.f32 %v1280, 0.0
    %v1707 = vmax.f32 %v1283, 0.0
    %v1708 = vmax.f32 %v1288, 0.0
    %v1709 = vmax.f32 %v1291, 0.0
    %v1710 = vmax.f32 %v1296, 0.0
    %v1711 = vmax.f32 %v1299, 0.0
    %v1712 = vmax.f32 %v1304, 0.0
    %v1713 = vmax.f32 %v1307, 0.0
    %v1714 = vmax.f32 %v1312, 0.0
    %v1715 = vmax.f32 %v1315, 0.0
    %v1716 = vmax.f32 %v1320, 0.0
    %v1717 = vmax.f32 %v1323, 0.0
    %v1718 = vmax.f32 %v1328, 0.0
    %v1719 = vmax.f32 %v1331, 0.0
    %v1720 = vmax.f32 %v1336, 0.0
    %v1721 = vmax.f32 %v1339, 0.0
    %v1722 = vmax.f32 %v1344, 0.0
    %v1723 = vmax.f32 %v1347, 0.0
    %v1724 = vmax.f32 %v1352, 0.0
    %v1725 = vmax.f32 %v1355, 0.0
    %v1726 = vmax.f32 %v1360, 0.0
    %v1727 = vmax.f32 %v1363, 0.0
    %v1728 = vmax.f32 %v1368, 0.0
    %v1729 = vmax.f32 %v1371, 0.0
    %v1730 = vmax.f32 %v1376, 0.0
    %v1731 = vmax.f32 %v1379, 0.0
    %v1732 = vmax.f32 %v1384, 0.0
    %v1733 = vmax.f32 %v1387, 0.0
    %v1734 = vmax.f32 %v1392, 0.0
    %v1735 = vmax.f32 %v1395, 0.0
    %v1736 = vmax.f32 %v1400, 0.0
    %v1737 = vmax.f32 %v1403, 0.0
    %v1738 = vmax.f32 %v1408, 0.0
    %v1739 = vmax.f32 %v1411, 0.0
    %v1740 = vmax.f32 %v1416, 0.0
    %v1741 = vmax.f32 %v1419, 0.0
    %v1742 = vmax.f32 %v1424, 0.0
    %v1743 = vmax.f32 %v1427, 0.0
    %v1744 = vmax.f32 %v1432, 0.0
    %v1745 = vmax.f32 %v1435, 0.0
    %v1746 = vmax.f32 %v1440, 0.0
    %v1747 = vmax.f32 %v1443, 0.0
    %v1748 = vmax.f32 %v1448, 0.0
    %v1749 = vmax.f32 %v1451, 0.0
    %v1750 = vmax.f32 %v1456, 0.0
    %v1751 = vmax.f32 %v1459, 0.0
    %v1752 = vmax.f32 %v1464, 0.0
    %v1753 = vmax.f32 %v1467, 0.0
    %v1754 = vmax.f32 %v1472, 0.0
    %v1755 = vmax.f32 %v1475, 0.0
    %v1756 = vmax.f32 %v1480, 0.0
    %v1757 = vmax.f32 %v1483, 0.0
    %v1758 = vmax.f32 %v1488, 0.0
    %v1759 = vmax.f32 %v1491, 0.0
    %v1760 = vmax.f32 %v1496, 0.0
    %v1761 = vmax.f32 %v1499, 0.0
    %v1762 = vmax.f32 %v1504, 0.0
    %v1763 = vmax.f32 %v1507, 0.0
    %v1764 = vmax.f32 %v1512, 0.0
    %v1765 = vmax.f32 %v1515, 0.0
    %v1766 = vmax.f32 %v1520, 0.0
    %v1767 = vmax.f32 %v1523, 0.0
    %v1768 = vmax.f32 %v1528, 0.0
    %v1769 = vmax.f32 %v1531, 0.0
    %v1770 = vmax.f32 %v1536, 0.0
    %v1771 = vmax.f32 %v1539, 0.0
    %v1772 = vmax.f32 %v1544, 0.0
    %v1773 = vmax.f32 %v1547, 0.0
    %v1774 = vmax.f32 %v1552, 0.0
    %v1775 = vmax.f32 %v1555, 0.0
    %v1776 = vmax.f32 %v1560, 0.0
    %v1777 = vmax.f32 %v1563, 0.0
    %v1778 = vmax.f32 %v1568, 0.0
    %v1779 = vmax.f32 %v1571, 0.0
    %v1780 = vmax.f32 %v1576, 0.0
    %v1781 = vmax.f32 %v1579, 0.0
    %v1782 = vmax.f32 %v1584, 0.0
    %v1783 = vmax.f32 %v1587, 0.0
    %v1784 = vmax.f32 %v1592, 0.0
    %v1785 = vmax.f32 %v1595, 0.0
    %v1786 = vmax.f32 %v1600, 0.0
    %v1787 = vmax.f32 %v1603, 0.0
    %v1788 = vmax.f32 %v1608, 0.0
    %v1789 = vmax.f32 %v1611, 0.0
    %v1790 = vmax.f32 %v1616, 0.0
    %v1791 = vmax.f32 %v1619, 0.0
    %v1792 = vmax.f32 %v1624, 0.0
    %v1793 = vmax.f32 %v1627, 0.0
    %v1794 = vmax.f32 %v1632, 0.0
    %v1795 = vmax.f32 %v1635, 0.0
    %v1796 = vmax.f32 %v1640, 0.0
    %v1797 = vmax.f32 %v1643, 0.0
    %v1798 = vmax.f32 %v1648, 0.0
    %v1799 = vmax.f32 %v1651, 0.0
    %v1800 = vmax.f32 %v1656, 0.0
    %v1801 = vmax.f32 %v1659, 0.0
    %v1802 = vmax.f32 %v1664, 0.0
    %v1803 = vmax.f32 %v1667, 0.0
    %v1804 = vmax.f32 %v1672, 0.0
    %v1805 = vmax.f32 %v1675, 0.0
    %v1806 = vlaneseq
    %v1807 = vshrl.u32 %v1806, 7
    %v1808 = vlaneseq
    %v1809 = vand.u32 %v1808, 127
    %v1810 = vadd.s32 %v1809, 128
    %v1811 = vadd.s32 %v1809, 256
    %v1812 = vadd.s32 %v1809, 384
    %v1813 = vadd.s32 %v1809, 512
    %v1814 = vadd.s32 %v1809, 640
    %v1815 = vadd.s32 %v1809, 768
    %v1816 = vadd.s32 %v1809, 896
    %v1817 = vmul.u32 %v1807, 256
    %vm1818 = vcmp.ge.s32.totalorder %v1809, %v1817
    %vm1819 = vcmp.ge.s32.totalorder %v1810, %v1817
    %vm1820 = vcmp.ge.s32.totalorder %v1811, %v1817
    %vm1821 = vcmp.ge.s32.totalorder %v1812, %v1817
    %vm1822 = vcmp.ge.s32.totalorder %v1813, %v1817
    %vm1823 = vcmp.ge.s32.totalorder %v1814, %v1817
    %vm1824 = vcmp.ge.s32.totalorder %v1815, %v1817
    %vm1825 = vcmp.ge.s32.totalorder %v1816, %v1817
    %v1826 = vadd.s32 %v1807, 1
    %v1827 = vmul.u32 %v1826, 256
    %vm1828 = vcmp.lt.s32.totalorder %v1809, %v1827
    %vm1829 = vcmp.lt.s32.totalorder %v1810, %v1827
    %vm1830 = vcmp.lt.s32.totalorder %v1811, %v1827
    %vm1831 = vcmp.lt.s32.totalorder %v1812, %v1827
    %vm1832 = vcmp.lt.s32.totalorder %v1813, %v1827
    %vm1833 = vcmp.lt.s32.totalorder %v1814, %v1827
    %vm1834 = vcmp.lt.s32.totalorder %v1815, %v1827
    %vm1835 = vcmp.lt.s32.totalorder %v1816, %v1827
    %vm1836 = vmand %vm1818, %vm1828
    %vm1837 = vmand %vm1819, %vm1829
    %vm1838 = vmand %vm1820, %vm1830
    %vm1839 = vmand %vm1821, %vm1831
    %vm1840 = vmand %vm1822, %vm1832
    %vm1841 = vmand %vm1823, %vm1833
    %vm1842 = vmand %vm1824, %vm1834
    %vm1843 = vmand %vm1825, %vm1835
    %v1844 = vsel %vm1836, 0.00390625, 0.0
    %v1845 = vsel %vm1837, 0.00390625, 0.0
    %v1846 = vsel %vm1838, 0.00390625, 0.0
    %v1847 = vsel %vm1839, 0.00390625, 0.0
    %v1848 = vsel %vm1840, 0.00390625, 0.0
    %v1849 = vsel %vm1841, 0.00390625, 0.0
    %v1850 = vsel %vm1842, 0.00390625, 0.0
    %v1851 = vsel %vm1843, 0.00390625, 0.0
    %1852 = vmatprep.subr.mxu0 0.0
    %1853 = vmatpush1.msra.mxu0 %v1678
    %1854 = vmatprep.subr.mxu0 0.0
    %1855 = vmatpush1.msra.mxu0 %v1679
    %1856 = vmatprep.subr.mxu0 0.0
    %1857 = vmatpush1.msra.mxu0 %v1680
    %1858 = vmatprep.subr.mxu0 0.0
    %1859 = vmatpush1.msra.mxu0 %v1681
    %1860 = vmatprep.subr.mxu0 0.0
    %1861 = vmatpush1.msra.mxu0 %v1682
    %1862 = vmatprep.subr.mxu0 0.0
    %1863 = vmatpush1.msra.mxu0 %v1683
    %1864 = vmatprep.subr.mxu0 0.0
    %1865 = vmatpush1.msra.mxu0 %v1684
    %1866 = vmatprep.subr.mxu0 0.0
    %1867 = vmatpush1.msra.mxu0 %v1685
    %1868 = vmatprep.subr.mxu0 0.0
    %1869 = vmatpush1.msra.mxu0 %v1686
    %1870 = vmatprep.subr.mxu0 0.0
    %1871 = vmatpush1.msra.mxu0 %v1687
    %1872 = vmatprep.subr.mxu0 0.0
    %1873 = vmatpush1.msra.mxu0 %v1688
    %1874 = vmatprep.subr.mxu0 0.0
    %1875 = vmatpush1.msra.mxu0 %v1689
    %1876 = vmatprep.subr.mxu0 0.0
    %1877 = vmatpush1.msra.mxu0 %v1690
    %1878 = vmatprep.subr.mxu0 0.0
    %1879 = vmatpush1.msra.mxu0 %v1691
    %1880 = vmatprep.subr.mxu0 0.0
    %1881 = vmatpush1.msra.mxu0 %v1692
    %1882 = vmatprep.subr.mxu0 0.0
    %1883 = vmatpush1.msra.mxu0 %v1693
    %1884 = vmatprep.subr.mxu0 0.0
    %1885 = vmatpush1.msra.mxu0 %v1694
    %1886 = vmatprep.subr.mxu0 0.0
    %1887 = vmatpush1.msra.mxu0 %v1695
    %1888 = vmatprep.subr.mxu0 0.0
    %1889 = vmatpush1.msra.mxu0 %v1696
    %1890 = vmatprep.subr.mxu0 0.0
    %1891 = vmatpush1.msra.mxu0 %v1697
    %1892 = vmatprep.subr.mxu0 0.0
    %1893 = vmatpush1.msra.mxu0 %v1698
    %1894 = vmatprep.subr.mxu0 0.0
    %1895 = vmatpush1.msra.mxu0 %v1699
    %1896 = vmatprep.subr.mxu0 0.0
    %1897 = vmatpush1.msra.mxu0 %v1700
    %1898 = vmatprep.subr.mxu0 0.0
    %1899 = vmatpush1.msra.mxu0 %v1701
    %1900 = vmatprep.subr.mxu0 0.0
    %1901 = vmatpush1.msra.mxu0 %v1702
    %1902 = vmatprep.subr.mxu0 0.0
    %1903 = vmatpush1.msra.mxu0 %v1703
    %1904 = vmatprep.subr.mxu0 0.0
    %1905 = vmatpush1.msra.mxu0 %v1704
    %1906 = vmatprep.subr.mxu0 0.0
    %1907 = vmatpush1.msra.mxu0 %v1705
    %1908 = vmatprep.subr.mxu0 0.0
    %1909 = vmatpush1.msra.mxu0 %v1706
    %1910 = vmatprep.subr.mxu0 0.0
    %1911 = vmatpush1.msra.mxu0 %v1707
    %1912 = vmatprep.subr.mxu0 0.0
    %1913 = vmatpush1.msra.mxu0 %v1708
    %1914 = vmatprep.subr.mxu0 0.0
    %1915 = vmatpush1.msra.mxu0 %v1709
    %1916 = vmatprep.mubr.f32.mxu0 %v1845
    %1917 = vmatmul.mubr.f32.gmra.mrb[0].mxu0 %v1844
    %v1918 = vpop.f32.mrb[0].mxu0
    %v1919 = vadd.f32 0.0, %v1918
    %v1920 = vpop.f32.mrb[0].mxu0
    %1921 = vdwg.mxu0
    %1922 = vmatprep.subr.mxu0 0.0
    %1923 = vmatpush1.msra.mxu0 %v1710
    %1924 = vmatprep.subr.mxu0 0.0
    %1925 = vmatpush1.msra.mxu0 %v1711
    %1926 = vmatprep.subr.mxu0 0.0
    %1927 = vmatpush1.msra.mxu0 %v1712
    %1928 = vmatprep.subr.mxu0 0.0
    %1929 = vmatpush1.msra.mxu0 %v1713
    %1930 = vmatprep.subr.mxu0 0.0
    %1931 = vmatpush1.msra.mxu0 %v1714
    %1932 = vmatprep.subr.mxu0 0.0
    %1933 = vmatpush1.msra.mxu0 %v1715
    %1934 = vmatprep.subr.mxu0 0.0
    %1935 = vmatpush1.msra.mxu0 %v1716
    %1936 = vmatprep.subr.mxu0 0.0
    %1937 = vmatpush1.msra.mxu0 %v1717
    %1938 = vmatprep.subr.mxu0 0.0
    %1939 = vmatpush1.msra.mxu0 %v1718
    %1940 = vmatprep.subr.mxu0 0.0
    %1941 = vmatpush1.msra.mxu0 %v1719
    %1942 = vmatprep.subr.mxu0 0.0
    %1943 = vmatpush1.msra.mxu0 %v1720
    %1944 = vmatprep.subr.mxu0 0.0
    %1945 = vmatpush1.msra.mxu0 %v1721
    %1946 = vmatprep.subr.mxu0 0.0
    %1947 = vmatpush1.msra.mxu0 %v1722
    %1948 = vmatprep.subr.mxu0 0.0
    %1949 = vmatpush1.msra.mxu0 %v1723
    %1950 = vmatprep.subr.mxu0 0.0
    %1951 = vmatpush1.msra.mxu0 %v1724
    %1952 = vmatprep.subr.mxu0 0.0
    %1953 = vmatpush1.msra.mxu0 %v1725
    %1954 = vmatprep.subr.mxu0 0.0
    %1955 = vmatpush1.msra.mxu0 %v1726
    %1956 = vmatprep.subr.mxu0 0.0
    %1957 = vmatpush1.msra.mxu0 %v1727
    %1958 = vmatprep.subr.mxu0 0.0
    %1959 = vmatpush1.msra.mxu0 %v1728
    %1960 = vmatprep.subr.mxu0 0.0
    %1961 = vmatpush1.msra.mxu0 %v1729
    %1962 = vmatprep.subr.mxu0 0.0
    %1963 = vmatpush1.msra.mxu0 %v1730
    %1964 = vmatprep.subr.mxu0 0.0
    %1965 = vmatpush1.msra.mxu0 %v1731
    %1966 = vmatprep.subr.mxu0 0.0
    %1967 = vmatpush1.msra.mxu0 %v1732
    %1968 = vmatprep.subr.mxu0 0.0
    %1969 = vmatpush1.msra.mxu0 %v1733
    %1970 = vmatprep.subr.mxu0 0.0
    %1971 = vmatpush1.msra.mxu0 %v1734
    %1972 = vmatprep.subr.mxu0 0.0
    %1973 = vmatpush1.msra.mxu0 %v1735
    %1974 = vmatprep.subr.mxu0 0.0
    %1975 = vmatpush1.msra.mxu0 %v1736
    %1976 = vmatprep.subr.mxu0 0.0
    %1977 = vmatpush1.msra.mxu0 %v1737
    %1978 = vmatprep.subr.mxu0 0.0
    %1979 = vmatpush1.msra.mxu0 %v1738
    %1980 = vmatprep.subr.mxu0 0.0
    %1981 = vmatpush1.msra.mxu0 %v1739
    %1982 = vmatprep.subr.mxu0 0.0
    %1983 = vmatpush1.msra.mxu0 %v1740
    %1984 = vmatprep.subr.mxu0 0.0
    %1985 = vmatpush1.msra.mxu0 %v1741
    %1986 = vmatprep.mubr.f32.mxu0 %v1847
    %1987 = vmatmul.mubr.f32.gmra.mrb[0].mxu0 %v1846
    %v1988 = vpop.f32.mrb[0].mxu0
    %v1989 = vadd.f32 %v1919, %v1988
    %v1990 = vpop.f32.mrb[0].mxu0
    %1991 = vdwg.mxu0
    %1992 = vmatprep.subr.mxu0 0.0
    %1993 = vmatpush1.msra.mxu0 %v1742
    %1994 = vmatprep.subr.mxu0 0.0
    %1995 = vmatpush1.msra.mxu0 %v1743
    %1996 = vmatprep.subr.mxu0 0.0
    %1997 = vmatpush1.msra.mxu0 %v1744
    %1998 = vmatprep.subr.mxu0 0.0
    %1999 = vmatpush1.msra.mxu0 %v1745
    %2000 = vmatprep.subr.mxu0 0.0
    %2001 = vmatpush1.msra.mxu0 %v1746
    %2002 = vmatprep.subr.mxu0 0.0
    %2003 = vmatpush1.msra.mxu0 %v1747
    %2004 = vmatprep.subr.mxu0 0.0
    %2005 = vmatpush1.msra.mxu0 %v1748
    %2006 = vmatprep.subr.mxu0 0.0
    %2007 = vmatpush1.msra.mxu0 %v1749
    %2008 = vmatprep.subr.mxu0 0.0
    %2009 = vmatpush1.msra.mxu0 %v1750
    %2010 = vmatprep.subr.mxu0 0.0
    %2011 = vmatpush1.msra.mxu0 %v1751
    %2012 = vmatprep.subr.mxu0 0.0
    %2013 = vmatpush1.msra.mxu0 %v1752
    %2014 = vmatprep.subr.mxu0 0.0
    %2015 = vmatpush1.msra.mxu0 %v1753
    %2016 = vmatprep.subr.mxu0 0.0
    %2017 = vmatpush1.msra.mxu0 %v1754
    %2018 = vmatprep.subr.mxu0 0.0
    %2019 = vmatpush1.msra.mxu0 %v1755
    %2020 = vmatprep.subr.mxu0 0.0
    %2021 = vmatpush1.msra.mxu0 %v1756
    %2022 = vmatprep.subr.mxu0 0.0
    %2023 = vmatpush1.msra.mxu0 %v1757
    %2024 = vmatprep.subr.mxu0 0.0
    %2025 = vmatpush1.msra.mxu0 %v1758
    %2026 = vmatprep.subr.mxu0 0.0
    %2027 = vmatpush1.msra.mxu0 %v1759
    %2028 = vmatprep.subr.mxu0 0.0
    %2029 = vmatpush1.msra.mxu0 %v1760
    %2030 = vmatprep.subr.mxu0 0.0
    %2031 = vmatpush1.msra.mxu0 %v1761
    %2032 = vmatprep.subr.mxu0 0.0
    %2033 = vmatpush1.msra.mxu0 %v1762
    %2034 = vmatprep.subr.mxu0 0.0
    %2035 = vmatpush1.msra.mxu0 %v1763
    %2036 = vmatprep.subr.mxu0 0.0
    %2037 = vmatpush1.msra.mxu0 %v1764
    %2038 = vmatprep.subr.mxu0 0.0
    %2039 = vmatpush1.msra.mxu0 %v1765
    %2040 = vmatprep.subr.mxu0 0.0
    %2041 = vmatpush1.msra.mxu0 %v1766
    %2042 = vmatprep.subr.mxu0 0.0
    %2043 = vmatpush1.msra.mxu0 %v1767
    %2044 = vmatprep.subr.mxu0 0.0
    %2045 = vmatpush1.msra.mxu0 %v1768
    %2046 = vmatprep.subr.mxu0 0.0
    %2047 = vmatpush1.msra.mxu0 %v1769
    %2048 = vmatprep.subr.mxu0 0.0
    %2049 = vmatpush1.msra.mxu0 %v1770
    %2050 = vmatprep.subr.mxu0 0.0
    %2051 = vmatpush1.msra.mxu0 %v1771
    %2052 = vmatprep.subr.mxu0 0.0
    %2053 = vmatpush1.msra.mxu0 %v1772
    %2054 = vmatprep.subr.mxu0 0.0
    %2055 = vmatpush1.msra.mxu0 %v1773
    %2056 = vmatprep.mubr.f32.mxu0 %v1849
    %2057 = vmatmul.mubr.f32.gmra.mrb[0].mxu0 %v1848
    %v2058 = vpop.f32.mrb[0].mxu0
    %v2059 = vadd.f32 %v1989, %v2058
    %v2060 = vpop.f32.mrb[0].mxu0
    %2061 = vdwg.mxu0
    %2062 = vmatprep.subr.mxu0 0.0
    %2063 = vmatpush1.msra.mxu0 %v1774
    %2064 = vmatprep.subr.mxu0 0.0
    %2065 = vmatpush1.msra.mxu0 %v1775
    %2066 = vmatprep.subr.mxu0 0.0
    %2067 = vmatpush1.msra.mxu0 %v1776
    %2068 = vmatprep.subr.mxu0 0.0
    %2069 = vmatpush1.msra.mxu0 %v1777
    %2070 = vmatprep.subr.mxu0 0.0
    %2071 = vmatpush1.msra.mxu0 %v1778
    %2072 = vmatprep.subr.mxu0 0.0
    %2073 = vmatpush1.msra.mxu0 %v1779
    %2074 = vmatprep.subr.mxu0 0.0
    %2075 = vmatpush1.msra.mxu0 %v1780
    %2076 = vmatprep.subr.mxu0 0.0
    %2077 = vmatpush1.msra.mxu0 %v1781
    %2078 = vmatprep.subr.mxu0 0.0
    %2079 = vmatpush1.msra.mxu0 %v1782
    %2080 = vmatprep.subr.mxu0 0.0
    %2081 = vmatpush1.msra.mxu0 %v1783
    %2082 = vmatprep.subr.mxu0 0.0
    %2083 = vmatpush1.msra.mxu0 %v1784
    %2084 = vmatprep.subr.mxu0 0.0
    %2085 = vmatpush1.msra.mxu0 %v1785
    %2086 = vmatprep.subr.mxu0 0.0
    %2087 = vmatpush1.msra.mxu0 %v1786
    %2088 = vmatprep.subr.mxu0 0.0
    %2089 = vmatpush1.msra.mxu0 %v1787
    %2090 = vmatprep.subr.mxu0 0.0
    %2091 = vmatpush1.msra.mxu0 %v1788
    %2092 = vmatprep.subr.mxu0 0.0
    %2093 = vmatpush1.msra.mxu0 %v1789
    %2094 = vmatprep.subr.mxu0 0.0
    %2095 = vmatpush1.msra.mxu0 %v1790
    %2096 = vmatprep.subr.mxu0 0.0
    %2097 = vmatpush1.msra.mxu0 %v1791
    %2098 = vmatprep.subr.mxu0 0.0
    %2099 = vmatpush1.msra.mxu0 %v1792
    %2100 = vmatprep.subr.mxu0 0.0
    %2101 = vmatpush1.msra.mxu0 %v1793
    %2102 = vmatprep.subr.mxu0 0.0
    %2103 = vmatpush1.msra.mxu0 %v1794
    %2104 = vmatprep.subr.mxu0 0.0
    %2105 = vmatpush1.msra.mxu0 %v1795
    %2106 = vmatprep.subr.mxu0 0.0
    %2107 = vmatpush1.msra.mxu0 %v1796
    %2108 = vmatprep.subr.mxu0 0.0
    %2109 = vmatpush1.msra.mxu0 %v1797
    %2110 = vmatprep.subr.mxu0 0.0
    %2111 = vmatpush1.msra.mxu0 %v1798
    %2112 = vmatprep.subr.mxu0 0.0
    %2113 = vmatpush1.msra.mxu0 %v1799
    %2114 = vmatprep.subr.mxu0 0.0
    %2115 = vmatpush1.msra.mxu0 %v1800
    %2116 = vmatprep.subr.mxu0 0.0
    %2117 = vmatpush1.msra.mxu0 %v1801
    %2118 = vmatprep.subr.mxu0 0.0
    %2119 = vmatpush1.msra.mxu0 %v1802
    %2120 = vmatprep.subr.mxu0 0.0
    %2121 = vmatpush1.msra.mxu0 %v1803
    %2122 = vmatprep.subr.mxu0 0.0
    %2123 = vmatpush1.msra.mxu0 %v1804
    %2124 = vmatprep.subr.mxu0 0.0
    %2125 = vmatpush1.msra.mxu0 %v1805
    %2126 = vmatprep.mubr.f32.mxu0 %v1851
    %2127 = vmatmul.mubr.f32.gmra.mrb[0].mxu0 %v1850
    %v2128 = vpop.f32.mrb[0].mxu0
    %v2129 = vadd.f32 %v2059, %v2128
    %v2130 = vpop.f32.mrb[0].mxu0
    %2131 = vdwg.mxu0
    %v2132 = vld [vmem:[%s6] sm:$0xff]
    %v2133 = vld [vmem:[%s6 + $0x8] sm:$0xff]
    %v2134 = vld [vmem:[%s6 + $0x10] sm:$0xff]
    %v2135 = vld [vmem:[%s6 + $0x18] sm:$0xff]
    %v2136 = vld [vmem:[%s6 + $0x20] sm:$0xff]
    %v2137 = vld [vmem:[%s6 + $0x28] sm:$0xff]
    %v2138 = vld [vmem:[%s6 + $0x30] sm:$0xff]
    %v2139 = vld [vmem:[%s6 + $0x38] sm:$0xff]
    %v2140 = vld [vmem:[%s6 + $0x40] sm:$0xff]
    %v2141 = vld [vmem:[%s6 + $0x48] sm:$0xff]
    %v2143 = vrot.slane %v2129, 2
    %vm2144 = vcmask 326656
    %v2145 = vsel %vm2144, %v2143, 0
    %2147 = vmatprep.subr.mxu0 0.0
    %2148 = vmatpush1.msra.mxu0 %v2137
    %2149 = vmatprep.subr.mxu0 0.0
    %2150 = vmatpush1.msra.mxu0 %v2138
    %2151 = vmatprep.subr.mxu0 0.0
    %2152 = vmatpush1.msra.mxu0 %v2139
    %2153 = vmatprep.subr.mxu0 0.0
    %2154 = vmatpush1.msra.mxu0 %v2140
    %2155 = vmatprep.subr.mxu0 0.0
    %2156 = vmatpush1.msra.mxu0 %v2141
    %2157 = vmatprep.subr.mxu0 0.0
    %2158 = vmatpush1.msra.mxu0 0.0
    %2159 = vmatprep.subr.mxu0 0.0
    %2160 = vmatpush1.msra.mxu0 0.0
    %2161 = vmatprep.subr.mxu0 0.0
    %2162 = vmatpush1.msra.mxu0 0.0
    %2163 = vmatprep.subr.mxu0 0.0
    %2164 = vmatpush1.msra.mxu0 0.0
    %2165 = vmatprep.subr.mxu0 0.0
    %2166 = vmatpush1.msra.mxu0 0.0
    %2167 = vmatprep.subr.mxu0 0.0
    %2168 = vmatpush1.msra.mxu0 0.0
    %2169 = vmatprep.subr.mxu0 0.0
    %2170 = vmatpush1.msra.mxu0 0.0
    %2171 = vmatprep.subr.mxu0 0.0
    %2172 = vmatpush1.msra.mxu0 0.0
    %2173 = vmatprep.subr.mxu0 0.0
    %2174 = vmatpush1.msra.mxu0 0.0
    %2175 = vmatprep.subr.mxu0 0.0
    %2176 = vmatpush1.msra.mxu0 0.0
    %2177 = vmatprep.subr.mxu0 0.0
    %2178 = vmatpush1.msra.mxu0 0.0
    %2179 = vmatprep.subr.mxu0 0.0
    %2180 = vmatpush1.msra.mxu0 0.0
    %2181 = vmatprep.subr.mxu0 0.0
    %2182 = vmatpush1.msra.mxu0 0.0
    %2183 = vmatprep.subr.mxu0 0.0
    %2184 = vmatpush1.msra.mxu0 0.0
    %2185 = vmatprep.subr.mxu0 0.0
    %2186 = vmatpush1.msra.mxu0 0.0
    %2187 = vmatprep.subr.mxu0 0.0
    %2188 = vmatpush1.msra.mxu0 0.0
    %2189 = vmatprep.subr.mxu0 0.0
    %2190 = vmatpush1.msra.mxu0 0.0
    %2191 = vmatprep.subr.mxu0 0.0
    %2192 = vmatpush1.msra.mxu0 0.0
    %2193 = vmatprep.subr.mxu0 0.0
    %2194 = vmatpush1.msra.mxu0 0.0
    %2195 = vmatprep.subr.mxu0 0.0
    %2196 = vmatpush1.msra.mxu0 0.0
    %2197 = vmatprep.subr.mxu0 0.0
    %2198 = vmatpush1.msra.mxu0 0.0
    %2199 = vmatprep.subr.mxu0 0.0
    %2200 = vmatpush1.msra.mxu0 0.0
    %2201 = vmatprep.subr.mxu0 0.0
    %2202 = vmatpush1.msra.mxu0 0.0
    %2203 = vmatprep.subr.mxu0 0.0
    %2204 = vmatpush1.msra.mxu0 0.0
    %2205 = vmatprep.subr.mxu0 0.0
    %2206 = vmatpush1.msra.mxu0 0.0
    %2207 = vmatprep.subr.mxu0 0.0
    %2208 = vmatpush1.msra.mxu0 0.0
    %2209 = vmatprep.subr.mxu0 0.0
    %2210 = vmatpush1.msra.mxu0 0.0
    %2211 = vmatprep.mubr.f32.mxu0 0.0
    %2212 = vmatmul.mubr.f32.gmra.mrb[0].mxu0 %v2145
    %v2213 = vpop.f32.mrb[0].mxu0
    %v2214 = vadd.f32 0.0, %v2213
    %v2215 = vpop.f32.mrb[0].mxu0
    %2216 = vdwg.mxu0
    %v2217 = vsel %vm2144, %v2129, 0
    %2219 = vmatprep.subr.mxu0 0.0
    %2220 = vmatpush1.msra.mxu0 %v2132
    %2221 = vmatprep.subr.mxu0 0.0
    %2222 = vmatpush1.msra.mxu0 %v2133
    %2223 = vmatprep.subr.mxu0 0.0
    %2224 = vmatpush1.msra.mxu0 %v2134
    %2225 = vmatprep.subr.mxu0 0.0
    %2226 = vmatpush1.msra.mxu0 %v2135
    %2227 = vmatprep.subr.mxu0 0.0
    %2228 = vmatpush1.msra.mxu0 %v2136
    %2229 = vmatprep.subr.mxu0 0.0
    %2230 = vmatpush1.msra.mxu0 0.0
    %2231 = vmatprep.subr.mxu0 0.0
    %2232 = vmatpush1.msra.mxu0 0.0
    %2233 = vmatprep.subr.mxu0 0.0
    %2234 = vmatpush1.msra.mxu0 0.0
    %2235 = vmatprep.subr.mxu0 0.0
    %2236 = vmatpush1.msra.mxu0 0.0
    %2237 = vmatprep.subr.mxu0 0.0
    %2238 = vmatpush1.msra.mxu0 0.0
    %2239 = vmatprep.subr.mxu0 0.0
    %2240 = vmatpush1.msra.mxu0 0.0
    %2241 = vmatprep.subr.mxu0 0.0
    %2242 = vmatpush1.msra.mxu0 0.0
    %2243 = vmatprep.subr.mxu0 0.0
    %2244 = vmatpush1.msra.mxu0 0.0
    %2245 = vmatprep.subr.mxu0 0.0
    %2246 = vmatpush1.msra.mxu0 0.0
    %2247 = vmatprep.subr.mxu0 0.0
    %2248 = vmatpush1.msra.mxu0 0.0
    %2249 = vmatprep.subr.mxu0 0.0
    %2250 = vmatpush1.msra.mxu0 0.0
    %2251 = vmatprep.subr.mxu0 0.0
    %2252 = vmatpush1.msra.mxu0 0.0
    %2253 = vmatprep.subr.mxu0 0.0
    %2254 = vmatpush1.msra.mxu0 0.0
    %2255 = vmatprep.subr.mxu0 0.0
    %2256 = vmatpush1.msra.mxu0 0.0
    %2257 = vmatprep.subr.mxu0 0.0
    %2258 = vmatpush1.msra.mxu0 0.0
    %2259 = vmatprep.subr.mxu0 0.0
    %2260 = vmatpush1.msra.mxu0 0.0
    %2261 = vmatprep.subr.mxu0 0.0
    %2262 = vmatpush1.msra.mxu0 0.0
    %2263 = vmatprep.subr.mxu0 0.0
    %2264 = vmatpush1.msra.mxu0 0.0
    %2265 = vmatprep.subr.mxu0 0.0
    %2266 = vmatpush1.msra.mxu0 0.0
    %2267 = vmatprep.subr.mxu0 0.0
    %2268 = vmatpush1.msra.mxu0 0.0
    %2269 = vmatprep.subr.mxu0 0.0
    %2270 = vmatpush1.msra.mxu0 0.0
    %2271 = vmatprep.subr.mxu0 0.0
    %2272 = vmatpush1.msra.mxu0 0.0
    %2273 = vmatprep.subr.mxu0 0.0
    %2274 = vmatpush1.msra.mxu0 0.0
    %2275 = vmatprep.subr.mxu0 0.0
    %2276 = vmatpush1.msra.mxu0 0.0
    %2277 = vmatprep.subr.mxu0 0.0
    %2278 = vmatpush1.msra.mxu0 0.0
    %2279 = vmatprep.subr.mxu0 0.0
    %2280 = vmatpush1.msra.mxu0 0.0
    %2281 = vmatprep.subr.mxu0 0.0
    %2282 = vmatpush1.msra.mxu0 0.0
    %2283 = vmatprep.mubr.f32.mxu0 0.0
    %2284 = vmatmul.mubr.f32.gmra.mrb[0].mxu0 %v2217
    %v2285 = vpop.f32.mrb[0].mxu0
    %v2286 = vadd.f32 %v2214, %v2285
    %v2287 = vpop.f32.mrb[0].mxu0
    %2288 = vdwg.mxu0
    %v2289 = vlaneseq
    %v2290 = vshrl.u32 %v2289, 7
    %v2291 = vsub.s32 1, %v2290
    %v2292 = vrot.slane %v847, %v2291
    %v2293 = vadd.f32 %v2286, %v2292
    %v2294 = vxor.u32 %v2293, 2147483648
    %v2295 = vmul.f32 %v2294, 1.442695
    %v2296 = vpow.pop %v2295
    %v2297 = vadd.f32 %v2296, 1.0
    %v2298 = vrcp.pop %v2297
    %v2299 = vmul.f32 1.0, %v2298
    %v2300 = vld [vmem:[%s6 + $0x50] sm:$0xff]
    %v2301 = vld [vmem:[%s6 + $0x58] sm:$0xff]
    %v2302 = vld [vmem:[%s6 + $0x60] sm:$0xff]
    %v2303 = vld [vmem:[%s6 + $0x68] sm:$0xff]
    %v2304 = vld [vmem:[%s6 + $0x70] sm:$0xff]
    %v2305 = vld [vmem:[%s6 + $0x78] sm:$0xff]
    %v2306 = vld [vmem:[%s6 + $0x80] sm:$0xff]
    %v2307 = vld [vmem:[%s6 + $0x88] sm:$0xff]
    %v2308 = vld [vmem:[%s6 + $0x90] sm:$0xff]
    %v2309 = vld [vmem:[%s6 + $0x98] sm:$0xff]
    %2310 = vmatprep.subr.mxu0 0.0
    %2311 = vmatpush1.msra.mxu0 %v2305
    %2312 = vmatprep.subr.mxu0 0.0
    %2313 = vmatpush1.msra.mxu0 %v2306
    %2314 = vmatprep.subr.mxu0 0.0
    %2315 = vmatpush1.msra.mxu0 %v2307
    %2316 = vmatprep.subr.mxu0 0.0
    %2317 = vmatpush1.msra.mxu0 %v2308
    %2318 = vmatprep.subr.mxu0 0.0
    %2319 = vmatpush1.msra.mxu0 %v2309
    %2320 = vmatprep.subr.mxu0 0.0
    %2321 = vmatpush1.msra.mxu0 0.0
    %2322 = vmatprep.subr.mxu0 0.0
    %2323 = vmatpush1.msra.mxu0 0.0
    %2324 = vmatprep.subr.mxu0 0.0
    %2325 = vmatpush1.msra.mxu0 0.0
    %2326 = vmatprep.subr.mxu0 0.0
    %2327 = vmatpush1.msra.mxu0 0.0
    %2328 = vmatprep.subr.mxu0 0.0
    %2329 = vmatpush1.msra.mxu0 0.0
    %2330 = vmatprep.subr.mxu0 0.0
    %2331 = vmatpush1.msra.mxu0 0.0
    %2332 = vmatprep.subr.mxu0 0.0
    %2333 = vmatpush1.msra.mxu0 0.0
    %2334 = vmatprep.subr.mxu0 0.0
    %2335 = vmatpush1.msra.mxu0 0.0
    %2336 = vmatprep.subr.mxu0 0.0
    %2337 = vmatpush1.msra.mxu0 0.0
    %2338 = vmatprep.subr.mxu0 0.0
    %2339 = vmatpush1.msra.mxu0 0.0
    %2340 = vmatprep.subr.mxu0 0.0
    %2341 = vmatpush1.msra.mxu0 0.0
    %2342 = vmatprep.subr.mxu0 0.0
    %2343 = vmatpush1.msra.mxu0 0.0
    %2344 = vmatprep.subr.mxu0 0.0
    %2345 = vmatpush1.msra.mxu0 0.0
    %2346 = vmatprep.subr.mxu0 0.0
    %2347 = vmatpush1.msra.mxu0 0.0
    %2348 = vmatprep.subr.mxu0 0.0
    %2349 = vmatpush1.msra.mxu0 0.0
    %2350 = vmatprep.subr.mxu0 0.0
    %2351 = vmatpush1.msra.mxu0 0.0
    %2352 = vmatprep.subr.mxu0 0.0
    %2353 = vmatpush1.msra.mxu0 0.0
    %2354 = vmatprep.subr.mxu0 0.0
    %2355 = vmatpush1.msra.mxu0 0.0
    %2356 = vmatprep.subr.mxu0 0.0
    %2357 = vmatpush1.msra.mxu0 0.0
    %2358 = vmatprep.subr.mxu0 0.0
    %2359 = vmatpush1.msra.mxu0 0.0
    %2360 = vmatprep.subr.mxu0 0.0
    %2361 = vmatpush1.msra.mxu0 0.0
    %2362 = vmatprep.subr.mxu0 0.0
    %2363 = vmatpush1.msra.mxu0 0.0
    %2364 = vmatprep.subr.mxu0 0.0
    %2365 = vmatpush1.msra.mxu0 0.0
    %2366 = vmatprep.subr.mxu0 0.0
    %2367 = vmatpush1.msra.mxu0 0.0
    %2368 = vmatprep.subr.mxu0 0.0
    %2369 = vmatpush1.msra.mxu0 0.0
    %2370 = vmatprep.subr.mxu0 0.0
    %2371 = vmatpush1.msra.mxu0 0.0
    %2372 = vmatprep.subr.mxu0 0.0
    %2373 = vmatpush1.msra.mxu0 0.0
    %2374 = vmatprep.mubr.f32.mxu0 0.0
    %2375 = vmatmul.mubr.f32.gmra.mrb[0].mxu0 %v2145
    %v2376 = vpop.f32.mrb[0].mxu0
    %v2377 = vadd.f32 0.0, %v2376
    %v2378 = vpop.f32.mrb[0].mxu0
    %2379 = vdwg.mxu0
    %2380 = vmatprep.subr.mxu0 0.0
    %2381 = vmatpush1.msra.mxu0 %v2300
    %2382 = vmatprep.subr.mxu0 0.0
    %2383 = vmatpush1.msra.mxu0 %v2301
    %2384 = vmatprep.subr.mxu0 0.0
    %2385 = vmatpush1.msra.mxu0 %v2302
    %2386 = vmatprep.subr.mxu0 0.0
    %2387 = vmatpush1.msra.mxu0 %v2303
    %2388 = vmatprep.subr.mxu0 0.0
    %2389 = vmatpush1.msra.mxu0 %v2304
    %2390 = vmatprep.subr.mxu0 0.0
    %2391 = vmatpush1.msra.mxu0 0.0
    %2392 = vmatprep.subr.mxu0 0.0
    %2393 = vmatpush1.msra.mxu0 0.0
    %2394 = vmatprep.subr.mxu0 0.0
    %2395 = vmatpush1.msra.mxu0 0.0
    %2396 = vmatprep.subr.mxu0 0.0
    %2397 = vmatpush1.msra.mxu0 0.0
    %2398 = vmatprep.subr.mxu0 0.0
    %2399 = vmatpush1.msra.mxu0 0.0
    %2400 = vmatprep.subr.mxu0 0.0
    %2401 = vmatpush1.msra.mxu0 0.0
    %2402 = vmatprep.subr.mxu0 0.0
    %2403 = vmatpush1.msra.mxu0 0.0
    %2404 = vmatprep.subr.mxu0 0.0
    %2405 = vmatpush1.msra.mxu0 0.0
    %2406 = vmatprep.subr.mxu0 0.0
    %2407 = vmatpush1.msra.mxu0 0.0
    %2408 = vmatprep.subr.mxu0 0.0
    %2409 = vmatpush1.msra.mxu0 0.0
    %2410 = vmatprep.subr.mxu0 0.0
    %2411 = vmatpush1.msra.mxu0 0.0
    %2412 = vmatprep.subr.mxu0 0.0
    %2413 = vmatpush1.msra.mxu0 0.0
    %2414 = vmatprep.subr.mxu0 0.0
    %2415 = vmatpush1.msra.mxu0 0.0
    %2416 = vmatprep.subr.mxu0 0.0
    %2417 = vmatpush1.msra.mxu0 0.0
    %2418 = vmatprep.subr.mxu0 0.0
    %2419 = vmatpush1.msra.mxu0 0.0
    %2420 = vmatprep.subr.mxu0 0.0
    %2421 = vmatpush1.msra.mxu0 0.0
    %2422 = vmatprep.subr.mxu0 0.0
    %2423 = vmatpush1.msra.mxu0 0.0
    %2424 = vmatprep.subr.mxu0 0.0
    %2425 = vmatpush1.msra.mxu0 0.0
    %2426 = vmatprep.subr.mxu0 0.0
    %2427 = vmatpush1.msra.mxu0 0.0
    %2428 = vmatprep.subr.mxu0 0.0
    %2429 = vmatpush1.msra.mxu0 0.0
    %2430 = vmatprep.subr.mxu0 0.0
    %2431 = vmatpush1.msra.mxu0 0.0
    %2432 = vmatprep.subr.mxu0 0.0
    %2433 = vmatpush1.msra.mxu0 0.0
    %2434 = vmatprep.subr.mxu0 0.0
    %2435 = vmatpush1.msra.mxu0 0.0
    %2436 = vmatprep.subr.mxu0 0.0
    %2437 = vmatpush1.msra.mxu0 0.0
    %2438 = vmatprep.subr.mxu0 0.0
    %2439 = vmatpush1.msra.mxu0 0.0
    %2440 = vmatprep.subr.mxu0 0.0
    %2441 = vmatpush1.msra.mxu0 0.0
    %2442 = vmatprep.subr.mxu0 0.0
    %2443 = vmatpush1.msra.mxu0 0.0
    %2444 = vmatprep.mubr.f32.mxu0 0.0
    %2445 = vmatmul.mubr.f32.gmra.mrb[0].mxu0 %v2217
    %v2446 = vpop.f32.mrb[0].mxu0
    %v2447 = vadd.f32 %v2377, %v2446
    %v2448 = vpop.f32.mrb[0].mxu0
    %2449 = vdwg.mxu0
    %v2450 = vlaneseq
    %v2451 = vshrl.u32 %v2450, 7
    %v2452 = vsub.s32 2, %v2451
    %v2453 = vrot.slane %v847, %v2452
    %v2454 = vadd.f32 %v2447, %v2453
    %v2455 = vxor.u32 %v2454, 2147483648
    %v2456 = vmul.f32 %v2455, 1.442695
    %v2457 = vpow.pop %v2456
    %v2458 = vadd.f32 %v2457, 1.0
    %v2459 = vrcp.pop %v2458
    %v2460 = vmul.f32 1.0, %v2459
    %v2461 = vmul.f32 %v2129, %v2299
    %v2463 = vrot.slane %v2460, 6
    %v2465 = vmul.f32 %v2129, %v2463
    %v2466 = vld [vmem:[%s7 + $0x1c0] sm:$0x7]
    %v2467 = vld [vmem:[%s7 + $0x1c8] sm:$0x7]
    %v2468 = vld [vmem:[%s7 + $0x1d0] sm:$0x7]
    %v2469 = vld [vmem:[%s7 + $0x1d8] sm:$0x7]
    %v2470 = vld [vmem:[%s7] sm:$0xff]
    %v2471 = vld [vmem:[%s7 + $0x8] sm:$0xff]
    %v2472 = vld [vmem:[%s7 + $0x10] sm:$0xff]
    %v2473 = vld [vmem:[%s7 + $0x18] sm:$0xff]
    %v2474 = vld [vmem:[%s7 + $0x20] sm:$0xff]
    %v2475 = vld [vmem:[%s7 + $0x28] sm:$0xff]
    %v2476 = vld [vmem:[%s7 + $0x30] sm:$0xff]
    %v2477 = vld [vmem:[%s7 + $0x38] sm:$0xff]
    %v2478 = vld [vmem:[%s7 + $0x40] sm:$0xff]
    %v2479 = vld [vmem:[%s7 + $0x48] sm:$0xff]
    %v2480 = vld [vmem:[%s7 + $0x50] sm:$0xff]
    %v2481 = vld [vmem:[%s7 + $0x58] sm:$0xff]
    %v2482 = vld [vmem:[%s7 + $0x60] sm:$0xff]
    %v2483 = vld [vmem:[%s7 + $0x68] sm:$0xff]
    %v2484 = vld [vmem:[%s7 + $0x70] sm:$0xff]
    %v2485 = vld [vmem:[%s7 + $0x78] sm:$0xff]
    %v2486 = vld [vmem:[%s7 + $0x80] sm:$0xff]
    %v2487 = vld [vmem:[%s7 + $0x88] sm:$0xff]
    %v2488 = vld [vmem:[%s7 + $0x90] sm:$0xff]
    %v2489 = vld [vmem:[%s7 + $0x98] sm:$0xff]
    %v2490 = vld [vmem:[%s7 + $0xa0] sm:$0xff]
    %v2491 = vld [vmem:[%s7 + $0xa8] sm:$0xff]
    %v2492 = vld [vmem:[%s7 + $0xb0] sm:$0xff]
    %v2493 = vld [vmem:[%s7 + $0xb8] sm:$0xff]
    %v2494 = vld [vmem:[%s7 + $0xc0] sm:$0xff]
    %v2495 = vld [vmem:[%s7 + $0xc8] sm:$0xff]
    %v2496 = vld [vmem:[%s7 + $0xd0] sm:$0xff]
    %v2497 = vld [vmem:[%s7 + $0xd8] sm:$0xff]
    %v2498 = vld [vmem:[%s7 + $0xe0] sm:$0xff]
    %v2499 = vld [vmem:[%s7 + $0xe8] sm:$0xff]
    %v2500 = vld [vmem:[%s7 + $0xf0] sm:$0xff]
    %v2501 = vld [vmem:[%s7 + $0xf8] sm:$0xff]
    %v2502 = vld [vmem:[%s7 + $0x100] sm:$0xff]
    %v2503 = vld [vmem:[%s7 + $0x108] sm:$0xff]
    %v2504 = vld [vmem:[%s7 + $0x110] sm:$0xff]
    %v2505 = vld [vmem:[%s7 + $0x118] sm:$0xff]
    %v2507 = vsel %vm2144, %v2461, 0
    %2509 = vmatprep.subr.mxu0 %v2487
    %2510 = vmatpush1.msra.mxu0 %v2486
    %2511 = vmatprep.subr.mxu0 %v2491
    %2512 = vmatpush1.msra.mxu0 %v2490
    %2513 = vmatprep.subr.mxu0 %v2495
    %2514 = vmatpush1.msra.mxu0 %v2494
    %2515 = vmatprep.subr.mxu0 %v2499
    %2516 = vmatpush1.msra.mxu0 %v2498
    %2517 = vmatprep.subr.mxu0 %v2503
    %2518 = vmatpush1.msra.mxu0 %v2502
    %2519 = vmatprep.subr.mxu0 0.0
    %2520 = vmatpush1.msra.mxu0 0.0
    %2521 = vmatprep.subr.mxu0 0.0
    %2522 = vmatpush1.msra.mxu0 0.0
    %2523 = vmatprep.subr.mxu0 0.0
    %2524 = vmatpush1.msra.mxu0 0.0
    %2525 = vmatprep.subr.mxu0 0.0
    %2526 = vmatpush1.msra.mxu0 0.0
    %2527 = vmatprep.subr.mxu0 0.0
    %2528 = vmatpush1.msra.mxu0 0.0
    %2529 = vmatprep.subr.mxu0 0.0
    %2530 = vmatpush1.msra.mxu0 0.0
    %2531 = vmatprep.subr.mxu0 0.0
    %2532 = vmatpush1.msra.mxu0 0.0
    %2533 = vmatprep.subr.mxu0 0.0
    %2534 = vmatpush1.msra.mxu0 0.0
    %2535 = vmatprep.subr.mxu0 0.0
    %2536 = vmatpush1.msra.mxu0 0.0
    %2537 = vmatprep.subr.mxu0 0.0
    %2538 = vmatpush1.msra.mxu0 0.0
    %2539 = vmatprep.subr.mxu0 0.0
    %2540 = vmatpush1.msra.mxu0 0.0
    %2541 = vmatprep.subr.mxu0 0.0
    %2542 = vmatpush1.msra.mxu0 0.0
    %2543 = vmatprep.subr.mxu0 0.0
    %2544 = vmatpush1.msra.mxu0 0.0
    %2545 = vmatprep.subr.mxu0 0.0
    %2546 = vmatpush1.msra.mxu0 0.0
    %2547 = vmatprep.subr.mxu0 0.0
    %2548 = vmatpush1.msra.mxu0 0.0
    %2549 = vmatprep.subr.mxu0 0.0
    %2550 = vmatpush1.msra.mxu0 0.0
    %2551 = vmatprep.subr.mxu0 0.0
    %2552 = vmatpush1.msra.mxu0 0.0
    %2553 = vmatprep.subr.mxu0 0.0
    %2554 = vmatpush1.msra.mxu0 0.0
    %2555 = vmatprep.subr.mxu0 0.0
    %2556 = vmatpush1.msra.mxu0 0.0
    %2557 = vmatprep.subr.mxu0 0.0
    %2558 = vmatpush1.msra.mxu0 0.0
    %2559 = vmatprep.subr.mxu0 0.0
    %2560 = vmatpush1.msra.mxu0 0.0
    %2561 = vmatprep.subr.mxu0 0.0
    %2562 = vmatpush1.msra.mxu0 0.0
    %2563 = vmatprep.subr.mxu0 0.0
    %2564 = vmatpush1.msra.mxu0 0.0
    %2565 = vmatprep.subr.mxu0 0.0
    %2566 = vmatpush1.msra.mxu0 0.0
    %2567 = vmatprep.subr.mxu0 0.0
    %2568 = vmatpush1.msra.mxu0 0.0
    %2569 = vmatprep.subr.mxu0 0.0
    %2570 = vmatpush1.msra.mxu0 0.0
    %2571 = vmatprep.subr.mxu0 0.0
    %2572 = vmatpush1.msra.mxu0 0.0
    %2573 = vmatprep.mubr.f32.mxu0 0.0
    %2574 = vmatmul.mubr.f32.gmra.mrb[0].mxu0 %v2507
    %v2575 = vpop.f32.mrb[0].mxu0
    %v2576 = vadd.f32 0.0, %v2575
    %v2577 = vpop.f32.mrb[0].mxu0
    %v2578 = vadd.f32 0.0, %v2577
    %2579 = vdwg.mxu0
    %2580 = vmatprep.subr.mxu0 %v2489
    %2581 = vmatpush1.msra.mxu0 %v2488
    %2582 = vmatprep.subr.mxu0 %v2493
    %2583 = vmatpush1.msra.mxu0 %v2492
    %2584 = vmatprep.subr.mxu0 %v2497
    %2585 = vmatpush1.msra.mxu0 %v2496
    %2586 = vmatprep.subr.mxu0 %v2501
    %2587 = vmatpush1.msra.mxu0 %v2500
    %2588 = vmatprep.subr.mxu0 %v2505
    %2589 = vmatpush1.msra.mxu0 %v2504
    %2590 = vmatprep.subr.mxu0 0.0
    %2591 = vmatpush1.msra.mxu0 0.0
    %2592 = vmatprep.subr.mxu0 0.0
    %2593 = vmatpush1.msra.mxu0 0.0
    %2594 = vmatprep.subr.mxu0 0.0
    %2595 = vmatpush1.msra.mxu0 0.0
    %2596 = vmatprep.subr.mxu0 0.0
    %2597 = vmatpush1.msra.mxu0 0.0
    %2598 = vmatprep.subr.mxu0 0.0
    %2599 = vmatpush1.msra.mxu0 0.0
    %2600 = vmatprep.subr.mxu0 0.0
    %2601 = vmatpush1.msra.mxu0 0.0
    %2602 = vmatprep.subr.mxu0 0.0
    %2603 = vmatpush1.msra.mxu0 0.0
    %2604 = vmatprep.subr.mxu0 0.0
    %2605 = vmatpush1.msra.mxu0 0.0
    %2606 = vmatprep.subr.mxu0 0.0
    %2607 = vmatpush1.msra.mxu0 0.0
    %2608 = vmatprep.subr.mxu0 0.0
    %2609 = vmatpush1.msra.mxu0 0.0
    %2610 = vmatprep.subr.mxu0 0.0
    %2611 = vmatpush1.msra.mxu0 0.0
    %2612 = vmatprep.subr.mxu0 0.0
    %2613 = vmatpush1.msra.mxu0 0.0
    %2614 = vmatprep.subr.mxu0 0.0
    %2615 = vmatpush1.msra.mxu0 0.0
    %2616 = vmatprep.subr.mxu0 0.0
    %2617 = vmatpush1.msra.mxu0 0.0
    %2618 = vmatprep.subr.mxu0 0.0
    %2619 = vmatpush1.msra.mxu0 0.0
    %2620 = vmatprep.subr.mxu0 0.0
    %2621 = vmatpush1.msra.mxu0 0.0
    %2622 = vmatprep.subr.mxu0 0.0
    %2623 = vmatpush1.msra.mxu0 0.0
    %2624 = vmatprep.subr.mxu0 0.0
    %2625 = vmatpush1.msra.mxu0 0.0
    %2626 = vmatprep.subr.mxu0 0.0
    %2627 = vmatpush1.msra.mxu0 0.0
    %2628 = vmatprep.subr.mxu0 0.0
    %2629 = vmatpush1.msra.mxu0 0.0
    %2630 = vmatprep.subr.mxu0 0.0
    %2631 = vmatpush1.msra.mxu0 0.0
    %2632 = vmatprep.subr.mxu0 0.0
    %2633 = vmatpush1.msra.mxu0 0.0
    %2634 = vmatprep.subr.mxu0 0.0
    %2635 = vmatpush1.msra.mxu0 0.0
    %2636 = vmatprep.subr.mxu0 0.0
    %2637 = vmatpush1.msra.mxu0 0.0
    %2638 = vmatprep.subr.mxu0 0.0
    %2639 = vmatpush1.msra.mxu0 0.0
    %2640 = vmatprep.subr.mxu0 0.0
    %2641 = vmatpush1.msra.mxu0 0.0
    %2642 = vmatprep.subr.mxu0 0.0
    %2643 = vmatpush1.msra.mxu0 0.0
    %2644 = vmatprep.mubr.f32.mxu0 0.0
    %2645 = vmatmul.mubr.f32.gmra.mrb[0].mxu0 %v2507
    %v2646 = vpop.f32.mrb[0].mxu0
    %v2647 = vadd.f32 0.0, %v2646
    %v2648 = vpop.f32.mrb[0].mxu0
    %v2649 = vadd.f32 0.0, %v2648
    %2650 = vdwg.mxu0
    %v2652 = vsel %vm210, %v842, 0
    %2654 = vmatprep.subr.mxu0 %v2471
    %2655 = vmatpush1.msra.mxu0 %v2470
    %2656 = vmatprep.subr.mxu0 %v2475
    %2657 = vmatpush1.msra.mxu0 %v2474
    %2658 = vmatprep.subr.mxu0 %v2479
    %2659 = vmatpush1.msra.mxu0 %v2478
    %2660 = vmatprep.subr.mxu0 %v2483
    %2661 = vmatpush1.msra.mxu0 %v2482
    %2662 = vmatprep.subr.mxu0 0.0
    %2663 = vmatpush1.msra.mxu0 0.0
    %2664 = vmatprep.subr.mxu0 0.0
    %2665 = vmatpush1.msra.mxu0 0.0
    %2666 = vmatprep.subr.mxu0 0.0
    %2667 = vmatpush1.msra.mxu0 0.0
    %2668 = vmatprep.subr.mxu0 0.0
    %2669 = vmatpush1.msra.mxu0 0.0
    %2670 = vmatprep.subr.mxu0 0.0
    %2671 = vmatpush1.msra.mxu0 0.0
    %2672 = vmatprep.subr.mxu0 0.0
    %2673 = vmatpush1.msra.mxu0 0.0
    %2674 = vmatprep.subr.mxu0 0.0
    %2675 = vmatpush1.msra.mxu0 0.0
    %2676 = vmatprep.subr.mxu0 0.0
    %2677 = vmatpush1.msra.mxu0 0.0
    %2678 = vmatprep.subr.mxu0 0.0
    %2679 = vmatpush1.msra.mxu0 0.0
    %2680 = vmatprep.subr.mxu0 0.0
    %2681 = vmatpush1.msra.mxu0 0.0
    %2682 = vmatprep.subr.mxu0 0.0
    %2683 = vmatpush1.msra.mxu0 0.0
    %2684 = vmatprep.subr.mxu0 0.0
    %2685 = vmatpush1.msra.mxu0 0.0
    %2686 = vmatprep.subr.mxu0 0.0
    %2687 = vmatpush1.msra.mxu0 0.0
    %2688 = vmatprep.subr.mxu0 0.0
    %2689 = vmatpush1.msra.mxu0 0.0
    %2690 = vmatprep.subr.mxu0 0.0
    %2691 = vmatpush1.msra.mxu0 0.0
    %2692 = vmatprep.subr.mxu0 0.0
    %2693 = vmatpush1.msra.mxu0 0.0
    %2694 = vmatprep.subr.mxu0 0.0
    %2695 = vmatpush1.msra.mxu0 0.0
    %2696 = vmatprep.subr.mxu0 0.0
    %2697 = vmatpush1.msra.mxu0 0.0
    %2698 = vmatprep.subr.mxu0 0.0
    %2699 = vmatpush1.msra.mxu0 0.0
    %2700 = vmatprep.subr.mxu0 0.0
    %2701 = vmatpush1.msra.mxu0 0.0
    %2702 = vmatprep.subr.mxu0 0.0
    %2703 = vmatpush1.msra.mxu0 0.0
    %2704 = vmatprep.subr.mxu0 0.0
    %2705 = vmatpush1.msra.mxu0 0.0
    %2706 = vmatprep.subr.mxu0 0.0
    %2707 = vmatpush1.msra.mxu0 0.0
    %2708 = vmatprep.subr.mxu0 0.0
    %2709 = vmatpush1.msra.mxu0 0.0
    %2710 = vmatprep.subr.mxu0 0.0
    %2711 = vmatpush1.msra.mxu0 0.0
    %2712 = vmatprep.subr.mxu0 0.0
    %2713 = vmatpush1.msra.mxu0 0.0
    %2714 = vmatprep.subr.mxu0 0.0
    %2715 = vmatpush1.msra.mxu0 0.0
    %2716 = vmatprep.subr.mxu0 0.0
    %2717 = vmatpush1.msra.mxu0 0.0
    %2718 = vmatprep.mubr.f32.mxu0 0.0
    %2719 = vmatmul.mubr.f32.gmra.mrb[0].mxu0 %v2652
    %v2720 = vpop.f32.mrb[0].mxu0
    %v2721 = vadd.f32 %v2576, %v2720
    %v2722 = vpop.f32.mrb[0].mxu0
    %v2723 = vadd.f32 %v2578, %v2722
    %2724 = vdwg.mxu0
    %2725 = vmatprep.subr.mxu0 %v2473
    %2726 = vmatpush1.msra.mxu0 %v2472
    %2727 = vmatprep.subr.mxu0 %v2477
    %2728 = vmatpush1.msra.mxu0 %v2476
    %2729 = vmatprep.subr.mxu0 %v2481
    %2730 = vmatpush1.msra.mxu0 %v2480
    %2731 = vmatprep.subr.mxu0 %v2485
    %2732 = vmatpush1.msra.mxu0 %v2484
    %2733 = vmatprep.subr.mxu0 0.0
    %2734 = vmatpush1.msra.mxu0 0.0
    %2735 = vmatprep.subr.mxu0 0.0
    %2736 = vmatpush1.msra.mxu0 0.0
    %2737 = vmatprep.subr.mxu0 0.0
    %2738 = vmatpush1.msra.mxu0 0.0
    %2739 = vmatprep.subr.mxu0 0.0
    %2740 = vmatpush1.msra.mxu0 0.0
    %2741 = vmatprep.subr.mxu0 0.0
    %2742 = vmatpush1.msra.mxu0 0.0
    %2743 = vmatprep.subr.mxu0 0.0
    %2744 = vmatpush1.msra.mxu0 0.0
    %2745 = vmatprep.subr.mxu0 0.0
    %2746 = vmatpush1.msra.mxu0 0.0
    %2747 = vmatprep.subr.mxu0 0.0
    %2748 = vmatpush1.msra.mxu0 0.0
    %2749 = vmatprep.subr.mxu0 0.0
    %2750 = vmatpush1.msra.mxu0 0.0
    %2751 = vmatprep.subr.mxu0 0.0
    %2752 = vmatpush1.msra.mxu0 0.0
    %2753 = vmatprep.subr.mxu0 0.0
    %2754 = vmatpush1.msra.mxu0 0.0
    %2755 = vmatprep.subr.mxu0 0.0
    %2756 = vmatpush1.msra.mxu0 0.0
    %2757 = vmatprep.subr.mxu0 0.0
    %2758 = vmatpush1.msra.mxu0 0.0
    %2759 = vmatprep.subr.mxu0 0.0
    %2760 = vmatpush1.msra.mxu0 0.0
    %2761 = vmatprep.subr.mxu0 0.0
    %2762 = vmatpush1.msra.mxu0 0.0
    %2763 = vmatprep.subr.mxu0 0.0
    %2764 = vmatpush1.msra.mxu0 0.0
    %2765 = vmatprep.subr.mxu0 0.0
    %2766 = vmatpush1.msra.mxu0 0.0
    %2767 = vmatprep.subr.mxu0 0.0
    %2768 = vmatpush1.msra.mxu0 0.0
    %2769 = vmatprep.subr.mxu0 0.0
    %2770 = vmatpush1.msra.mxu0 0.0
    %2771 = vmatprep.subr.mxu0 0.0
    %2772 = vmatpush1.msra.mxu0 0.0
    %2773 = vmatprep.subr.mxu0 0.0
    %2774 = vmatpush1.msra.mxu0 0.0
    %2775 = vmatprep.subr.mxu0 0.0
    %2776 = vmatpush1.msra.mxu0 0.0
    %2777 = vmatprep.subr.mxu0 0.0
    %2778 = vmatpush1.msra.mxu0 0.0
    %2779 = vmatprep.subr.mxu0 0.0
    %2780 = vmatpush1.msra.mxu0 0.0
    %2781 = vmatprep.subr.mxu0 0.0
    %2782 = vmatpush1.msra.mxu0 0.0
    %2783 = vmatprep.subr.mxu0 0.0
    %2784 = vmatpush1.msra.mxu0 0.0
    %2785 = vmatprep.subr.mxu0 0.0
    %2786 = vmatpush1.msra.mxu0 0.0
    %2787 = vmatprep.subr.mxu0 0.0
    %2788 = vmatpush1.msra.mxu0 0.0
    %2789 = vmatprep.mubr.f32.mxu0 0.0
    %2790 = vmatmul.mubr.f32.gmra.mrb[0].mxu0 %v2652
    %v2791 = vpop.f32.mrb[0].mxu0
    %v2792 = vadd.f32 %v2647, %v2791
    %v2793 = vpop.f32.mrb[0].mxu0
    %v2794 = vadd.f32 %v2649, %v2793
    %2795 = vdwg.mxu0
    %v2796 = vld [vmem:[%s7 + $0x120] sm:$0xff]
    %v2797 = vld [vmem:[%s7 + $0x128] sm:$0xff]
    %v2798 = vld [vmem:[%s7 + $0x130] sm:$0xff]
    %v2799 = vld [vmem:[%s7 + $0x138] sm:$0xff]
    %v2800 = vld [vmem:[%s7 + $0x140] sm:$0xff]
    %v2801 = vld [vmem:[%s7 + $0x148] sm:$0xff]
    %v2802 = vld [vmem:[%s7 + $0x150] sm:$0xff]
    %v2803 = vld [vmem:[%s7 + $0x158] sm:$0xff]
    %v2804 = vld [vmem:[%s7 + $0x160] sm:$0xff]
    %v2805 = vld [vmem:[%s7 + $0x168] sm:$0xff]
    %v2806 = vld [vmem:[%s7 + $0x170] sm:$0xff]
    %v2807 = vld [vmem:[%s7 + $0x178] sm:$0xff]
    %v2808 = vld [vmem:[%s7 + $0x180] sm:$0xff]
    %v2809 = vld [vmem:[%s7 + $0x188] sm:$0xff]
    %v2810 = vld [vmem:[%s7 + $0x190] sm:$0xff]
    %v2811 = vld [vmem:[%s7 + $0x198] sm:$0xff]
    %v2812 = vld [vmem:[%s7 + $0x1a0] sm:$0xff]
    %v2813 = vld [vmem:[%s7 + $0x1a8] sm:$0xff]
    %v2814 = vld [vmem:[%s7 + $0x1b0] sm:$0xff]
    %v2815 = vld [vmem:[%s7 + $0x1b8] sm:$0xff]
    %v2817 = vrot.slane %v2465, 2
    %v2818 = vsel %vm2144, %v2817, 0
    %2820 = vmatprep.subr.mxu0 %v2797
    %2821 = vmatpush1.msra.mxu0 %v2796
    %2822 = vmatprep.subr.mxu0 %v2801
    %2823 = vmatpush1.msra.mxu0 %v2800
    %2824 = vmatprep.subr.mxu0 %v2805
    %2825 = vmatpush1.msra.mxu0 %v2804
    %2826 = vmatprep.subr.mxu0 %v2809
    %2827 = vmatpush1.msra.mxu0 %v2808
    %2828 = vmatprep.subr.mxu0 %v2813
    %2829 = vmatpush1.msra.mxu0 %v2812
    %2830 = vmatprep.subr.mxu0 0.0
    %2831 = vmatpush1.msra.mxu0 0.0
    %2832 = vmatprep.subr.mxu0 0.0
    %2833 = vmatpush1.msra.mxu0 0.0
    %2834 = vmatprep.subr.mxu0 0.0
    %2835 = vmatpush1.msra.mxu0 0.0
    %2836 = vmatprep.subr.mxu0 0.0
    %2837 = vmatpush1.msra.mxu0 0.0
    %2838 = vmatprep.subr.mxu0 0.0
    %2839 = vmatpush1.msra.mxu0 0.0
    %2840 = vmatprep.subr.mxu0 0.0
    %2841 = vmatpush1.msra.mxu0 0.0
    %2842 = vmatprep.subr.mxu0 0.0
    %2843 = vmatpush1.msra.mxu0 0.0
    %2844 = vmatprep.subr.mxu0 0.0
    %2845 = vmatpush1.msra.mxu0 0.0
    %2846 = vmatprep.subr.mxu0 0.0
    %2847 = vmatpush1.msra.mxu0 0.0
    %2848 = vmatprep.subr.mxu0 0.0
    %2849 = vmatpush1.msra.mxu0 0.0
    %2850 = vmatprep.subr.mxu0 0.0
    %2851 = vmatpush1.msra.mxu0 0.0
    %2852 = vmatprep.subr.mxu0 0.0
    %2853 = vmatpush1.msra.mxu0 0.0
    %2854 = vmatprep.subr.mxu0 0.0
    %2855 = vmatpush1.msra.mxu0 0.0
    %2856 = vmatprep.subr.mxu0 0.0
    %2857 = vmatpush1.msra.mxu0 0.0
    %2858 = vmatprep.subr.mxu0 0.0
    %2859 = vmatpush1.msra.mxu0 0.0
    %2860 = vmatprep.subr.mxu0 0.0
    %2861 = vmatpush1.msra.mxu0 0.0
    %2862 = vmatprep.subr.mxu0 0.0
    %2863 = vmatpush1.msra.mxu0 0.0
    %2864 = vmatprep.subr.mxu0 0.0
    %2865 = vmatpush1.msra.mxu0 0.0
    %2866 = vmatprep.subr.mxu0 0.0
    %2867 = vmatpush1.msra.mxu0 0.0
    %2868 = vmatprep.subr.mxu0 0.0
    %2869 = vmatpush1.msra.mxu0 0.0
    %2870 = vmatprep.subr.mxu0 0.0
    %2871 = vmatpush1.msra.mxu0 0.0
    %2872 = vmatprep.subr.mxu0 0.0
    %2873 = vmatpush1.msra.mxu0 0.0
    %2874 = vmatprep.subr.mxu0 0.0
    %2875 = vmatpush1.msra.mxu0 0.0
    %2876 = vmatprep.subr.mxu0 0.0
    %2877 = vmatpush1.msra.mxu0 0.0
    %2878 = vmatprep.subr.mxu0 0.0
    %2879 = vmatpush1.msra.mxu0 0.0
    %2880 = vmatprep.subr.mxu0 0.0
    %2881 = vmatpush1.msra.mxu0 0.0
    %2882 = vmatprep.subr.mxu0 0.0
    %2883 = vmatpush1.msra.mxu0 0.0
    %2884 = vmatprep.mubr.f32.mxu0 0.0
    %2885 = vmatmul.mubr.f32.gmra.mrb[0].mxu0 %v2818
    %v2886 = vpop.f32.mrb[0].mxu0
    %v2887 = vadd.f32 0.0, %v2886
    %v2888 = vpop.f32.mrb[0].mxu0
    %v2889 = vadd.f32 0.0, %v2888
    %2890 = vdwg.mxu0
    %2891 = vmatprep.subr.mxu0 %v2799
    %2892 = vmatpush1.msra.mxu0 %v2798
    %2893 = vmatprep.subr.mxu0 %v2803
    %2894 = vmatpush1.msra.mxu0 %v2802
    %2895 = vmatprep.subr.mxu0 %v2807
    %2896 = vmatpush1.msra.mxu0 %v2806
    %2897 = vmatprep.subr.mxu0 %v2811
    %2898 = vmatpush1.msra.mxu0 %v2810
    %2899 = vmatprep.subr.mxu0 %v2815
    %2900 = vmatpush1.msra.mxu0 %v2814
    %2901 = vmatprep.subr.mxu0 0.0
    %2902 = vmatpush1.msra.mxu0 0.0
    %2903 = vmatprep.subr.mxu0 0.0
    %2904 = vmatpush1.msra.mxu0 0.0
    %2905 = vmatprep.subr.mxu0 0.0
    %2906 = vmatpush1.msra.mxu0 0.0
    %2907 = vmatprep.subr.mxu0 0.0
    %2908 = vmatpush1.msra.mxu0 0.0
    %2909 = vmatprep.subr.mxu0 0.0
    %2910 = vmatpush1.msra.mxu0 0.0
    %2911 = vmatprep.subr.mxu0 0.0
    %2912 = vmatpush1.msra.mxu0 0.0
    %2913 = vmatprep.subr.mxu0 0.0
    %2914 = vmatpush1.msra.mxu0 0.0
    %2915 = vmatprep.subr.mxu0 0.0
    %2916 = vmatpush1.msra.mxu0 0.0
    %2917 = vmatprep.subr.mxu0 0.0
    %2918 = vmatpush1.msra.mxu0 0.0
    %2919 = vmatprep.subr.mxu0 0.0
    %2920 = vmatpush1.msra.mxu0 0.0
    %2921 = vmatprep.subr.mxu0 0.0
    %2922 = vmatpush1.msra.mxu0 0.0
    %2923 = vmatprep.subr.mxu0 0.0
    %2924 = vmatpush1.msra.mxu0 0.0
    %2925 = vmatprep.subr.mxu0 0.0
    %2926 = vmatpush1.msra.mxu0 0.0
    %2927 = vmatprep.subr.mxu0 0.0
    %2928 = vmatpush1.msra.mxu0 0.0
    %2929 = vmatprep.subr.mxu0 0.0
    %2930 = vmatpush1.msra.mxu0 0.0
    %2931 = vmatprep.subr.mxu0 0.0
    %2932 = vmatpush1.msra.mxu0 0.0
    %2933 = vmatprep.subr.mxu0 0.0
    %2934 = vmatpush1.msra.mxu0 0.0
    %2935 = vmatprep.subr.mxu0 0.0
    %2936 = vmatpush1.msra.mxu0 0.0
    %2937 = vmatprep.subr.mxu0 0.0
    %2938 = vmatpush1.msra.mxu0 0.0
    %2939 = vmatprep.subr.mxu0 0.0
    %2940 = vmatpush1.msra.mxu0 0.0
    %2941 = vmatprep.subr.mxu0 0.0
    %2942 = vmatpush1.msra.mxu0 0.0
    %2943 = vmatprep.subr.mxu0 0.0
    %2944 = vmatpush1.msra.mxu0 0.0
    %2945 = vmatprep.subr.mxu0 0.0
    %2946 = vmatpush1.msra.mxu0 0.0
    %2947 = vmatprep.subr.mxu0 0.0
    %2948 = vmatpush1.msra.mxu0 0.0
    %2949 = vmatprep.subr.mxu0 0.0
    %2950 = vmatpush1.msra.mxu0 0.0
    %2951 = vmatprep.subr.mxu0 0.0
    %2952 = vmatpush1.msra.mxu0 0.0
    %2953 = vmatprep.subr.mxu0 0.0
    %2954 = vmatpush1.msra.mxu0 0.0
    %2955 = vmatprep.mubr.f32.mxu0 0.0
    %2956 = vmatmul.mubr.f32.gmra.mrb[0].mxu0 %v2818
    %v2957 = vpop.f32.mrb[0].mxu0
    %v2958 = vadd.f32 0.0, %v2957
    %v2959 = vpop.f32.mrb[0].mxu0
    %v2960 = vadd.f32 0.0, %v2959
    %2961 = vdwg.mxu0
    %v2962 = vadd.f32 %v2721, %v2887
    %v2963 = vadd.f32 %v2723, %v2889
    %v2964 = vadd.f32 %v2792, %v2958
    %v2965 = vadd.f32 %v2794, %v2960
    %v2966 = vlaneseq
    %v2967 = vshrl.u32 %v2966, 7
    %v2968 = vsub.s32 0, %v2967
    %v2969 = vrot.slane %v2466, %v2968
    %v2970 = vlaneseq
    %v2971 = vshrl.u32 %v2970, 7
    %v2972 = vsub.s32 0, %v2971
    %v2973 = vrot.slane %v2467, %v2972
    %v2974 = vlaneseq
    %v2975 = vshrl.u32 %v2974, 7
    %v2976 = vsub.s32 0, %v2975
    %v2977 = vrot.slane %v2468, %v2976
    %v2978 = vlaneseq
    %v2979 = vshrl.u32 %v2978, 7
    %v2980 = vsub.s32 0, %v2979
    %v2981 = vrot.slane %v2469, %v2980
    %v2982 = vadd.f32 %v2962, %v2969
    %v2983 = vadd.f32 %v2963, %v2973
    %v2984 = vadd.f32 %v2964, %v2977
    %v2985 = vadd.f32 %v2965, %v2981
    %v2986 = vmax.f32 %v2982, 0.0
    %v2987 = vmax.f32 %v2983, 0.0
    %v2988 = vmax.f32 %v2984, 0.0
    %v2989 = vmax.f32 %v2985, 0.0
    %v2990 = vsel %vm1129, %v2986, 0.0
    %v2991 = vsel %vm1129, %v2987, 0.0
    %v2992 = vadd.f32 %v2990, %v2991
    %v2993 = vsel %vm1129, %v2988, 0.0
    %v2994 = vadd.f32 %v2992, %v2993
    %v2995 = vsel %vm1129, %v2989, 0.0
    %v2996 = vadd.f32 %v2994, %v2995
    %2997 = vadd.xlane.f32.xlu0 %v2996
    %v2998 = vpop.xlane.xlu0 %2997
    %v2999 = vrcp.pop 512.0
    %v3000 = vmul.f32 %v2998, %v2999
    %v3001 = vsub.f32 %v2986, %v3000
    %v3002 = vsub.f32 %v2987, %v3000
    %v3003 = vsub.f32 %v2988, %v3000
    %v3004 = vsub.f32 %v2989, %v3000
    %v3005 = vmul.f32 %v3001, %v3001
    %v3006 = vmul.f32 %v3002, %v3002
    %v3007 = vmul.f32 %v3003, %v3003
    %v3008 = vmul.f32 %v3004, %v3004
    %v3009 = vsel %vm1129, %v3005, 0.0
    %v3010 = vsel %vm1129, %v3006, 0.0
    %v3011 = vadd.f32 %v3009, %v3010
    %v3012 = vsel %vm1129, %v3007, 0.0
    %v3013 = vadd.f32 %v3011, %v3012
    %v3014 = vsel %vm1129, %v3008, 0.0
    %v3015 = vadd.f32 %v3013, %v3014
    %3016 = vadd.xlane.f32.xlu0 %v3015
    %v3017 = vpop.xlane.xlu0 %3016
    %v3018 = vmul.f32 %v3017, %v2999
    %v3019 = vadd.f32 %v3018, 1e-05
    %v3020 = vrsqrt.pop %v3019
    %v3021 = vmul.f32 %v3001, %v3020
    %v3022 = vmul.f32 %v3002, %v3020
    %v3023 = vmul.f32 %v3003, %v3020
    %v3024 = vmul.f32 %v3004, %v3020
    %v3025 = vlaneseq
    %v3026 = vshrl.u32 %v3025, 7
    %v3027 = vsub.s32 1, %v3026
    %v3028 = vrot.slane %v2466, %v3027
    %v3029 = vlaneseq
    %v3030 = vshrl.u32 %v3029, 7
    %v3031 = vsub.s32 1, %v3030
    %v3032 = vrot.slane %v2467, %v3031
    %v3033 = vlaneseq
    %v3034 = vshrl.u32 %v3033, 7
    %v3035 = vsub.s32 1, %v3034
    %v3036 = vrot.slane %v2468, %v3035
    %v3037 = vlaneseq
    %v3038 = vshrl.u32 %v3037, 7
    %v3039 = vsub.s32 1, %v3038
    %v3040 = vrot.slane %v2469, %v3039
    %v3041 = vmul.f32 %v3021, %v3028
    %v3042 = vmul.f32 %v3022, %v3032
    %v3043 = vmul.f32 %v3023, %v3036
    %v3044 = vmul.f32 %v3024, %v3040
    %v3045 = vlaneseq
    %v3046 = vshrl.u32 %v3045, 7
    %v3047 = vsub.s32 2, %v3046
    %v3048 = vrot.slane %v2466, %v3047
    %v3049 = vlaneseq
    %v3050 = vshrl.u32 %v3049, 7
    %v3051 = vsub.s32 2, %v3050
    %v3052 = vrot.slane %v2467, %v3051
    %v3053 = vlaneseq
    %v3054 = vshrl.u32 %v3053, 7
    %v3055 = vsub.s32 2, %v3054
    %v3056 = vrot.slane %v2468, %v3055
    %v3057 = vlaneseq
    %v3058 = vshrl.u32 %v3057, 7
    %v3059 = vsub.s32 2, %v3058
    %v3060 = vrot.slane %v2469, %v3059
    %v3061 = vadd.f32 %v3041, %v3048
    %v3062 = vadd.f32 %v3042, %v3052
    %v3063 = vadd.f32 %v3043, %v3056
    %v3064 = vadd.f32 %v3044, %v3060
    %v3065 = vld [vmem:[%s4 + $0x100] sm:$0xff]
    %v3066 = vld [vmem:[%s4 + $0x108] sm:$0xff]
    %v3067 = vld [vmem:[%s4 + $0x110] sm:$0xff]
    %v3068 = vld [vmem:[%s4 + $0x118] sm:$0xff]
    %v3069 = vld [vmem:[%s4 + $0x120] sm:$0xff]
    %v3070 = vld [vmem:[%s4 + $0x128] sm:$0xff]
    %v3071 = vld [vmem:[%s4 + $0x130] sm:$0xff]
    %v3072 = vld [vmem:[%s4 + $0x138] sm:$0xff]
    %v3073 = vld [vmem:[%s4 + $0x140] sm:$0xff]
    %v3074 = vld [vmem:[%s4 + $0x148] sm:$0xff]
    %v3075 = vld [vmem:[%s4 + $0x150] sm:$0xff]
    %v3076 = vld [vmem:[%s4 + $0x158] sm:$0xff]
    %v3077 = vld [vmem:[%s4 + $0x160] sm:$0xff]
    %v3078 = vld [vmem:[%s4 + $0x168] sm:$0xff]
    %v3079 = vld [vmem:[%s4 + $0x170] sm:$0xff]
    %v3080 = vld [vmem:[%s4 + $0x178] sm:$0xff]
    %v3081 = vld [vmem:[%s4 + $0x180] sm:$0xff]
    %v3082 = vld [vmem:[%s4 + $0x188] sm:$0xff]
    %v3083 = vld [vmem:[%s4 + $0x190] sm:$0xff]
    %v3084 = vld [vmem:[%s4 + $0x198] sm:$0xff]
    %v3085 = vld [vmem:[%s4 + $0x1a0] sm:$0xff]
    %v3086 = vld [vmem:[%s4 + $0x1a8] sm:$0xff]
    %v3087 = vld [vmem:[%s4 + $0x1b0] sm:$0xff]
    %v3088 = vld [vmem:[%s4 + $0x1b8] sm:$0xff]
    %v3089 = vld [vmem:[%s4 + $0x1c0] sm:$0xff]
    %v3090 = vld [vmem:[%s4 + $0x1c8] sm:$0xff]
    %v3091 = vld [vmem:[%s4 + $0x1d0] sm:$0xff]
    %v3092 = vld [vmem:[%s4 + $0x1d8] sm:$0xff]
    %v3093 = vld [vmem:[%s4 + $0x1e0] sm:$0xff]
    %v3094 = vld [vmem:[%s4 + $0x1e8] sm:$0xff]
    %v3095 = vld [vmem:[%s4 + $0x1f0] sm:$0xff]
    %v3096 = vld [vmem:[%s4 + $0x1f8] sm:$0xff]
    %v3097 = vld [vmem:[%s4 + $0x200] sm:$0xff]
    %v3098 = vld [vmem:[%s4 + $0x208] sm:$0xff]
    %v3099 = vld [vmem:[%s4 + $0x210] sm:$0xff]
    %v3100 = vld [vmem:[%s4 + $0x218] sm:$0xff]
    %v3101 = vld [vmem:[%s4 + $0x220] sm:$0xff]
    %v3102 = vld [vmem:[%s4 + $0x228] sm:$0xff]
    %v3103 = vld [vmem:[%s4 + $0x230] sm:$0xff]
    %v3104 = vld [vmem:[%s4 + $0x238] sm:$0xff]
    %v3105 = vld [vmem:[%s4 + $0x240] sm:$0xff]
    %v3106 = vld [vmem:[%s4 + $0x248] sm:$0xff]
    %v3107 = vld [vmem:[%s4 + $0x250] sm:$0xff]
    %v3108 = vld [vmem:[%s4 + $0x258] sm:$0xff]
    %v3109 = vld [vmem:[%s4 + $0x260] sm:$0xff]
    %v3110 = vld [vmem:[%s4 + $0x268] sm:$0xff]
    %v3111 = vld [vmem:[%s4 + $0x270] sm:$0xff]
    %v3112 = vld [vmem:[%s4 + $0x278] sm:$0xff]
    %v3113 = vld [vmem:[%s4 + $0x280] sm:$0xff]
    %v3114 = vld [vmem:[%s4 + $0x288] sm:$0xff]
    %v3115 = vld [vmem:[%s4 + $0x290] sm:$0xff]
    %v3116 = vld [vmem:[%s4 + $0x298] sm:$0xff]
    %v3117 = vld [vmem:[%s4 + $0x2a0] sm:$0xff]
    %v3118 = vld [vmem:[%s4 + $0x2a8] sm:$0xff]
    %v3119 = vld [vmem:[%s4 + $0x2b0] sm:$0xff]
    %v3120 = vld [vmem:[%s4 + $0x2b8] sm:$0xff]
    %v3121 = vld [vmem:[%s4 + $0x2c0] sm:$0xff]
    %v3122 = vld [vmem:[%s4 + $0x2c8] sm:$0xff]
    %v3123 = vld [vmem:[%s4 + $0x2d0] sm:$0xff]
    %v3124 = vld [vmem:[%s4 + $0x2d8] sm:$0xff]
    %v3125 = vld [vmem:[%s4 + $0x2e0] sm:$0xff]
    %v3126 = vld [vmem:[%s4 + $0x2e8] sm:$0xff]
    %v3127 = vld [vmem:[%s4 + $0x2f0] sm:$0xff]
    %v3128 = vld [vmem:[%s4 + $0x2f8] sm:$0xff]
    %v3129 = vlaneseq
    %v3130 = vshrl.u32 %v3129, 7
    %v3131 = vsub.s32 1, %v3130
    %v3132 = vrot.slane %v201, %v3131
    %3133 = vmatprep.subr.mxu0 0.0
    %3134 = vmatpush1.msra.mxu0 %v3065
    %3135 = vmatprep.subr.mxu0 0.0
    %3136 = vmatpush1.msra.mxu0 %v3066
    %3137 = vmatprep.subr.mxu0 0.0
    %3138 = vmatpush1.msra.mxu0 %v3067
    %3139 = vmatprep.subr.mxu0 0.0
    %3140 = vmatpush1.msra.mxu0 %v3068
    %3141 = vmatprep.subr.mxu0 0.0
    %3142 = vmatpush1.msra.mxu0 %v3069
    %3143 = vmatprep.subr.mxu0 0.0
    %3144 = vmatpush1.msra.mxu0 %v3070
    %3145 = vmatprep.subr.mxu0 0.0
    %3146 = vmatpush1.msra.mxu0 %v3071
    %3147 = vmatprep.subr.mxu0 0.0
    %3148 = vmatpush1.msra.mxu0 %v3072
    %3149 = vmatprep.subr.mxu0 0.0
    %3150 = vmatpush1.msra.mxu0 %v3073
    %3151 = vmatprep.subr.mxu0 0.0
    %3152 = vmatpush1.msra.mxu0 %v3074
    %3153 = vmatprep.subr.mxu0 0.0
    %3154 = vmatpush1.msra.mxu0 %v3075
    %3155 = vmatprep.subr.mxu0 0.0
    %3156 = vmatpush1.msra.mxu0 %v3076
    %3157 = vmatprep.subr.mxu0 0.0
    %3158 = vmatpush1.msra.mxu0 %v3077
    %3159 = vmatprep.subr.mxu0 0.0
    %3160 = vmatpush1.msra.mxu0 %v3078
    %3161 = vmatprep.subr.mxu0 0.0
    %3162 = vmatpush1.msra.mxu0 %v3079
    %3163 = vmatprep.subr.mxu0 0.0
    %3164 = vmatpush1.msra.mxu0 %v3080
    %3165 = vmatprep.subr.mxu0 0.0
    %3166 = vmatpush1.msra.mxu0 %v3081
    %3167 = vmatprep.subr.mxu0 0.0
    %3168 = vmatpush1.msra.mxu0 %v3082
    %3169 = vmatprep.subr.mxu0 0.0
    %3170 = vmatpush1.msra.mxu0 %v3083
    %3171 = vmatprep.subr.mxu0 0.0
    %3172 = vmatpush1.msra.mxu0 %v3084
    %3173 = vmatprep.subr.mxu0 0.0
    %3174 = vmatpush1.msra.mxu0 %v3085
    %3175 = vmatprep.subr.mxu0 0.0
    %3176 = vmatpush1.msra.mxu0 %v3086
    %3177 = vmatprep.subr.mxu0 0.0
    %3178 = vmatpush1.msra.mxu0 %v3087
    %3179 = vmatprep.subr.mxu0 0.0
    %3180 = vmatpush1.msra.mxu0 %v3088
    %3181 = vmatprep.subr.mxu0 0.0
    %3182 = vmatpush1.msra.mxu0 %v3089
    %3183 = vmatprep.subr.mxu0 0.0
    %3184 = vmatpush1.msra.mxu0 %v3090
    %3185 = vmatprep.subr.mxu0 0.0
    %3186 = vmatpush1.msra.mxu0 %v3091
    %3187 = vmatprep.subr.mxu0 0.0
    %3188 = vmatpush1.msra.mxu0 %v3092
    %3189 = vmatprep.subr.mxu0 0.0
    %3190 = vmatpush1.msra.mxu0 %v3093
    %3191 = vmatprep.subr.mxu0 0.0
    %3192 = vmatpush1.msra.mxu0 %v3094
    %3193 = vmatprep.subr.mxu0 0.0
    %3194 = vmatpush1.msra.mxu0 %v3095
    %3195 = vmatprep.subr.mxu0 0.0
    %3196 = vmatpush1.msra.mxu0 %v3096
    %3197 = vmatprep.mubr.f32.mxu0 %v3062
    %3198 = vmatmul.mubr.f32.gmra.mrb[0].mxu0 %v3061
    %v3199 = vpop.f32.mrb[0].mxu0
    %v3200 = vadd.f32 %v3132, %v3199
    %v3201 = vpop.f32.mrb[0].mxu0
    %3202 = vdwg.mxu0
    %3203 = vmatprep.subr.mxu0 0.0
    %3204 = vmatpush1.msra.mxu0 %v3097
    %3205 = vmatprep.subr.mxu0 0.0
    %3206 = vmatpush1.msra.mxu0 %v3098
    %3207 = vmatprep.subr.mxu0 0.0
    %3208 = vmatpush1.msra.mxu0 %v3099
    %3209 = vmatprep.subr.mxu0 0.0
    %3210 = vmatpush1.msra.mxu0 %v3100
    %3211 = vmatprep.subr.mxu0 0.0
    %3212 = vmatpush1.msra.mxu0 %v3101
    %3213 = vmatprep.subr.mxu0 0.0
    %3214 = vmatpush1.msra.mxu0 %v3102
    %3215 = vmatprep.subr.mxu0 0.0
    %3216 = vmatpush1.msra.mxu0 %v3103
    %3217 = vmatprep.subr.mxu0 0.0
    %3218 = vmatpush1.msra.mxu0 %v3104
    %3219 = vmatprep.subr.mxu0 0.0
    %3220 = vmatpush1.msra.mxu0 %v3105
    %3221 = vmatprep.subr.mxu0 0.0
    %3222 = vmatpush1.msra.mxu0 %v3106
    %3223 = vmatprep.subr.mxu0 0.0
    %3224 = vmatpush1.msra.mxu0 %v3107
    %3225 = vmatprep.subr.mxu0 0.0
    %3226 = vmatpush1.msra.mxu0 %v3108
    %3227 = vmatprep.subr.mxu0 0.0
    %3228 = vmatpush1.msra.mxu0 %v3109
    %3229 = vmatprep.subr.mxu0 0.0
    %3230 = vmatpush1.msra.mxu0 %v3110
    %3231 = vmatprep.subr.mxu0 0.0
    %3232 = vmatpush1.msra.mxu0 %v3111
    %3233 = vmatprep.subr.mxu0 0.0
    %3234 = vmatpush1.msra.mxu0 %v3112
    %3235 = vmatprep.subr.mxu0 0.0
    %3236 = vmatpush1.msra.mxu0 %v3113
    %3237 = vmatprep.subr.mxu0 0.0
    %3238 = vmatpush1.msra.mxu0 %v3114
    %3239 = vmatprep.subr.mxu0 0.0
    %3240 = vmatpush1.msra.mxu0 %v3115
    %3241 = vmatprep.subr.mxu0 0.0
    %3242 = vmatpush1.msra.mxu0 %v3116
    %3243 = vmatprep.subr.mxu0 0.0
    %3244 = vmatpush1.msra.mxu0 %v3117
    %3245 = vmatprep.subr.mxu0 0.0
    %3246 = vmatpush1.msra.mxu0 %v3118
    %3247 = vmatprep.subr.mxu0 0.0
    %3248 = vmatpush1.msra.mxu0 %v3119
    %3249 = vmatprep.subr.mxu0 0.0
    %3250 = vmatpush1.msra.mxu0 %v3120
    %3251 = vmatprep.subr.mxu0 0.0
    %3252 = vmatpush1.msra.mxu0 %v3121
    %3253 = vmatprep.subr.mxu0 0.0
    %3254 = vmatpush1.msra.mxu0 %v3122
    %3255 = vmatprep.subr.mxu0 0.0
    %3256 = vmatpush1.msra.mxu0 %v3123
    %3257 = vmatprep.subr.mxu0 0.0
    %3258 = vmatpush1.msra.mxu0 %v3124
    %3259 = vmatprep.subr.mxu0 0.0
    %3260 = vmatpush1.msra.mxu0 %v3125
    %3261 = vmatprep.subr.mxu0 0.0
    %3262 = vmatpush1.msra.mxu0 %v3126
    %3263 = vmatprep.subr.mxu0 0.0
    %3264 = vmatpush1.msra.mxu0 %v3127
    %3265 = vmatprep.subr.mxu0 0.0
    %3266 = vmatpush1.msra.mxu0 %v3128
    %3267 = vmatprep.mubr.f32.mxu0 %v3064
    %3268 = vmatmul.mubr.f32.gmra.mrb[0].mxu0 %v3063
    %v3269 = vpop.f32.mrb[0].mxu0
    %v3270 = vadd.f32 %v3200, %v3269
    %v3271 = vpop.f32.mrb[0].mxu0
    %3272 = vdwg.mxu0
    %3273 = vst [vmem:[#allocation4] sm:$0x3] %v3270
    // Predicated region
    $region64: #{forward.1} parent=1 // pred_check
      _
    $region65: #{forward.1} parent=1 // pred_check_branch
      %3275 = sbr.rel (0) target = $region67
    $region66: #{forward.1} parent=1 // pred_region
      %s3277 = ssub.s32 32, 32
      %3278 = vsyncadd [#allocation5], %s3277
      %s3280 = sshll.u32 [#allocation4], 4
      %s3281 = int_to_ptr.vmem [resolvable:$true] %s3280
      %3283 = dma.vmem_to_hbm [thread:$0]  %s3281, 32, %s8, [#allocation5]
    $region67: #{forward.1} parent=1 // pred_fallthru
      _
    // Predicated region
    $region68: #{forward.1} parent=1 // pred_check
      _
    $region69: #{forward.1} parent=1 // pred_check_branch
      %3285 = sbr.rel (0) target = $region71
    $region70: #{forward.1} parent=1 // pred_region
      %3286 = dma.done [#allocation5], 32
    $region71: #{forward.1} parent=1 // pred_fallthru
      _
    %3287 = vsyncpa [#allocation5], 1
  %3288 = vsyncmov [#allocation3]
  %s3289 = vpop.sfrf %3288
  %p3290 = scmp.eq.s32.totalorder %s3289, 0
  %p3291 = pneg %p3290
  %3293 = shalt.err (%p3291)

</llo_original>
